<compile_context>
chip_gen: v5e
topology: v5e:2x2
jax: 0.10.0
libtpu: 0.0.40
codegen_flags: <defaults>
</compile_context>

<pallas_src>
import jax
import jax.numpy as jnp
from jax import lax
from jax.experimental import pallas as pl
from jax.experimental.pallas import tpu as pltpu

F32 = jnp.float32
BF16 = jnp.bfloat16
BN_EPS = 1e-5
LN_EPS = 1e-5
OUT_PAD = 128  # lane-dense width of the stored MLP output (true logits = prefix)


# ----------------------------------------------------------------------------
# Fused forward kernel (whole network: conv stack + conv_linear + LN + LSTM + MLP)
# ----------------------------------------------------------------------------
def _make_forward_kernel(plan, n_mlp, proprio_dim, cl_size, hidden):
    P, CL, Hn = proprio_dim, cl_size, hidden

    def kernel(*refs):
        it = iter(refs)
        nxt = lambda: next(it)

        obs_ref, h0_ref, c0_ref = nxt(), nxt(), nxt()
        obs = obs_ref[...]                      # (B, obs_dim) f32
        proprio = obs[:, :P]                    # (B, P) prefix slice (offset 0)

        # ---- conv stack: dense conv-as-matmul, BatchNorm(eval) folded in ----
        # First dense matrix has zero rows for the proprio prefix, so the raw
        # obs row is consumed directly (no unaligned lane slice of the image).
        act = obs
        for step in plan:
            if step[0] == "conv":
                w, b = nxt()[...], nxt()[...]
                y = jnp.dot(act.astype(BF16), w, preferred_element_type=F32) + b
                act = jnp.maximum(y, 0.0) if step[1] else y
            else:  # residual block: conv+bn+relu, conv+bn, +residual, relu
                w1, b1 = nxt()[...], nxt()[...]
                w2, b2 = nxt()[...], nxt()[...]
                res = act
                y = jnp.maximum(
                    jnp.dot(act.astype(BF16), w1, preferred_element_type=F32) + b1,
                    0.0)
                y = jnp.dot(y.astype(BF16), w2, preferred_element_type=F32) + b2 + res
                act = jnp.maximum(y, 0.0)

        # ---- conv_linear + LayerNorm ----
        cl_w, cl_b = nxt()[...], nxt()[...]
        ln_g, ln_b = nxt()[...], nxt()[...]
        y = jnp.dot(act.astype(BF16), cl_w, preferred_element_type=F32) + cl_b
        mu = jnp.mean(y, axis=-1, keepdims=True)
        d = y - mu
        var = jnp.mean(d * d, axis=-1, keepdims=True)
        z = d * lax.rsqrt(var + LN_EPS) * ln_g + ln_b            # (B, CL) f32

        # ---- single LSTM cell step (PyTorch gate order i,f,g,o) -------------
        # combined_input = concat([proprio, z]) is realized by splitting W_ih
        # into proprio rows / conv-feature rows; gate weights are pre-split per
        # gate so no sub-128 lane slicing of gate pre-activations is needed.
        wih_p_ref, wih_z_ref, whh_ref, bg_ref = nxt(), nxt(), nxt(), nxt()
        h0 = h0_ref[...]
        c0 = c0_ref[...]

        def gate(g):
            return (jnp.dot(proprio, wih_p_ref[g * P:(g + 1) * P, :],
                            preferred_element_type=F32)
                    + jnp.dot(z, wih_z_ref[g * CL:(g + 1) * CL, :],
                              preferred_element_type=F32)
                    + jnp.dot(h0, whh_ref[g * Hn:(g + 1) * Hn, :],
                              preferred_element_type=F32)
                    + bg_ref[g:g + 1, :])

        sig = lambda t: 1.0 / (1.0 + jnp.exp(-t))
        i_g, f_g = sig(gate(0)), sig(gate(1))
        g_g, o_g = jnp.tanh(gate(2)), sig(gate(3))
        c_new = f_g * c0 + i_g * g_g
        h_new = o_g * jnp.tanh(c_new)

        # ---- MLP head (ELU hidden; last layer zero-padded to OUT_PAD lanes) -
        x = h_new
        for li in range(n_mlp):
            w, b = nxt()[...], nxt()[...]
            y = jnp.dot(x.astype(BF16), w, preferred_element_type=F32) + b
            if li < n_mlp - 1:
                x = jnp.where(y > 0.0, y, jnp.exp(jnp.minimum(y, 0.0)) - 1.0)  # ELU
            else:
                x = y

        out_ref, h_out_ref, c_out_ref = nxt(), nxt(), nxt()
        out_ref[...] = x                     # (B, OUT_PAD) lane-dense store
        h_out_ref[...] = h_new
        c_out_ref[...] = c_new

    return kernel


def _net_block_spec(per_net_shape):
    """Full-block spec for an array stacked on a leading network dim."""
    nd = len(per_net_shape)
    return pl.BlockSpec((None,) + tuple(int(s) for s in per_net_shape),
                        lambda n, _nd=nd: (n,) + (0,) * _nd)


def _flatten_net(p):
    flat = []
    for w, b in p["conv_mats"]:
        flat += [w, b]
    flat += [p["cl_w"], p["cl_b"], p["ln_g"], p["ln_b"],
             p["wih_p"], p["wih_z"], p["whh"], p["b_gate"]]
    for w, b in p["mlp"]:
        flat += [w, b]
    return flat


def build_forward(params_list):
    """Fuse N structurally-identical networks (e.g. actor + critic) into one
    pallas_call.  Returns fwd(obs_stacked) -> (out_padded, h_new, c_new) with
    shapes (N, B, OUT_PAD), (N, B, H), (N, B, H)."""
    base = params_list[0]
    plan, P = base["plan"], base["proprio_dim"]
    CL, Hn = base["cl_size"], base["rnn_hidden"]
    n_mlp = len(base["mlp"])
    n_net = len(params_list)
    for p in params_list:
        assert p["plan"] == plan and p["proprio_dim"] == P
        assert p["cl_size"] == CL and p["rnn_hidden"] == Hn
        assert len(p["mlp"]) == n_mlp and p["obs_dim"] == base["obs_dim"]

    stacked = [jnp.stack(arrs, axis=0)
               for arrs in zip(*[_flatten_net(p) for p in params_list])]
    kernel = _make_forward_kernel(plan, n_mlp, P, CL, Hn)

    def fwd(obs_stacked, sp):
        B = obs_stacked.shape[1]
        # Fresh hidden state (torch: hidden_states=None -> zeros); returned
        # h_new/c_new can be threaded back in for stateful rollouts.
        h0 = jnp.zeros((n_net, B, Hn), F32)
        c0 = jnp.zeros((n_net, B, Hn), F32)
        inputs = [obs_stacked.astype(F32), h0, c0] + list(sp)
        out_shapes = (jax.ShapeDtypeStruct((n_net, B, OUT_PAD), F32),
                      jax.ShapeDtypeStruct((n_net, B, Hn), F32),
                      jax.ShapeDtypeStruct((n_net, B, Hn), F32))
        return pl.pallas_call(
            kernel,
            out_shape=out_shapes,
            grid_spec=pltpu.PrefetchScalarGridSpec(
                num_scalar_prefetch=0,
                grid=(n_net,),
                in_specs=[_net_block_spec(a.shape[1:]) for a in inputs],
                out_specs=[_net_block_spec(s.shape[1:]) for s in out_shapes]),
            compiler_params=pltpu.CompilerParams(
                dimension_semantics=("parallel",)),
        )(*inputs)

    jfwd = jax.jit(fwd)
    return lambda obs_stacked: jfwd(obs_stacked, stacked)


# ----------------------------------------------------------------------------
# Init-time parameter preparation (synthetic weights; conv+BN -> dense matmul)
# ----------------------------------------------------------------------------
def init_conv_layer(key, cin, cout, k, stride, pad):
    kw, kb = jax.random.split(key)
    fan_in = cin * k * k
    return {
        "w": jax.random.normal(kw, (k, k, cin, cout), F32) / jnp.sqrt(float(fan_in)),
        "b": 0.01 * jax.random.normal(kb, (cout,), F32),
        "bn_gamma": jnp.ones((cout,), F32),
        "bn_beta": jnp.zeros((cout,), F32),
        "bn_mean": jnp.zeros((cout,), F32),
        "bn_var": jnp.ones((cout,), F32),
        "k": k, "stride": stride, "pad": pad,
    }


def init_linear(key, fin, fout, scale=None):
    kw, kb = jax.random.split(key)
    s = (1.0 / jnp.sqrt(float(fin))) if scale is None else scale
    return (jax.random.normal(kw, (fin, fout), F32) * s,
            0.01 * jax.random.normal(kb, (fout,), F32))


def dense_conv_bn(layer, in_shape):
    """Dense (Cin*Hin*Win -> Cout*Hout*Wout) matrix equivalent of Conv2d + BN
    (eval mode), built once at init via the identity-basis trick.  Both sides
    are NCHW-flat, matching torch's .view(B, -1)."""
    cin, hin, win = in_shape
    k, s, p = layer["k"], layer["stride"], layer["pad"]
    d_in = cin * hin * win
    basis = jnp.eye(d_in, dtype=F32).reshape(d_in, cin, hin, win)
    out = lax.conv_general_dilated(
        basis, layer["w"], window_strides=(s, s), padding=[(p, p), (p, p)],
        dimension_numbers=("NCHW", "HWIO", "NCHW"))
    cout, hout, wout = int(out.shape[1]), int(out.shape[2]), int(out.shape[3])
    wd = out.reshape(d_in, cout * hout * wout)
    scale = layer["bn_gamma"] / jnp.sqrt(layer["bn_var"] + BN_EPS)
    wd = wd * jnp.repeat(scale, hout * wout)[None, :]
    shift = (layer["b"] - layer["bn_mean"]) * scale + layer["bn_beta"]
    bias = jnp.repeat(shift, hout * wout)[None, :]
    return wd, bias, (cout, hout, wout)


def init_convnet(key, proprio_dim, output_dim, image_shape, conv_layers_params,
                 hidden_dims, conv_linear_output_size, rnn_hidden_size):
    assert output_dim <= OUT_PAD
    keys = iter(jax.random.split(key, 64))
    C, H, W = image_shape

    plan, conv_mats = [], []
    in_shape = (C, H, W)
    for idx, p in enumerate(conv_layers_params[:-1]):
        k = p.get("kernel_size", 3)
        s = p.get("stride", 1)
        pad = p.get("padding", 0)
        layer = init_conv_layer(next(keys), in_shape[0], p["out_channels"], k, s, pad)
        wd, bias, in_shape = dense_conv_bn(layer, in_shape)
        plan.append(("conv", True))
        conv_mats.append([wd, bias])
        if idx > 0:  # ResidualBlock after every conv block except the first
            ch = in_shape[0]
            l1 = init_conv_layer(next(keys), ch, ch, 3, 1, 1)
            l2 = init_conv_layer(next(keys), ch, ch, 3, 1, 1)
            w1, b1, _ = dense_conv_bn(l1, in_shape)
            w2, b2, _ = dense_conv_bn(l2, in_shape)
            plan.append(("resblock", True))
            conv_mats.append([w1, b1])
            conv_mats.append([w2, b2])
    lp = conv_layers_params[-1]
    k = lp.get("kernel_size", 3)
    s = lp.get("stride", 1)
    pad = lp.get("padding", 0)
    layer = init_conv_layer(next(keys), in_shape[0], lp["out_channels"], k, s, pad)
    wd, bias, in_shape = dense_conv_bn(layer, in_shape)
    plan.append(("conv", False))     # last conv + BN, no ReLU
    conv_mats.append([wd, bias])

    image_feature_size = in_shape[0] * in_shape[1] * in_shape[2]

    # First dense conv consumes the raw obs row: prepend zero rows so the
    # proprio prefix contributes nothing (no unaligned lane slice in-kernel).
    w0, b0 = conv_mats[0]
    conv_mats[0] = [jnp.concatenate(
        [jnp.zeros((proprio_dim, w0.shape[1]), F32), w0], axis=0), b0]

    # bf16 matmul operands (f32 accumulation in-kernel); biases stay f32.
    conv_mats = [(w.astype(BF16), b.astype(F32)) for w, b in conv_mats]

    CL = conv_linear_output_size
    Hn = rnn_hidden_size
    cl_w, cl_b = init_linear(next(keys), image_feature_size, CL)

    lstm_in = CL + proprio_dim
    wih, _ = init_linear(next(keys), lstm_in, 4 * Hn)
    whh, _ = init_linear(next(keys), Hn, 4 * Hn)
    bih = 0.01 * jax.random.normal(next(keys), (4 * Hn,), F32)
    bhh = 0.01 * jax.random.normal(next(keys), (4 * Hn,), F32)

    def split_gate_cols(m):  # (rows, 4H) -> (4*rows, H), PyTorch order i,f,g,o
        return jnp.concatenate([m[:, g * Hn:(g + 1) * Hn] for g in range(4)], axis=0)

    wih_p = split_gate_cols(wih[:proprio_dim]).astype(F32)    # (4*P,  H)
    wih_z = split_gate_cols(wih[proprio_dim:]).astype(F32)    # (4*CL, H)
    whh_s = split_gate_cols(whh).astype(F32)                  # (4*H,  H)
    b_gate = (bih + bhh).reshape(4, Hn).astype(F32)           # (4, H)

    mlp_dims = [Hn] + list(hidden_dims) + [output_dim]
    mlp = []
    for li, (a, b) in enumerate(zip(mlp_dims[:-1], mlp_dims[1:])):
        w, bb = init_linear(next(keys), a, b, scale=0.1)
        if li == len(mlp_dims) - 2:  # pad last layer to a lane-dense store
            w = jnp.concatenate([w, jnp.zeros((a, OUT_PAD - b), F32)], axis=1)
            bb = jnp.concatenate([bb, jnp.zeros((OUT_PAD - b,), F32)], axis=0)
        mlp.append((w.astype(BF16), bb.reshape(1, -1).astype(F32)))

    return {
        "plan": tuple(plan),
        "conv_mats": conv_mats,
        "cl_w": cl_w.astype(BF16), "cl_b": cl_b.reshape(1, -1).astype(F32),
        "ln_g": jnp.ones((1, CL), F32), "ln_b": jnp.zeros((1, CL), F32),
        "wih_p": wih_p, "wih_z": wih_z, "whh": whh_s, "b_gate": b_gate,
        "mlp": mlp,
        "proprio_dim": proprio_dim, "cl_size": CL, "rnn_hidden": Hn,
        "out_dim": output_dim,
        "obs_dim": proprio_dim + C * H * W,
    }


# ----------------------------------------------------------------------------
# Main
# ----------------------------------------------------------------------------
if __name__ == "__main__":
    num_actor_obs = 8           # proprio dim (actor)
    num_critic_obs = 8          # proprio dim (critic)
    num_actions = 4
    image_input_shape = (4, 16, 16)             # (C, H, W)
    conv_layers_params = [
        {"out_channels": 8, "kernel_size": 3, "stride": 2, "padding": 1},
        {"out_channels": 8, "kernel_size": 3, "stride": 2, "padding": 1},
        {"out_channels": 8, "kernel_size": 3, "stride": 1, "padding": 1},
    ]
    conv_linear_output_size = 32
    actor_hidden_dims = [32, 32]
    critic_hidden_dims = [32, 32]
    rnn_hidden_size = 32
    batch = 2
    assert num_actor_obs == num_critic_obs  # required for actor/critic stacking

    key = jax.random.PRNGKey(0)
    k_actor, k_critic, k_obs = jax.random.split(key, 3)

    actor_params = init_convnet(k_actor, num_actor_obs, num_actions,
                                image_input_shape, conv_layers_params,
                                actor_hidden_dims, conv_linear_output_size,
                                rnn_hidden_size)
    critic_params = init_convnet(k_critic, num_critic_obs, 1,
                                 image_input_shape, conv_layers_params,
                                 critic_hidden_dims, conv_linear_output_size,
                                 rnn_hidden_size)

    # One fused pallas_call runs actor AND critic (grid=(2,), "parallel" so the
    # two networks map onto both TensorCores on v7x).
    forward_both = build_forward([actor_params, critic_params])

    image_obs_size = 4 * 16 * 16
    obs = jax.random.normal(k_obs, (batch, num_actor_obs + image_obs_size), F32)
    obs_stacked = jnp.stack([obs, obs], axis=0)   # same obs for actor & critic

    out, h_new, c_new = forward_both(obs_stacked)
    # torch: actor -> mlp(lstm_out).squeeze() == (B, num_actions)
    #        critic -> value with trailing unit dim kept  == (B, 1)
    actions_mean = out[0, :, :num_actions]
    value = out[1, :, :1]

    jax.block_until_ready((actions_mean, value))
    assert actions_mean.shape == (batch, num_actions)
    assert value.shape == (batch, 1)
    assert bool(jnp.all(jnp.isfinite(actions_mean)))
    assert bool(jnp.all(jnp.isfinite(value)))
    print("KERNEL_OK")
</pallas_src>

<mosaic_0001>
module attributes {stable_mosaic.version = 11 : i64} {
  func.func @kernel(%arg0: i32, %arg1: memref<1x2x1032xf32, #tpu.memory_space<vmem>>, %arg2: memref<1x2x32xf32, #tpu.memory_space<vmem>>, %arg3: memref<1x2x32xf32, #tpu.memory_space<vmem>>, %arg4: memref<1x1032x512xbf16, #tpu.memory_space<vmem>>, %arg5: memref<1x1x512xf32, #tpu.memory_space<vmem>>, %arg6: memref<1x512x128xbf16, #tpu.memory_space<vmem>>, %arg7: memref<1x1x128xf32, #tpu.memory_space<vmem>>, %arg8: memref<1x128x128xbf16, #tpu.memory_space<vmem>>, %arg9: memref<1x1x128xf32, #tpu.memory_space<vmem>>, %arg10: memref<1x128x128xbf16, #tpu.memory_space<vmem>>, %arg11: memref<1x1x128xf32, #tpu.memory_space<vmem>>, %arg12: memref<1x128x128xbf16, #tpu.memory_space<vmem>>, %arg13: memref<1x1x128xf32, #tpu.memory_space<vmem>>, %arg14: memref<1x128x32xbf16, #tpu.memory_space<vmem>>, %arg15: memref<1x1x32xf32, #tpu.memory_space<vmem>>, %arg16: memref<1x1x32xf32, #tpu.memory_space<vmem>>, %arg17: memref<1x1x32xf32, #tpu.memory_space<vmem>>, %arg18: memref<1x32x32xf32, #tpu.memory_space<vmem>>, %arg19: memref<1x128x32xf32, #tpu.memory_space<vmem>>, %arg20: memref<1x128x32xf32, #tpu.memory_space<vmem>>, %arg21: memref<1x4x32xf32, #tpu.memory_space<vmem>>, %arg22: memref<1x32x32xbf16, #tpu.memory_space<vmem>>, %arg23: memref<1x1x32xf32, #tpu.memory_space<vmem>>, %arg24: memref<1x32x32xbf16, #tpu.memory_space<vmem>>, %arg25: memref<1x1x32xf32, #tpu.memory_space<vmem>>, %arg26: memref<1x32x128xbf16, #tpu.memory_space<vmem>>, %arg27: memref<1x1x128xf32, #tpu.memory_space<vmem>>, %arg28: memref<1x2x128xf32, #tpu.memory_space<vmem>>, %arg29: memref<1x2x32xf32, #tpu.memory_space<vmem>>, %arg30: memref<1x2x32xf32, #tpu.memory_space<vmem>>) attributes {dimension_semantics = [#tpu.dimension_semantics<parallel>], iteration_bounds = array<i64: 2>, scalar_prefetch = 0 : i64, scratch_operands = 0 : i64, tpu.core_type = #tpu.core_type<tc>, window_params = [{transform_indices = @transform_0, window_bounds = array<i64: 1, 2, 1032>}, {transform_indices = @transform_1, window_bounds = array<i64: 1, 2, 32>}, {transform_indices = @transform_2, window_bounds = array<i64: 1, 2, 32>}, {transform_indices = @transform_3, window_bounds = array<i64: 1, 1032, 512>}, {transform_indices = @transform_4, window_bounds = array<i64: 1, 1, 512>}, {transform_indices = @transform_5, window_bounds = array<i64: 1, 512, 128>}, {transform_indices = @transform_6, window_bounds = array<i64: 1, 1, 128>}, {transform_indices = @transform_7, window_bounds = array<i64: 1, 128, 128>}, {transform_indices = @transform_8, window_bounds = array<i64: 1, 1, 128>}, {transform_indices = @transform_9, window_bounds = array<i64: 1, 128, 128>}, {transform_indices = @transform_10, window_bounds = array<i64: 1, 1, 128>}, {transform_indices = @transform_11, window_bounds = array<i64: 1, 128, 128>}, {transform_indices = @transform_12, window_bounds = array<i64: 1, 1, 128>}, {transform_indices = @transform_13, window_bounds = array<i64: 1, 128, 32>}, {transform_indices = @transform_14, window_bounds = array<i64: 1, 1, 32>}, {transform_indices = @transform_15, window_bounds = array<i64: 1, 1, 32>}, {transform_indices = @transform_16, window_bounds = array<i64: 1, 1, 32>}, {transform_indices = @transform_17, window_bounds = array<i64: 1, 32, 32>}, {transform_indices = @transform_18, window_bounds = array<i64: 1, 128, 32>}, {transform_indices = @transform_19, window_bounds = array<i64: 1, 128, 32>}, {transform_indices = @transform_20, window_bounds = array<i64: 1, 4, 32>}, {transform_indices = @transform_21, window_bounds = array<i64: 1, 32, 32>}, {transform_indices = @transform_22, window_bounds = array<i64: 1, 1, 32>}, {transform_indices = @transform_23, window_bounds = array<i64: 1, 32, 32>}, {transform_indices = @transform_24, window_bounds = array<i64: 1, 1, 32>}, {transform_indices = @transform_25, window_bounds = array<i64: 1, 32, 128>}, {transform_indices = @transform_26, window_bounds = array<i64: 1, 1, 128>}, {transform_indices = @transform_27, window_bounds = array<i64: 1, 2, 128>}, {transform_indices = @transform_28, window_bounds = array<i64: 1, 2, 32>}, {transform_indices = @transform_29, window_bounds = array<i64: 1, 2, 32>}]} {
    %c0 = arith.constant 0 : index
    %c0_0 = arith.constant 0 : index
    %c0_1 = arith.constant 0 : index
    %0 = vector.load %arg1[%c0, %c0_0, %c0_1] : memref<1x2x1032xf32, #tpu.memory_space<vmem>>, vector<1x2x1032xf32>
    %1 = vector.shape_cast %0 : vector<1x2x1032xf32> to vector<2x1032xf32>
    %2 = vector.extract_strided_slice %1 {offsets = [0, 0], sizes = [2, 8], strides = [1, 1]} : vector<2x1032xf32> to vector<2x8xf32>
    %c0_2 = arith.constant 0 : index
    %c0_3 = arith.constant 0 : index
    %c0_4 = arith.constant 0 : index
    %3 = vector.load %arg4[%c0_2, %c0_3, %c0_4] : memref<1x1032x512xbf16, #tpu.memory_space<vmem>>, vector<1x1032x512xbf16>
    %4 = vector.shape_cast %3 : vector<1x1032x512xbf16> to vector<1032x512xbf16>
    %c0_5 = arith.constant 0 : index
    %c0_6 = arith.constant 0 : index
    %c0_7 = arith.constant 0 : index
    %5 = vector.load %arg5[%c0_5, %c0_6, %c0_7] : memref<1x1x512xf32, #tpu.memory_space<vmem>>, vector<1x1x512xf32>
    %6 = vector.shape_cast %5 : vector<1x1x512xf32> to vector<1x512xf32>
    %7 = arith.truncf %1 : vector<2x1032xf32> to vector<2x1032xbf16>
    %cst = arith.constant dense<0.000000e+00> : vector<2x512xf32>
    %8 = tpu.matmul %7, %4, %cst {dimension_numbers = #tpu.dot_dimension_numbers<[1], [0], [0], [1], [0, 0, 1, 1], [], []>} : vector<2x1032xbf16>, vector<1032x512xbf16>, vector<2x512xf32> -> vector<2x512xf32>
    %9 = vector.broadcast %6 : vector<1x512xf32> to vector<2x512xf32>
    %10 = arith.addf %8, %9 : vector<2x512xf32>
    %cst_8 = arith.constant 0.000000e+00 : f32
    %11 = vector.broadcast %cst_8 : f32 to vector<2x512xf32>
    %12 = arith.maximumf %10, %11 : vector<2x512xf32>
    %c0_9 = arith.constant 0 : index
    %c0_10 = arith.constant 0 : index
    %c0_11 = arith.constant 0 : index
    %13 = vector.load %arg6[%c0_9, %c0_10, %c0_11] : memref<1x512x128xbf16, #tpu.memory_space<vmem>>, vector<1x512x128xbf16>
    %14 = vector.shape_cast %13 : vector<1x512x128xbf16> to vector<512x128xbf16>
    %c0_12 = arith.constant 0 : index
    %c0_13 = arith.constant 0 : index
    %c0_14 = arith.constant 0 : index
    %15 = vector.load %arg7[%c0_12, %c0_13, %c0_14] : memref<1x1x128xf32, #tpu.memory_space<vmem>>, vector<1x1x128xf32>
    %16 = vector.shape_cast %15 : vector<1x1x128xf32> to vector<1x128xf32>
    %17 = arith.truncf %12 : vector<2x512xf32> to vector<2x512xbf16>
    %cst_15 = arith.constant dense<0.000000e+00> : vector<2x128xf32>
    %18 = tpu.matmul %17, %14, %cst_15 {dimension_numbers = #tpu.dot_dimension_numbers<[1], [0], [0], [1], [0, 0, 1, 1], [], []>} : vector<2x512xbf16>, vector<512x128xbf16>, vector<2x128xf32> -> vector<2x128xf32>
    %19 = vector.broadcast %16 : vector<1x128xf32> to vector<2x128xf32>
    %20 = arith.addf %18, %19 : vector<2x128xf32>
    %cst_16 = arith.constant 0.000000e+00 : f32
    %21 = vector.broadcast %cst_16 : f32 to vector<2x128xf32>
    %22 = arith.maximumf %20, %21 : vector<2x128xf32>
    %c0_17 = arith.constant 0 : index
    %c0_18 = arith.constant 0 : index
    %c0_19 = arith.constant 0 : index
    %23 = vector.load %arg8[%c0_17, %c0_18, %c0_19] : memref<1x128x128xbf16, #tpu.memory_space<vmem>>, vector<1x128x128xbf16>
    %24 = vector.shape_cast %23 : vector<1x128x128xbf16> to vector<128x128xbf16>
    %c0_20 = arith.constant 0 : index
    %c0_21 = arith.constant 0 : index
    %c0_22 = arith.constant 0 : index
    %25 = vector.load %arg9[%c0_20, %c0_21, %c0_22] : memref<1x1x128xf32, #tpu.memory_space<vmem>>, vector<1x1x128xf32>
    %26 = vector.shape_cast %25 : vector<1x1x128xf32> to vector<1x128xf32>
    %c0_23 = arith.constant 0 : index
    %c0_24 = arith.constant 0 : index
    %c0_25 = arith.constant 0 : index
    %27 = vector.load %arg10[%c0_23, %c0_24, %c0_25] : memref<1x128x128xbf16, #tpu.memory_space<vmem>>, vector<1x128x128xbf16>
    %28 = vector.shape_cast %27 : vector<1x128x128xbf16> to vector<128x128xbf16>
    %c0_26 = arith.constant 0 : index
    %c0_27 = arith.constant 0 : index
    %c0_28 = arith.constant 0 : index
    %29 = vector.load %arg11[%c0_26, %c0_27, %c0_28] : memref<1x1x128xf32, #tpu.memory_space<vmem>>, vector<1x1x128xf32>
    %30 = vector.shape_cast %29 : vector<1x1x128xf32> to vector<1x128xf32>
    %31 = arith.truncf %22 : vector<2x128xf32> to vector<2x128xbf16>
    %cst_29 = arith.constant dense<0.000000e+00> : vector<2x128xf32>
    %32 = tpu.matmul %31, %24, %cst_29 {dimension_numbers = #tpu.dot_dimension_numbers<[1], [0], [0], [1], [0, 0, 1, 1], [], []>} : vector<2x128xbf16>, vector<128x128xbf16>, vector<2x128xf32> -> vector<2x128xf32>
    %33 = vector.broadcast %26 : vector<1x128xf32> to vector<2x128xf32>
    %34 = arith.addf %32, %33 : vector<2x128xf32>
    %cst_30 = arith.constant 0.000000e+00 : f32
    %35 = vector.broadcast %cst_30 : f32 to vector<2x128xf32>
    %36 = arith.maximumf %34, %35 : vector<2x128xf32>
    %37 = arith.truncf %36 : vector<2x128xf32> to vector<2x128xbf16>
    %cst_31 = arith.constant dense<0.000000e+00> : vector<2x128xf32>
    %38 = tpu.matmul %37, %28, %cst_31 {dimension_numbers = #tpu.dot_dimension_numbers<[1], [0], [0], [1], [0, 0, 1, 1], [], []>} : vector<2x128xbf16>, vector<128x128xbf16>, vector<2x128xf32> -> vector<2x128xf32>
    %39 = vector.broadcast %30 : vector<1x128xf32> to vector<2x128xf32>
    %40 = arith.addf %38, %39 : vector<2x128xf32>
    %41 = arith.addf %40, %22 : vector<2x128xf32>
    %cst_32 = arith.constant 0.000000e+00 : f32
    %42 = vector.broadcast %cst_32 : f32 to vector<2x128xf32>
    %43 = arith.maximumf %41, %42 : vector<2x128xf32>
    %c0_33 = arith.constant 0 : index
    %c0_34 = arith.constant 0 : index
    %c0_35 = arith.constant 0 : index
    %44 = vector.load %arg12[%c0_33, %c0_34, %c0_35] : memref<1x128x128xbf16, #tpu.memory_space<vmem>>, vector<1x128x128xbf16>
    %45 = vector.shape_cast %44 : vector<1x128x128xbf16> to vector<128x128xbf16>
    %c0_36 = arith.constant 0 : index
    %c0_37 = arith.constant 0 : index
    %c0_38 = arith.constant 0 : index
    %46 = vector.load %arg13[%c0_36, %c0_37, %c0_38] : memref<1x1x128xf32, #tpu.memory_space<vmem>>, vector<1x1x128xf32>
    %47 = vector.shape_cast %46 : vector<1x1x128xf32> to vector<1x128xf32>
    %48 = arith.truncf %43 : vector<2x128xf32> to vector<2x128xbf16>
    %cst_39 = arith.constant dense<0.000000e+00> : vector<2x128xf32>
    %49 = tpu.matmul %48, %45, %cst_39 {dimension_numbers = #tpu.dot_dimension_numbers<[1], [0], [0], [1], [0, 0, 1, 1], [], []>} : vector<2x128xbf16>, vector<128x128xbf16>, vector<2x128xf32> -> vector<2x128xf32>
    %50 = vector.broadcast %47 : vector<1x128xf32> to vector<2x128xf32>
    %51 = arith.addf %49, %50 : vector<2x128xf32>
    %c0_40 = arith.constant 0 : index
    %c0_41 = arith.constant 0 : index
    %c0_42 = arith.constant 0 : index
    %52 = vector.load %arg14[%c0_40, %c0_41, %c0_42] : memref<1x128x32xbf16, #tpu.memory_space<vmem>>, vector<1x128x32xbf16>
    %53 = vector.shape_cast %52 : vector<1x128x32xbf16> to vector<128x32xbf16>
    %c0_43 = arith.constant 0 : index
    %c0_44 = arith.constant 0 : index
    %c0_45 = arith.constant 0 : index
    %54 = vector.load %arg15[%c0_43, %c0_44, %c0_45] : memref<1x1x32xf32, #tpu.memory_space<vmem>>, vector<1x1x32xf32>
    %55 = vector.shape_cast %54 : vector<1x1x32xf32> to vector<1x32xf32>
    %c0_46 = arith.constant 0 : index
    %c0_47 = arith.constant 0 : index
    %c0_48 = arith.constant 0 : index
    %56 = vector.load %arg16[%c0_46, %c0_47, %c0_48] : memref<1x1x32xf32, #tpu.memory_space<vmem>>, vector<1x1x32xf32>
    %57 = vector.shape_cast %56 : vector<1x1x32xf32> to vector<1x32xf32>
    %c0_49 = arith.constant 0 : index
    %c0_50 = arith.constant 0 : index
    %c0_51 = arith.constant 0 : index
    %58 = vector.load %arg17[%c0_49, %c0_50, %c0_51] : memref<1x1x32xf32, #tpu.memory_space<vmem>>, vector<1x1x32xf32>
    %59 = vector.shape_cast %58 : vector<1x1x32xf32> to vector<1x32xf32>
    %60 = arith.truncf %51 : vector<2x128xf32> to vector<2x128xbf16>
    %cst_52 = arith.constant dense<0.000000e+00> : vector<2x32xf32>
    %61 = tpu.matmul %60, %53, %cst_52 {dimension_numbers = #tpu.dot_dimension_numbers<[1], [0], [0], [1], [0, 0, 1, 1], [], []>} : vector<2x128xbf16>, vector<128x32xbf16>, vector<2x32xf32> -> vector<2x32xf32>
    %62 = vector.broadcast %55 : vector<1x32xf32> to vector<2x32xf32>
    %63 = arith.addf %61, %62 : vector<2x32xf32>
    %cst_53 = arith.constant dense<0.000000e+00> : vector<2xf32>
    %64 = vector.multi_reduction <add>, %63, %cst_53 [1] : vector<2x32xf32> to vector<2xf32>
    %65 = vector.shape_cast %64 : vector<2xf32> to vector<2x1xf32>
    %cst_54 = arith.constant 3.200000e+01 : f32
    %66 = vector.broadcast %cst_54 : f32 to vector<2x1xf32>
    %67 = arith.divf %65, %66 : vector<2x1xf32>
    %68 = vector.broadcast %67 : vector<2x1xf32> to vector<2x32xf32>
    %69 = arith.subf %63, %68 : vector<2x32xf32>
    %70 = arith.mulf %69, %69 : vector<2x32xf32>
    %cst_55 = arith.constant dense<0.000000e+00> : vector<2xf32>
    %71 = vector.multi_reduction <add>, %70, %cst_55 [1] : vector<2x32xf32> to vector<2xf32>
    %72 = vector.shape_cast %71 : vector<2xf32> to vector<2x1xf32>
    %cst_56 = arith.constant 3.200000e+01 : f32
    %73 = vector.broadcast %cst_56 : f32 to vector<2x1xf32>
    %74 = arith.divf %72, %73 : vector<2x1xf32>
    %cst_57 = arith.constant 9.99999974E-6 : f32
    %75 = vector.broadcast %cst_57 : f32 to vector<2x1xf32>
    %76 = arith.addf %74, %75 : vector<2x1xf32>
    %77 = math.rsqrt %76 : vector<2x1xf32>
    %78 = vector.broadcast %77 : vector<2x1xf32> to vector<2x32xf32>
    %79 = arith.mulf %69, %78 : vector<2x32xf32>
    %80 = vector.broadcast %57 : vector<1x32xf32> to vector<2x32xf32>
    %81 = arith.mulf %79, %80 : vector<2x32xf32>
    %82 = vector.broadcast %59 : vector<1x32xf32> to vector<2x32xf32>
    %83 = arith.addf %81, %82 : vector<2x32xf32>
    %c0_58 = arith.constant 0 : index
    %c0_59 = arith.constant 0 : index
    %c0_60 = arith.constant 0 : index
    %84 = vector.load %arg2[%c0_58, %c0_59, %c0_60] : memref<1x2x32xf32, #tpu.memory_space<vmem>>, vector<1x2x32xf32>
    %85 = vector.shape_cast %84 : vector<1x2x32xf32> to vector<2x32xf32>
    %c0_61 = arith.constant 0 : index
    %c0_62 = arith.constant 0 : index
    %c0_63 = arith.constant 0 : index
    %86 = vector.load %arg3[%c0_61, %c0_62, %c0_63] : memref<1x2x32xf32, #tpu.memory_space<vmem>>, vector<1x2x32xf32>
    %87 = vector.shape_cast %86 : vector<1x2x32xf32> to vector<2x32xf32>
    %c0_64 = arith.constant 0 : index
    %c0_65 = arith.constant 0 : index
    %c0_66 = arith.constant 0 : index
    %88 = vector.load %arg18[%c0_64, %c0_65, %c0_66] : memref<1x32x32xf32, #tpu.memory_space<vmem>>, vector<1x8x32xf32>
    %89 = vector.shape_cast %88 : vector<1x8x32xf32> to vector<8x32xf32>
    %cst_67 = arith.constant dense<0.000000e+00> : vector<2x32xf32>
    %90 = tpu.matmul %2, %89, %cst_67 {dimension_numbers = #tpu.dot_dimension_numbers<[1], [0], [0], [1], [0, 0, 1, 1], [], []>} : vector<2x8xf32>, vector<8x32xf32>, vector<2x32xf32> -> vector<2x32xf32>
    %c0_68 = arith.constant 0 : index
    %c0_69 = arith.constant 0 : index
    %c0_70 = arith.constant 0 : index
    %91 = vector.load %arg19[%c0_68, %c0_69, %c0_70] : memref<1x128x32xf32, #tpu.memory_space<vmem>>, vector<1x32x32xf32>
    %92 = vector.shape_cast %91 : vector<1x32x32xf32> to vector<32x32xf32>
    %cst_71 = arith.constant dense<0.000000e+00> : vector<2x32xf32>
    %93 = tpu.matmul %83, %92, %cst_71 {dimension_numbers = #tpu.dot_dimension_numbers<[1], [0], [0], [1], [0, 0, 1, 1], [], []>} : vector<2x32xf32>, vector<32x32xf32>, vector<2x32xf32> -> vector<2x32xf32>
    %94 = arith.addf %90, %93 : vector<2x32xf32>
    %c0_72 = arith.constant 0 : index
    %c0_73 = arith.constant 0 : index
    %c0_74 = arith.constant 0 : index
    %95 = vector.load %arg20[%c0_72, %c0_73, %c0_74] : memref<1x128x32xf32, #tpu.memory_space<vmem>>, vector<1x32x32xf32>
    %96 = vector.shape_cast %95 : vector<1x32x32xf32> to vector<32x32xf32>
    %cst_75 = arith.constant dense<0.000000e+00> : vector<2x32xf32>
    %97 = tpu.matmul %85, %96, %cst_75 {dimension_numbers = #tpu.dot_dimension_numbers<[1], [0], [0], [1], [0, 0, 1, 1], [], []>} : vector<2x32xf32>, vector<32x32xf32>, vector<2x32xf32> -> vector<2x32xf32>
    %98 = arith.addf %94, %97 : vector<2x32xf32>
    %c0_76 = arith.constant 0 : index
    %c0_77 = arith.constant 0 : index
    %c0_78 = arith.constant 0 : index
    %99 = vector.load %arg21[%c0_76, %c0_77, %c0_78] : memref<1x4x32xf32, #tpu.memory_space<vmem>>, vector<1x1x32xf32>
    %100 = vector.shape_cast %99 : vector<1x1x32xf32> to vector<1x32xf32>
    %101 = vector.broadcast %100 : vector<1x32xf32> to vector<2x32xf32>
    %102 = arith.addf %98, %101 : vector<2x32xf32>
    %cst_79 = arith.constant 0.000000e+00 : f32
    %103 = vector.broadcast %cst_79 : f32 to vector<2x32xf32>
    %104 = arith.subf %103, %102 : vector<2x32xf32>
    %105 = math.exp %104 : vector<2x32xf32>
    %cst_80 = arith.constant 1.000000e+00 : f32
    %106 = vector.broadcast %cst_80 : f32 to vector<2x32xf32>
    %107 = arith.addf %106, %105 : vector<2x32xf32>
    %cst_81 = arith.constant 1.000000e+00 : f32
    %108 = vector.broadcast %cst_81 : f32 to vector<2x32xf32>
    %109 = arith.divf %108, %107 : vector<2x32xf32>
    %c0_82 = arith.constant 0 : index
    %c8 = arith.constant 8 : index
    %c0_83 = arith.constant 0 : index
    %110 = vector.load %arg18[%c0_82, %c8, %c0_83] : memref<1x32x32xf32, #tpu.memory_space<vmem>>, vector<1x8x32xf32>
    %111 = vector.shape_cast %110 : vector<1x8x32xf32> to vector<8x32xf32>
    %cst_84 = arith.constant dense<0.000000e+00> : vector<2x32xf32>
    %112 = tpu.matmul %2, %111, %cst_84 {dimension_numbers = #tpu.dot_dimension_numbers<[1], [0], [0], [1], [0, 0, 1, 1], [], []>} : vector<2x8xf32>, vector<8x32xf32>, vector<2x32xf32> -> vector<2x32xf32>
    %c0_85 = arith.constant 0 : index
    %c32 = arith.constant 32 : index
    %c0_86 = arith.constant 0 : index
    %113 = vector.load %arg19[%c0_85, %c32, %c0_86] : memref<1x128x32xf32, #tpu.memory_space<vmem>>, vector<1x32x32xf32>
    %114 = vector.shape_cast %113 : vector<1x32x32xf32> to vector<32x32xf32>
    %cst_87 = arith.constant dense<0.000000e+00> : vector<2x32xf32>
    %115 = tpu.matmul %83, %114, %cst_87 {dimension_numbers = #tpu.dot_dimension_numbers<[1], [0], [0], [1], [0, 0, 1, 1], [], []>} : vector<2x32xf32>, vector<32x32xf32>, vector<2x32xf32> -> vector<2x32xf32>
    %116 = arith.addf %112, %115 : vector<2x32xf32>
    %c0_88 = arith.constant 0 : index
    %c32_89 = arith.constant 32 : index
    %c0_90 = arith.constant 0 : index
    %117 = vector.load %arg20[%c0_88, %c32_89, %c0_90] : memref<1x128x32xf32, #tpu.memory_space<vmem>>, vector<1x32x32xf32>
    %118 = vector.shape_cast %117 : vector<1x32x32xf32> to vector<32x32xf32>
    %cst_91 = arith.constant dense<0.000000e+00> : vector<2x32xf32>
    %119 = tpu.matmul %85, %118, %cst_91 {dimension_numbers = #tpu.dot_dimension_numbers<[1], [0], [0], [1], [0, 0, 1, 1], [], []>} : vector<2x32xf32>, vector<32x32xf32>, vector<2x32xf32> -> vector<2x32xf32>
    %120 = arith.addf %116, %119 : vector<2x32xf32>
    %c0_92 = arith.constant 0 : index
    %c1 = arith.constant 1 : index
    %c0_93 = arith.constant 0 : index
    %121 = vector.load %arg21[%c0_92, %c1, %c0_93] : memref<1x4x32xf32, #tpu.memory_space<vmem>>, vector<1x1x32xf32>
    %122 = vector.shape_cast %121 : vector<1x1x32xf32> to vector<1x32xf32>
    %123 = vector.broadcast %122 : vector<1x32xf32> to vector<2x32xf32>
    %124 = arith.addf %120, %123 : vector<2x32xf32>
    %cst_94 = arith.constant 0.000000e+00 : f32
    %125 = vector.broadcast %cst_94 : f32 to vector<2x32xf32>
    %126 = arith.subf %125, %124 : vector<2x32xf32>
    %127 = math.exp %126 : vector<2x32xf32>
    %cst_95 = arith.constant 1.000000e+00 : f32
    %128 = vector.broadcast %cst_95 : f32 to vector<2x32xf32>
    %129 = arith.addf %128, %127 : vector<2x32xf32>
    %cst_96 = arith.constant 1.000000e+00 : f32
    %130 = vector.broadcast %cst_96 : f32 to vector<2x32xf32>
    %131 = arith.divf %130, %129 : vector<2x32xf32>
    %c0_97 = arith.constant 0 : index
    %c16 = arith.constant 16 : index
    %c0_98 = arith.constant 0 : index
    %132 = vector.load %arg18[%c0_97, %c16, %c0_98] : memref<1x32x32xf32, #tpu.memory_space<vmem>>, vector<1x8x32xf32>
    %133 = vector.shape_cast %132 : vector<1x8x32xf32> to vector<8x32xf32>
    %cst_99 = arith.constant dense<0.000000e+00> : vector<2x32xf32>
    %134 = tpu.matmul %2, %133, %cst_99 {dimension_numbers = #tpu.dot_dimension_numbers<[1], [0], [0], [1], [0, 0, 1, 1], [], []>} : vector<2x8xf32>, vector<8x32xf32>, vector<2x32xf32> -> vector<2x32xf32>
    %c0_100 = arith.constant 0 : index
    %c64 = arith.constant 64 : index
    %c0_101 = arith.constant 0 : index
    %135 = vector.load %arg19[%c0_100, %c64, %c0_101] : memref<1x128x32xf32, #tpu.memory_space<vmem>>, vector<1x32x32xf32>
    %136 = vector.shape_cast %135 : vector<1x32x32xf32> to vector<32x32xf32>
    %cst_102 = arith.constant dense<0.000000e+00> : vector<2x32xf32>
    %137 = tpu.matmul %83, %136, %cst_102 {dimension_numbers = #tpu.dot_dimension_numbers<[1], [0], [0], [1], [0, 0, 1, 1], [], []>} : vector<2x32xf32>, vector<32x32xf32>, vector<2x32xf32> -> vector<2x32xf32>
    %138 = arith.addf %134, %137 : vector<2x32xf32>
    %c0_103 = arith.constant 0 : index
    %c64_104 = arith.constant 64 : index
    %c0_105 = arith.constant 0 : index
    %139 = vector.load %arg20[%c0_103, %c64_104, %c0_105] : memref<1x128x32xf32, #tpu.memory_space<vmem>>, vector<1x32x32xf32>
    %140 = vector.shape_cast %139 : vector<1x32x32xf32> to vector<32x32xf32>
    %cst_106 = arith.constant dense<0.000000e+00> : vector<2x32xf32>
    %141 = tpu.matmul %85, %140, %cst_106 {dimension_numbers = #tpu.dot_dimension_numbers<[1], [0], [0], [1], [0, 0, 1, 1], [], []>} : vector<2x32xf32>, vector<32x32xf32>, vector<2x32xf32> -> vector<2x32xf32>
    %142 = arith.addf %138, %141 : vector<2x32xf32>
    %c0_107 = arith.constant 0 : index
    %c2 = arith.constant 2 : index
    %c0_108 = arith.constant 0 : index
    %143 = vector.load %arg21[%c0_107, %c2, %c0_108] : memref<1x4x32xf32, #tpu.memory_space<vmem>>, vector<1x1x32xf32>
    %144 = vector.shape_cast %143 : vector<1x1x32xf32> to vector<1x32xf32>
    %145 = vector.broadcast %144 : vector<1x32xf32> to vector<2x32xf32>
    %146 = arith.addf %142, %145 : vector<2x32xf32>
    %147 = math.tanh %146 : vector<2x32xf32>
    %c0_109 = arith.constant 0 : index
    %c24 = arith.constant 24 : index
    %c0_110 = arith.constant 0 : index
    %148 = vector.load %arg18[%c0_109, %c24, %c0_110] : memref<1x32x32xf32, #tpu.memory_space<vmem>>, vector<1x8x32xf32>
    %149 = vector.shape_cast %148 : vector<1x8x32xf32> to vector<8x32xf32>
    %cst_111 = arith.constant dense<0.000000e+00> : vector<2x32xf32>
    %150 = tpu.matmul %2, %149, %cst_111 {dimension_numbers = #tpu.dot_dimension_numbers<[1], [0], [0], [1], [0, 0, 1, 1], [], []>} : vector<2x8xf32>, vector<8x32xf32>, vector<2x32xf32> -> vector<2x32xf32>
    %c0_112 = arith.constant 0 : index
    %c96 = arith.constant 96 : index
    %c0_113 = arith.constant 0 : index
    %151 = vector.load %arg19[%c0_112, %c96, %c0_113] : memref<1x128x32xf32, #tpu.memory_space<vmem>>, vector<1x32x32xf32>
    %152 = vector.shape_cast %151 : vector<1x32x32xf32> to vector<32x32xf32>
    %cst_114 = arith.constant dense<0.000000e+00> : vector<2x32xf32>
    %153 = tpu.matmul %83, %152, %cst_114 {dimension_numbers = #tpu.dot_dimension_numbers<[1], [0], [0], [1], [0, 0, 1, 1], [], []>} : vector<2x32xf32>, vector<32x32xf32>, vector<2x32xf32> -> vector<2x32xf32>
    %154 = arith.addf %150, %153 : vector<2x32xf32>
    %c0_115 = arith.constant 0 : index
    %c96_116 = arith.constant 96 : index
    %c0_117 = arith.constant 0 : index
    %155 = vector.load %arg20[%c0_115, %c96_116, %c0_117] : memref<1x128x32xf32, #tpu.memory_space<vmem>>, vector<1x32x32xf32>
    %156 = vector.shape_cast %155 : vector<1x32x32xf32> to vector<32x32xf32>
    %cst_118 = arith.constant dense<0.000000e+00> : vector<2x32xf32>
    %157 = tpu.matmul %85, %156, %cst_118 {dimension_numbers = #tpu.dot_dimension_numbers<[1], [0], [0], [1], [0, 0, 1, 1], [], []>} : vector<2x32xf32>, vector<32x32xf32>, vector<2x32xf32> -> vector<2x32xf32>
    %158 = arith.addf %154, %157 : vector<2x32xf32>
    %c0_119 = arith.constant 0 : index
    %c3 = arith.constant 3 : index
    %c0_120 = arith.constant 0 : index
    %159 = vector.load %arg21[%c0_119, %c3, %c0_120] : memref<1x4x32xf32, #tpu.memory_space<vmem>>, vector<1x1x32xf32>
    %160 = vector.shape_cast %159 : vector<1x1x32xf32> to vector<1x32xf32>
    %161 = vector.broadcast %160 : vector<1x32xf32> to vector<2x32xf32>
    %162 = arith.addf %158, %161 : vector<2x32xf32>
    %cst_121 = arith.constant 0.000000e+00 : f32
    %163 = vector.broadcast %cst_121 : f32 to vector<2x32xf32>
    %164 = arith.subf %163, %162 : vector<2x32xf32>
    %165 = math.exp %164 : vector<2x32xf32>
    %cst_122 = arith.constant 1.000000e+00 : f32
    %166 = vector.broadcast %cst_122 : f32 to vector<2x32xf32>
    %167 = arith.addf %166, %165 : vector<2x32xf32>
    %cst_123 = arith.constant 1.000000e+00 : f32
    %168 = vector.broadcast %cst_123 : f32 to vector<2x32xf32>
    %169 = arith.divf %168, %167 : vector<2x32xf32>
    %170 = arith.mulf %131, %87 : vector<2x32xf32>
    %171 = arith.mulf %109, %147 : vector<2x32xf32>
    %172 = arith.addf %170, %171 : vector<2x32xf32>
    %173 = math.tanh %172 : vector<2x32xf32>
    %174 = arith.mulf %169, %173 : vector<2x32xf32>
    %c0_124 = arith.constant 0 : index
    %c0_125 = arith.constant 0 : index
    %c0_126 = arith.constant 0 : index
    %175 = vector.load %arg22[%c0_124, %c0_125, %c0_126] : memref<1x32x32xbf16, #tpu.memory_space<vmem>>, vector<1x32x32xbf16>
    %176 = vector.shape_cast %175 : vector<1x32x32xbf16> to vector<32x32xbf16>
    %c0_127 = arith.constant 0 : index
    %c0_128 = arith.constant 0 : index
    %c0_129 = arith.constant 0 : index
    %177 = vector.load %arg23[%c0_127, %c0_128, %c0_129] : memref<1x1x32xf32, #tpu.memory_space<vmem>>, vector<1x1x32xf32>
    %178 = vector.shape_cast %177 : vector<1x1x32xf32> to vector<1x32xf32>
    %179 = arith.truncf %174 : vector<2x32xf32> to vector<2x32xbf16>
    %cst_130 = arith.constant dense<0.000000e+00> : vector<2x32xf32>
    %180 = tpu.matmul %179, %176, %cst_130 {dimension_numbers = #tpu.dot_dimension_numbers<[1], [0], [0], [1], [0, 0, 1, 1], [], []>} : vector<2x32xbf16>, vector<32x32xbf16>, vector<2x32xf32> -> vector<2x32xf32>
    %181 = vector.broadcast %178 : vector<1x32xf32> to vector<2x32xf32>
    %182 = arith.addf %180, %181 : vector<2x32xf32>
    %cst_131 = arith.constant 0.000000e+00 : f32
    %183 = vector.broadcast %cst_131 : f32 to vector<2x32xf32>
    %184 = arith.cmpf ogt, %182, %183 : vector<2x32xf32>
    %cst_132 = arith.constant 0.000000e+00 : f32
    %185 = vector.broadcast %cst_132 : f32 to vector<2x32xf32>
    %186 = arith.minimumf %182, %185 : vector<2x32xf32>
    %187 = math.exp %186 : vector<2x32xf32>
    %cst_133 = arith.constant 1.000000e+00 : f32
    %188 = vector.broadcast %cst_133 : f32 to vector<2x32xf32>
    %189 = arith.subf %187, %188 : vector<2x32xf32>
    %190 = arith.select %184, %182, %189 : vector<2x32xi1>, vector<2x32xf32>
    %c0_134 = arith.constant 0 : index
    %c0_135 = arith.constant 0 : index
    %c0_136 = arith.constant 0 : index
    %191 = vector.load %arg24[%c0_134, %c0_135, %c0_136] : memref<1x32x32xbf16, #tpu.memory_space<vmem>>, vector<1x32x32xbf16>
    %192 = vector.shape_cast %191 : vector<1x32x32xbf16> to vector<32x32xbf16>
    %c0_137 = arith.constant 0 : index
    %c0_138 = arith.constant 0 : index
    %c0_139 = arith.constant 0 : index
    %193 = vector.load %arg25[%c0_137, %c0_138, %c0_139] : memref<1x1x32xf32, #tpu.memory_space<vmem>>, vector<1x1x32xf32>
    %194 = vector.shape_cast %193 : vector<1x1x32xf32> to vector<1x32xf32>
    %195 = arith.truncf %190 : vector<2x32xf32> to vector<2x32xbf16>
    %cst_140 = arith.constant dense<0.000000e+00> : vector<2x32xf32>
    %196 = tpu.matmul %195, %192, %cst_140 {dimension_numbers = #tpu.dot_dimension_numbers<[1], [0], [0], [1], [0, 0, 1, 1], [], []>} : vector<2x32xbf16>, vector<32x32xbf16>, vector<2x32xf32> -> vector<2x32xf32>
    %197 = vector.broadcast %194 : vector<1x32xf32> to vector<2x32xf32>
    %198 = arith.addf %196, %197 : vector<2x32xf32>
    %cst_141 = arith.constant 0.000000e+00 : f32
    %199 = vector.broadcast %cst_141 : f32 to vector<2x32xf32>
    %200 = arith.cmpf ogt, %198, %199 : vector<2x32xf32>
    %cst_142 = arith.constant 0.000000e+00 : f32
    %201 = vector.broadcast %cst_142 : f32 to vector<2x32xf32>
    %202 = arith.minimumf %198, %201 : vector<2x32xf32>
    %203 = math.exp %202 : vector<2x32xf32>
    %cst_143 = arith.constant 1.000000e+00 : f32
    %204 = vector.broadcast %cst_143 : f32 to vector<2x32xf32>
    %205 = arith.subf %203, %204 : vector<2x32xf32>
    %206 = arith.select %200, %198, %205 : vector<2x32xi1>, vector<2x32xf32>
    %c0_144 = arith.constant 0 : index
    %c0_145 = arith.constant 0 : index
    %c0_146 = arith.constant 0 : index
    %207 = vector.load %arg26[%c0_144, %c0_145, %c0_146] : memref<1x32x128xbf16, #tpu.memory_space<vmem>>, vector<1x32x128xbf16>
    %208 = vector.shape_cast %207 : vector<1x32x128xbf16> to vector<32x128xbf16>
    %c0_147 = arith.constant 0 : index
    %c0_148 = arith.constant 0 : index
    %c0_149 = arith.constant 0 : index
    %209 = vector.load %arg27[%c0_147, %c0_148, %c0_149] : memref<1x1x128xf32, #tpu.memory_space<vmem>>, vector<1x1x128xf32>
    %210 = vector.shape_cast %209 : vector<1x1x128xf32> to vector<1x128xf32>
    %211 = arith.truncf %206 : vector<2x32xf32> to vector<2x32xbf16>
    %cst_150 = arith.constant dense<0.000000e+00> : vector<2x128xf32>
    %212 = tpu.matmul %211, %208, %cst_150 {dimension_numbers = #tpu.dot_dimension_numbers<[1], [0], [0], [1], [0, 0, 1, 1], [], []>} : vector<2x32xbf16>, vector<32x128xbf16>, vector<2x128xf32> -> vector<2x128xf32>
    %213 = vector.broadcast %210 : vector<1x128xf32> to vector<2x128xf32>
    %214 = arith.addf %212, %213 : vector<2x128xf32>
    %c0_151 = arith.constant 0 : index
    %c0_152 = arith.constant 0 : index
    %c0_153 = arith.constant 0 : index
    %215 = vector.load %arg28[%c0_151, %c0_152, %c0_153] : memref<1x2x128xf32, #tpu.memory_space<vmem>>, vector<1x2x128xf32>
    %216 = vector.shape_cast %215 : vector<1x2x128xf32> to vector<2x128xf32>
    %217 = vector.shape_cast %214 : vector<2x128xf32> to vector<1x2x128xf32>
    tpu.vector_store %arg28[%c0_151, %c0_152, %c0_153], %217 {strides = array<i32>} : memref<1x2x128xf32, #tpu.memory_space<vmem>>, vector<1x2x128xf32>,
    %c0_154 = arith.constant 0 : index
    %c0_155 = arith.constant 0 : index
    %c0_156 = arith.constant 0 : index
    %218 = vector.load %arg29[%c0_154, %c0_155, %c0_156] : memref<1x2x32xf32, #tpu.memory_space<vmem>>, vector<1x2x32xf32>
    %219 = vector.shape_cast %218 : vector<1x2x32xf32> to vector<2x32xf32>
    %220 = vector.shape_cast %174 : vector<2x32xf32> to vector<1x2x32xf32>
    tpu.vector_store %arg29[%c0_154, %c0_155, %c0_156], %220 {strides = array<i32>} : memref<1x2x32xf32, #tpu.memory_space<vmem>>, vector<1x2x32xf32>,
    %c0_157 = arith.constant 0 : index
    %c0_158 = arith.constant 0 : index
    %c0_159 = arith.constant 0 : index
    %221 = vector.load %arg30[%c0_157, %c0_158, %c0_159] : memref<1x2x32xf32, #tpu.memory_space<vmem>>, vector<1x2x32xf32>
    %222 = vector.shape_cast %221 : vector<1x2x32xf32> to vector<2x32xf32>
    %223 = vector.shape_cast %172 : vector<2x32xf32> to vector<1x2x32xf32>
    tpu.vector_store %arg30[%c0_157, %c0_158, %c0_159], %223 {strides = array<i32>} : memref<1x2x32xf32, #tpu.memory_space<vmem>>, vector<1x2x32xf32>,
    return
  }
  func.func @transform_0(%arg0: i32) -> (i32, i32, i32) {
    %c0_i32 = arith.constant 0 : i32
    %c0_i32_0 = arith.constant 0 : i32
    %c0_i32_1 = arith.constant 0 : i32
    return %arg0, %c0_i32, %c0_i32_0 : i32, i32, i32
  }
  func.func @transform_1(%arg0: i32) -> (i32, i32, i32) {
    %c0_i32 = arith.constant 0 : i32
    %c0_i32_0 = arith.constant 0 : i32
    %c0_i32_1 = arith.constant 0 : i32
    return %arg0, %c0_i32, %c0_i32_0 : i32, i32, i32
  }
  func.func @transform_2(%arg0: i32) -> (i32, i32, i32) {
    %c0_i32 = arith.constant 0 : i32
    %c0_i32_0 = arith.constant 0 : i32
    %c0_i32_1 = arith.constant 0 : i32
    return %arg0, %c0_i32, %c0_i32_0 : i32, i32, i32
  }
  func.func @transform_3(%arg0: i32) -> (i32, i32, i32) {
    %c0_i32 = arith.constant 0 : i32
    %c0_i32_0 = arith.constant 0 : i32
    %c0_i32_1 = arith.constant 0 : i32
    return %arg0, %c0_i32, %c0_i32_0 : i32, i32, i32
  }
  func.func @transform_4(%arg0: i32) -> (i32, i32, i32) {
    %c0_i32 = arith.constant 0 : i32
    %c0_i32_0 = arith.constant 0 : i32
    %c0_i32_1 = arith.constant 0 : i32
    return %arg0, %c0_i32, %c0_i32_0 : i32, i32, i32
  }
  func.func @transform_5(%arg0: i32) -> (i32, i32, i32) {
    %c0_i32 = arith.constant 0 : i32
    %c0_i32_0 = arith.constant 0 : i32
    %c0_i32_1 = arith.constant 0 : i32
    return %arg0, %c0_i32, %c0_i32_0 : i32, i32, i32
  }
  func.func @transform_6(%arg0: i32) -> (i32, i32, i32) {
    %c0_i32 = arith.constant 0 : i32
    %c0_i32_0 = arith.constant 0 : i32
    %c0_i32_1 = arith.constant 0 : i32
    return %arg0, %c0_i32, %c0_i32_0 : i32, i32, i32
  }
  func.func @transform_7(%arg0: i32) -> (i32, i32, i32) {
    %c0_i32 = arith.constant 0 : i32
    %c0_i32_0 = arith.constant 0 : i32
    %c0_i32_1 = arith.constant 0 : i32
    return %arg0, %c0_i32, %c0_i32_0 : i32, i32, i32
  }
  func.func @transform_8(%arg0: i32) -> (i32, i32, i32) {
    %c0_i32 = arith.constant 0 : i32
    %c0_i32_0 = arith.constant 0 : i32
    %c0_i32_1 = arith.constant 0 : i32
    return %arg0, %c0_i32, %c0_i32_0 : i32, i32, i32
  }
  func.func @transform_9(%arg0: i32) -> (i32, i32, i32) {
    %c0_i32 = arith.constant 0 : i32
    %c0_i32_0 = arith.constant 0 : i32
    %c0_i32_1 = arith.constant 0 : i32
    return %arg0, %c0_i32, %c0_i32_0 : i32, i32, i32
  }
  func.func @transform_10(%arg0: i32) -> (i32, i32, i32) {
    %c0_i32 = arith.constant 0 : i32
    %c0_i32_0 = arith.constant 0 : i32
    %c0_i32_1 = arith.constant 0 : i32
    return %arg0, %c0_i32, %c0_i32_0 : i32, i32, i32
  }
  func.func @transform_11(%arg0: i32) -> (i32, i32, i32) {
    %c0_i32 = arith.constant 0 : i32
    %c0_i32_0 = arith.constant 0 : i32
    %c0_i32_1 = arith.constant 0 : i32
    return %arg0, %c0_i32, %c0_i32_0 : i32, i32, i32
  }
  func.func @transform_12(%arg0: i32) -> (i32, i32, i32) {
    %c0_i32 = arith.constant 0 : i32
    %c0_i32_0 = arith.constant 0 : i32
    %c0_i32_1 = arith.constant 0 : i32
    return %arg0, %c0_i32, %c0_i32_0 : i32, i32, i32
  }
  func.func @transform_13(%arg0: i32) -> (i32, i32, i32) {
    %c0_i32 = arith.constant 0 : i32
    %c0_i32_0 = arith.constant 0 : i32
    %c0_i32_1 = arith.constant 0 : i32
    return %arg0, %c0_i32, %c0_i32_0 : i32, i32, i32
  }
  func.func @transform_14(%arg0: i32) -> (i32, i32, i32) {
    %c0_i32 = arith.constant 0 : i32
    %c0_i32_0 = arith.constant 0 : i32
    %c0_i32_1 = arith.constant 0 : i32
    return %arg0, %c0_i32, %c0_i32_0 : i32, i32, i32
  }
  func.func @transform_15(%arg0: i32) -> (i32, i32, i32) {
    %c0_i32 = arith.constant 0 : i32
    %c0_i32_0 = arith.constant 0 : i32
    %c0_i32_1 = arith.constant 0 : i32
    return %arg0, %c0_i32, %c0_i32_0 : i32, i32, i32
  }
  func.func @transform_16(%arg0: i32) -> (i32, i32, i32) {
    %c0_i32 = arith.constant 0 : i32
    %c0_i32_0 = arith.constant 0 : i32
    %c0_i32_1 = arith.constant 0 : i32
    return %arg0, %c0_i32, %c0_i32_0 : i32, i32, i32
  }
  func.func @transform_17(%arg0: i32) -> (i32, i32, i32) {
    %c0_i32 = arith.constant 0 : i32
    %c0_i32_0 = arith.constant 0 : i32
    %c0_i32_1 = arith.constant 0 : i32
    return %arg0, %c0_i32, %c0_i32_0 : i32, i32, i32
  }
  func.func @transform_18(%arg0: i32) -> (i32, i32, i32) {
    %c0_i32 = arith.constant 0 : i32
    %c0_i32_0 = arith.constant 0 : i32
    %c0_i32_1 = arith.constant 0 : i32
    return %arg0, %c0_i32, %c0_i32_0 : i32, i32, i32
  }
  func.func @transform_19(%arg0: i32) -> (i32, i32, i32) {
    %c0_i32 = arith.constant 0 : i32
    %c0_i32_0 = arith.constant 0 : i32
    %c0_i32_1 = arith.constant 0 : i32
    return %arg0, %c0_i32, %c0_i32_0 : i32, i32, i32
  }
  func.func @transform_20(%arg0: i32) -> (i32, i32, i32) {
    %c0_i32 = arith.constant 0 : i32
    %c0_i32_0 = arith.constant 0 : i32
    %c0_i32_1 = arith.constant 0 : i32
    return %arg0, %c0_i32, %c0_i32_0 : i32, i32, i32
  }
  func.func @transform_21(%arg0: i32) -> (i32, i32, i32) {
    %c0_i32 = arith.constant 0 : i32
    %c0_i32_0 = arith.constant 0 : i32
    %c0_i32_1 = arith.constant 0 : i32
    return %arg0, %c0_i32, %c0_i32_0 : i32, i32, i32
  }
  func.func @transform_22(%arg0: i32) -> (i32, i32, i32) {
    %c0_i32 = arith.constant 0 : i32
    %c0_i32_0 = arith.constant 0 : i32
    %c0_i32_1 = arith.constant 0 : i32
    return %arg0, %c0_i32, %c0_i32_0 : i32, i32, i32
  }
  func.func @transform_23(%arg0: i32) -> (i32, i32, i32) {
    %c0_i32 = arith.constant 0 : i32
    %c0_i32_0 = arith.constant 0 : i32
    %c0_i32_1 = arith.constant 0 : i32
    return %arg0, %c0_i32, %c0_i32_0 : i32, i32, i32
  }
  func.func @transform_24(%arg0: i32) -> (i32, i32, i32) {
    %c0_i32 = arith.constant 0 : i32
    %c0_i32_0 = arith.constant 0 : i32
    %c0_i32_1 = arith.constant 0 : i32
    return %arg0, %c0_i32, %c0_i32_0 : i32, i32, i32
  }
  func.func @transform_25(%arg0: i32) -> (i32, i32, i32) {
    %c0_i32 = arith.constant 0 : i32
    %c0_i32_0 = arith.constant 0 : i32
    %c0_i32_1 = arith.constant 0 : i32
    return %arg0, %c0_i32, %c0_i32_0 : i32, i32, i32
  }
  func.func @transform_26(%arg0: i32) -> (i32, i32, i32) {
    %c0_i32 = arith.constant 0 : i32
    %c0_i32_0 = arith.constant 0 : i32
    %c0_i32_1 = arith.constant 0 : i32
    return %arg0, %c0_i32, %c0_i32_0 : i32, i32, i32
  }
  func.func @transform_27(%arg0: i32) -> (i32, i32, i32) {
    %c0_i32 = arith.constant 0 : i32
    %c0_i32_0 = arith.constant 0 : i32
    %c0_i32_1 = arith.constant 0 : i32
    return %arg0, %c0_i32, %c0_i32_0 : i32, i32, i32
  }
  func.func @transform_28(%arg0: i32) -> (i32, i32, i32) {
    %c0_i32 = arith.constant 0 : i32
    %c0_i32_0 = arith.constant 0 : i32
    %c0_i32_1 = arith.constant 0 : i32
    return %arg0, %c0_i32, %c0_i32_0 : i32, i32, i32
  }
  func.func @transform_29(%arg0: i32) -> (i32, i32, i32) {
    %c0_i32 = arith.constant 0 : i32
    %c0_i32_0 = arith.constant 0 : i32
    %c0_i32_1 = arith.constant 0 : i32
    return %arg0, %c0_i32, %c0_i32_0 : i32, i32, i32
  }
}

</mosaic_0001>

<llo_original>
// kernel: fwd.1
$region0: #{fwd.1}
  #allocation0 [shape = 'u32[]', space=smem, size = 0x4, offset = 0x4, fixed_abs, tag = 'smem constant byte address 0x4 - core index']
  #allocation1 [shape = 'u32[72,128]{1,0:T(1,128)}', space=vmem, size = 0x9000, scoped, tag = 'internal scratch']
  %s0 = inlined_call_operand.smem [shape: u32[30], index: -1, kind: input, shape index: {}]
  %s1 = sld [smem:[%s0]]
  %s2 = scalar_lea.smem %s0, 1
  %s3 = sld [smem:[%s2]]
  %s4 = scalar_lea.smem %s0, 2
  %s5 = sld [smem:[%s4]]
  %s6 = scalar_lea.smem %s0, 3
  %s7 = sld [smem:[%s6]]
  %s8 = scalar_lea.smem %s0, 4
  %s9 = sld [smem:[%s8]]
  %s10 = scalar_lea.smem %s0, 5
  %s11 = sld [smem:[%s10]]
  %s12 = scalar_lea.smem %s0, 6
  %s13 = sld [smem:[%s12]]
  %s14 = scalar_lea.smem %s0, 7
  %s15 = sld [smem:[%s14]]
  %s16 = scalar_lea.smem %s0, 8
  %s17 = sld [smem:[%s16]]
  %s18 = scalar_lea.smem %s0, 9
  %s19 = sld [smem:[%s18]]
  %s20 = scalar_lea.smem %s0, 10
  %s21 = sld [smem:[%s20]]
  %s22 = scalar_lea.smem %s0, 11
  %s23 = sld [smem:[%s22]]
  %s24 = scalar_lea.smem %s0, 12
  %s25 = sld [smem:[%s24]]
  %s26 = scalar_lea.smem %s0, 13
  %s27 = sld [smem:[%s26]]
  %s28 = scalar_lea.smem %s0, 14
  %s29 = sld [smem:[%s28]]
  %s30 = scalar_lea.smem %s0, 15
  %s31 = sld [smem:[%s30]]
  %s32 = scalar_lea.smem %s0, 16
  %s33 = sld [smem:[%s32]]
  %s34 = scalar_lea.smem %s0, 17
  %s35 = sld [smem:[%s34]]
  %s36 = scalar_lea.smem %s0, 18
  %s37 = sld [smem:[%s36]]
  %s38 = scalar_lea.smem %s0, 19
  %s39 = sld [smem:[%s38]]
  %s40 = scalar_lea.smem %s0, 20
  %s41 = sld [smem:[%s40]]
  %s42 = scalar_lea.smem %s0, 21
  %s43 = sld [smem:[%s42]]
  %s44 = scalar_lea.smem %s0, 22
  %s45 = sld [smem:[%s44]]
  %s46 = scalar_lea.smem %s0, 23
  %s47 = sld [smem:[%s46]]
  %s48 = scalar_lea.smem %s0, 24
  %s49 = sld [smem:[%s48]]
  %s50 = scalar_lea.smem %s0, 25
  %s51 = sld [smem:[%s50]]
  %s52 = scalar_lea.smem %s0, 26
  %s53 = sld [smem:[%s52]]
  %s54 = scalar_lea.smem %s0, 27
  %s55 = sld [smem:[%s54]]
  %s56 = scalar_lea.smem %s0, 28
  %s57 = sld [smem:[%s56]]
  %s58 = scalar_lea.smem %s0, 29
  %s59 = sld [smem:[%s58]]
  %60 = xla_tuple %s55, %s57, %s59
  %s61 = sld [smem:[#allocation0]]
  $region245: #{fwd.1} parent=0
    _
  %s63 = ssub.s32 1, %s61
  %s64 = scalar_select 0, %s63, %s61
  $region1: #{fwd.1} parent=0
    #allocation2 [shape = 'u8[18432]{0}', space=vmem, size = 0x4800, scoped, tag = 'input window, operand 0']
    #allocation3 [shape = 's32[2]{0}', space=sflag, size = 0x8, scoped, tag = 'scoped memory for fwd.1']
    #allocation4 [shape = 's32[2]{0}', space=sflag, size = 0x8, scoped, tag = 'scoped memory for fwd.1']
    #allocation5 [shape = 'u8[2113536]{0}', space=vmem, size = 0x204000, scoped, tag = 'input window, operand 3']
    #allocation6 [shape = 's32[2]{0}', space=sflag, size = 0x8, scoped, tag = 'scoped memory for fwd.1']
    #allocation7 [shape = 'u8[4096]{0}', space=vmem, size = 0x1000, scoped, tag = 'input window, operand 4']
    #allocation8 [shape = 'u8[262144]{0}', space=vmem, size = 0x40000, scoped, tag = 'input window, operand 5']
    #allocation9 [shape = 's32[2]{0}', space=sflag, size = 0x8, scoped, tag = 'scoped memory for fwd.1']
    #allocation10 [shape = 'u8[1024]{0}', space=vmem, size = 0x400, scoped, tag = 'input window, operand 6']
    #allocation11 [shape = 'u8[65536]{0}', space=vmem, size = 0x10000, scoped, tag = 'input window, operand 7']
    #allocation12 [shape = 's32[2]{0}', space=sflag, size = 0x8, scoped, tag = 'scoped memory for fwd.1']
    #allocation13 [shape = 'u8[1024]{0}', space=vmem, size = 0x400, scoped, tag = 'input window, operand 8']
    #allocation14 [shape = 'u8[65536]{0}', space=vmem, size = 0x10000, scoped, tag = 'input window, operand 9']
    #allocation15 [shape = 's32[2]{0}', space=sflag, size = 0x8, scoped, tag = 'scoped memory for fwd.1']
    #allocation16 [shape = 'u8[1024]{0}', space=vmem, size = 0x400, scoped, tag = 'input window, operand 10']
    #allocation17 [shape = 'u8[65536]{0}', space=vmem, size = 0x10000, scoped, tag = 'input window, operand 11']
    #allocation18 [shape = 's32[2]{0}', space=sflag, size = 0x8, scoped, tag = 'scoped memory for fwd.1']
    #allocation19 [shape = 'u8[1024]{0}', space=vmem, size = 0x400, scoped, tag = 'input window, operand 12']
    #allocation20 [shape = 'u8[1024]{0}', space=vmem, size = 0x400, scoped, tag = 'input window, operand 14']
    #allocation21 [shape = 's32[2]{0}', space=sflag, size = 0x8, scoped, tag = 'scoped memory for fwd.1']
    #allocation22 [shape = 'u8[1024]{0}', space=vmem, size = 0x400, scoped, tag = 'input window, operand 15']
    #allocation23 [shape = 'u8[1024]{0}', space=vmem, size = 0x400, scoped, tag = 'input window, operand 16']
    #allocation24 [shape = 's32[2]{0}', space=sflag, size = 0x8, scoped, tag = 'scoped memory for fwd.1']
    #allocation25 [shape = 'u8[32768]{0}', space=vmem, size = 0x8000, scoped, tag = 'input window, operand 17']
    #allocation26 [shape = 'u8[4096]{0}', space=vmem, size = 0x1000, scoped, tag = 'input window, operand 20']
    #allocation27 [shape = 's32[2]{0}', space=sflag, size = 0x8, scoped, tag = 'scoped memory for fwd.1']
    #allocation28 [shape = 'u8[16384]{0}', space=vmem, size = 0x4000, scoped, tag = 'input window, operand 21']
    #allocation29 [shape = 'u8[1024]{0}', space=vmem, size = 0x400, scoped, tag = 'input window, operand 22']
    #allocation30 [shape = 's32[2]{0}', space=sflag, size = 0x8, scoped, tag = 'scoped memory for fwd.1']
    #allocation31 [shape = 'u8[16384]{0}', space=vmem, size = 0x4000, scoped, tag = 'input window, operand 23']
    #allocation32 [shape = 'u8[1024]{0}', space=vmem, size = 0x400, scoped, tag = 'input window, operand 24']
    #allocation33 [shape = 's32[2]{0}', space=sflag, size = 0x8, scoped, tag = 'scoped memory for fwd.1']
    #allocation34 [shape = 'u8[16384]{0}', space=vmem, size = 0x4000, scoped, tag = 'input window, operand 25']
    #allocation35 [shape = 'u8[1024]{0}', space=vmem, size = 0x400, scoped, tag = 'input window, operand 26']
    #allocation36 [shape = 's32[2]{0}', space=sflag, size = 0x8, scoped, tag = 'scoped memory for fwd.1']
    #allocation37 [shape = 'u8[2048]{0}', space=vmem, size = 0x800, scoped, tag = 'output window, operand 0']
    #allocation38 [shape = 'u8[2048]{0}', space=vmem, size = 0x800, scoped, tag = 'output window, operand 1']
    #allocation39 [shape = 's32[2]{0}', space=sflag, size = 0x8, scoped, tag = 'scoped memory for fwd.1']
    #allocation40 [shape = 'u8[2048]{0}', space=vmem, size = 0x800, scoped, tag = 'output window, operand 2']
    %65 = vsyncpa [#allocation3], 0
    %s66 = scalar_lea.sflag [#allocation3], 1
    %67 = vsyncpa %s66, 0
    %68 = vsyncpa [#allocation6], 0
    %s69 = scalar_lea.sflag [#allocation6], 1
    %70 = vsyncpa %s69, 0
    %71 = vsyncpa [#allocation9], 0
    %s72 = scalar_lea.sflag [#allocation9], 1
    %73 = vsyncpa %s72, 0
    %74 = vsyncpa [#allocation12], 0
    %s75 = scalar_lea.sflag [#allocation12], 1
    %76 = vsyncpa %s75, 0
    %77 = vsyncpa [#allocation15], 0
    %s78 = scalar_lea.sflag [#allocation15], 1
    %79 = vsyncpa %s78, 0
    %80 = vsyncpa [#allocation18], 0
    %s81 = scalar_lea.sflag [#allocation18], 1
    %82 = vsyncpa %s81, 0
    %83 = vsyncpa [#allocation21], 0
    %s84 = scalar_lea.sflag [#allocation21], 1
    %85 = vsyncpa %s84, 0
    %86 = vsyncpa [#allocation24], 0
    %s87 = scalar_lea.sflag [#allocation24], 1
    %88 = vsyncpa %s87, 0
    %89 = vsyncpa [#allocation27], 0
    %s90 = scalar_lea.sflag [#allocation27], 1
    %91 = vsyncpa %s90, 0
    %92 = vsyncpa [#allocation30], 0
    %s93 = scalar_lea.sflag [#allocation30], 1
    %94 = vsyncpa %s93, 0
    %95 = vsyncpa [#allocation33], 0
    %s96 = scalar_lea.sflag [#allocation33], 1
    %97 = vsyncpa %s96, 0
    %98 = vsyncpa [#allocation36], 0
    %s99 = scalar_lea.sflag [#allocation36], 1
    %100 = vsyncpa %s99, 0
    %101 = vsyncpa [#allocation4], 0
    %s102 = scalar_lea.sflag [#allocation4], 1
    %103 = vsyncpa %s102, 0
    %104 = vsyncpa [#allocation39], 0
    %s105 = scalar_lea.sflag [#allocation39], 1
    %106 = vsyncpa %s105, 0
    loop: start=0, step=1, limit=4
    $region2: #{fwd.1} parent=1 // loop_pre_header
      _
    $region3: #{fwd.1} parent=1 // loop_header
      %s108 = sphi 0, %s112
      %p109 = scmp.ge.s32.totalorder %s108, 4
      %s118 = sphi 0, %s120
      %s121 = sphi 0, %s118
      %s122 = sphi 0, %s121
      %s138 = sphi 0, %s122
      %s144 = sphi 0, %s146
      %s147 = sphi 0, %s144
      %s148 = sphi 0, %s147
      %s164 = sphi 0, %s148
      %s170 = sphi 0, %s172
      %s173 = sphi 0, %s170
      %s174 = sphi 0, %s173
      %s190 = sphi 0, %s174
      %s196 = sphi 0, %s198
      %s199 = sphi 0, %s196
      %s200 = sphi 0, %s199
      %s216 = sphi 0, %s200
      %s222 = sphi 0, %s224
      %s225 = sphi 0, %s222
      %s226 = sphi 0, %s225
      %s242 = sphi 0, %s226
      %s248 = sphi 0, %s250
      %s251 = sphi 0, %s248
      %s252 = sphi 0, %s251
      %s268 = sphi 0, %s252
      %s274 = sphi 0, %s276
      %s277 = sphi 0, %s274
      %s278 = sphi 0, %s277
      %s294 = sphi 0, %s278
      %s300 = sphi 0, %s302
      %s303 = sphi 0, %s300
      %s304 = sphi 0, %s303
      %s320 = sphi 0, %s304
      %s326 = sphi 0, %s328
      %s329 = sphi 0, %s326
      %s330 = sphi 0, %s329
      %s346 = sphi 0, %s330
      %s352 = sphi 0, %s354
      %s355 = sphi 0, %s352
      %s356 = sphi 0, %s355
      %s372 = sphi 0, %s356
      %s378 = sphi 0, %s380
      %s381 = sphi 0, %s378
      %s382 = sphi 0, %s381
      %s398 = sphi 0, %s382
      %s404 = sphi 0, %s406
      %s407 = sphi 0, %s404
      %s408 = sphi 0, %s407
      %s424 = sphi 0, %s408
      %s430 = sphi 0, %s432
      %s433 = sphi 0, %s430
      %s434 = sphi 0, %s433
      %s450 = sphi 0, %s434
      %s456 = sphi 0, %s458
      %s459 = sphi 0, %s456
      %s460 = sphi 0, %s459
      %s476 = sphi 0, %s460
      %s482 = sphi 0, %s484
      %s485 = sphi 0, %s482
      %s486 = sphi 0, %s485
      %s502 = sphi 0, %s486
      %s508 = sphi 0, %s510
      %s511 = sphi 0, %s508
      %s512 = sphi 0, %s511
      %s528 = sphi 0, %s512
      %s534 = sphi 0, %s536
      %s537 = sphi 0, %s534
      %s538 = sphi 0, %s537
      %s554 = sphi 0, %s538
      %s560 = sphi 0, %s562
      %s563 = sphi 0, %s560
      %s564 = sphi 0, %s563
      %s580 = sphi 0, %s564
      %s586 = sphi 0, %s588
      %s589 = sphi 0, %s586
      %s590 = sphi 0, %s589
      %s606 = sphi 0, %s590
      %s612 = sphi 0, %s614
      %s615 = sphi 0, %s612
      %s616 = sphi 0, %s615
      %s632 = sphi 0, %s616
      %s638 = sphi 0, %s640
      %s641 = sphi 0, %s638
      %s642 = sphi 0, %s641
      %s658 = sphi 0, %s642
      %s664 = sphi 0, %s666
      %s667 = sphi 0, %s664
      %s668 = sphi 0, %s667
      %s684 = sphi 0, %s668
      %s690 = sphi 0, %s692
      %s693 = sphi 0, %s690
      %s694 = sphi 0, %s693
      %s710 = sphi 0, %s694
      %s716 = sphi 0, %s718
      %s719 = sphi 0, %s716
      %s720 = sphi 0, %s719
      %s736 = sphi 0, %s720
      %s742 = sphi 0, %s744
      %s745 = sphi 0, %s742
      %s746 = sphi 0, %s745
      %s762 = sphi 0, %s746
      %s768 = sphi 0, %s770
      %s771 = sphi 0, %s768
      %s772 = sphi 0, %s771
      %s788 = sphi 0, %s772
      %s794 = sphi 0, %s796
      %s797 = sphi 0, %s794
      %s798 = sphi 0, %s797
      %s814 = sphi 0, %s798
      %s820 = sphi 0, %s822
      %s823 = sphi 0, %s820
      %s824 = sphi 0, %s823
      %s840 = sphi 0, %s824
      %s846 = sphi 0, %s848
      %s849 = sphi 0, %s846
      %s850 = sphi 0, %s849
      %s866 = sphi 0, %s850
      %s872 = sphi 0, %s874
      %s875 = sphi 0, %s872
      %s876 = sphi 0, %s875
      %s892 = sphi 0, %s876
    $region4: #{fwd.1} parent=1 // loop_header_branch
      %111 = sbr.rel (%p109) target = $region8
    $region5: #{fwd.1} parent=1 // loop_body
      %s113 = ssub.s32 %s108, 1
      %s114 = ssub.s32 %s108, 2
      %s115 = sadd.s32 %s108, 1
      %s116 = ssub.s32 %s108, %s115
      %p117 = scmp.eq.s32.totalorder %s116, 0
      %s119 = sadd.s32 %s118, 1
      %s120 = scalar_select %p117, %s118, %s119
      %p123 = pneg %p117
      %p124 = scmp.eq.s32.totalorder %s108, 1
      %p125 = por %p123, %p124
      %p126 = scmp.ne.s32.totalorder %s118, %s121
      %p127 = scmp.eq.s32.totalorder %s108, 0
      %p128 = por %p126, %p127
      %p129 = scmp.ne.s32.totalorder %s118, %s121
      %p130 = scmp.eq.s32.totalorder %s113, 1
      %p131 = por %p129, %p130
      %p132 = scmp.ne.s32.totalorder %s121, %s122
      %p133 = scmp.eq.s32.totalorder %s113, 0
      %p134 = por %p132, %p133
      %p135 = scmp.ne.s32.totalorder %s121, %s122
      %p136 = scmp.eq.s32.totalorder %s114, 1
      %p137 = por %p135, %p136
      %p139 = scmp.ne.s32.totalorder %s122, %s138
      %p140 = scmp.eq.s32.totalorder %s114, 0
      %p141 = por %p139, %p140
      %s142 = ssub.s32 %s108, %s115
      %p143 = scmp.eq.s32.totalorder %s142, 0
      %s145 = sadd.s32 %s144, 1
      %s146 = scalar_select %p143, %s144, %s145
      %p149 = pneg %p143
      %p150 = scmp.eq.s32.totalorder %s108, 1
      %p151 = por %p149, %p150
      %p152 = scmp.ne.s32.totalorder %s144, %s147
      %p153 = scmp.eq.s32.totalorder %s108, 0
      %p154 = por %p152, %p153
      %p155 = scmp.ne.s32.totalorder %s144, %s147
      %p156 = scmp.eq.s32.totalorder %s113, 1
      %p157 = por %p155, %p156
      %p158 = scmp.ne.s32.totalorder %s147, %s148
      %p159 = scmp.eq.s32.totalorder %s113, 0
      %p160 = por %p158, %p159
      %p161 = scmp.ne.s32.totalorder %s147, %s148
      %p162 = scmp.eq.s32.totalorder %s114, 1
      %p163 = por %p161, %p162
      %p165 = scmp.ne.s32.totalorder %s148, %s164
      %p166 = scmp.eq.s32.totalorder %s114, 0
      %p167 = por %p165, %p166
      %s168 = ssub.s32 %s108, %s115
      %p169 = scmp.eq.s32.totalorder %s168, 0
      %s171 = sadd.s32 %s170, 1
      %s172 = scalar_select %p169, %s170, %s171
      %p175 = pneg %p169
      %p176 = scmp.eq.s32.totalorder %s108, 1
      %p177 = por %p175, %p176
      %p178 = scmp.ne.s32.totalorder %s170, %s173
      %p179 = scmp.eq.s32.totalorder %s108, 0
      %p180 = por %p178, %p179
      %p181 = scmp.ne.s32.totalorder %s170, %s173
      %p182 = scmp.eq.s32.totalorder %s113, 1
      %p183 = por %p181, %p182
      %p184 = scmp.ne.s32.totalorder %s173, %s174
      %p185 = scmp.eq.s32.totalorder %s113, 0
      %p186 = por %p184, %p185
      %p187 = scmp.ne.s32.totalorder %s173, %s174
      %p188 = scmp.eq.s32.totalorder %s114, 1
      %p189 = por %p187, %p188
      %p191 = scmp.ne.s32.totalorder %s174, %s190
      %p192 = scmp.eq.s32.totalorder %s114, 0
      %p193 = por %p191, %p192
      %s194 = ssub.s32 %s108, %s115
      %p195 = scmp.eq.s32.totalorder %s194, 0
      %s197 = sadd.s32 %s196, 1
      %s198 = scalar_select %p195, %s196, %s197
      %p201 = pneg %p195
      %p202 = scmp.eq.s32.totalorder %s108, 1
      %p203 = por %p201, %p202
      %p204 = scmp.ne.s32.totalorder %s196, %s199
      %p205 = scmp.eq.s32.totalorder %s108, 0
      %p206 = por %p204, %p205
      %p207 = scmp.ne.s32.totalorder %s196, %s199
      %p208 = scmp.eq.s32.totalorder %s113, 1
      %p209 = por %p207, %p208
      %p210 = scmp.ne.s32.totalorder %s199, %s200
      %p211 = scmp.eq.s32.totalorder %s113, 0
      %p212 = por %p210, %p211
      %p213 = scmp.ne.s32.totalorder %s199, %s200
      %p214 = scmp.eq.s32.totalorder %s114, 1
      %p215 = por %p213, %p214
      %p217 = scmp.ne.s32.totalorder %s200, %s216
      %p218 = scmp.eq.s32.totalorder %s114, 0
      %p219 = por %p217, %p218
      %s220 = ssub.s32 %s108, %s115
      %p221 = scmp.eq.s32.totalorder %s220, 0
      %s223 = sadd.s32 %s222, 1
      %s224 = scalar_select %p221, %s222, %s223
      %p227 = pneg %p221
      %p228 = scmp.eq.s32.totalorder %s108, 1
      %p229 = por %p227, %p228
      %p230 = scmp.ne.s32.totalorder %s222, %s225
      %p231 = scmp.eq.s32.totalorder %s108, 0
      %p232 = por %p230, %p231
      %p233 = scmp.ne.s32.totalorder %s222, %s225
      %p234 = scmp.eq.s32.totalorder %s113, 1
      %p235 = por %p233, %p234
      %p236 = scmp.ne.s32.totalorder %s225, %s226
      %p237 = scmp.eq.s32.totalorder %s113, 0
      %p238 = por %p236, %p237
      %p239 = scmp.ne.s32.totalorder %s225, %s226
      %p240 = scmp.eq.s32.totalorder %s114, 1
      %p241 = por %p239, %p240
      %p243 = scmp.ne.s32.totalorder %s226, %s242
      %p244 = scmp.eq.s32.totalorder %s114, 0
      %p245 = por %p243, %p244
      %s246 = ssub.s32 %s108, %s115
      %p247 = scmp.eq.s32.totalorder %s246, 0
      %s249 = sadd.s32 %s248, 1
      %s250 = scalar_select %p247, %s248, %s249
      %p253 = pneg %p247
      %p254 = scmp.eq.s32.totalorder %s108, 1
      %p255 = por %p253, %p254
      %p256 = scmp.ne.s32.totalorder %s248, %s251
      %p257 = scmp.eq.s32.totalorder %s108, 0
      %p258 = por %p256, %p257
      %p259 = scmp.ne.s32.totalorder %s248, %s251
      %p260 = scmp.eq.s32.totalorder %s113, 1
      %p261 = por %p259, %p260
      %p262 = scmp.ne.s32.totalorder %s251, %s252
      %p263 = scmp.eq.s32.totalorder %s113, 0
      %p264 = por %p262, %p263
      %p265 = scmp.ne.s32.totalorder %s251, %s252
      %p266 = scmp.eq.s32.totalorder %s114, 1
      %p267 = por %p265, %p266
      %p269 = scmp.ne.s32.totalorder %s252, %s268
      %p270 = scmp.eq.s32.totalorder %s114, 0
      %p271 = por %p269, %p270
      %s272 = ssub.s32 %s108, %s115
      %p273 = scmp.eq.s32.totalorder %s272, 0
      %s275 = sadd.s32 %s274, 1
      %s276 = scalar_select %p273, %s274, %s275
      %p279 = pneg %p273
      %p280 = scmp.eq.s32.totalorder %s108, 1
      %p281 = por %p279, %p280
      %p282 = scmp.ne.s32.totalorder %s274, %s277
      %p283 = scmp.eq.s32.totalorder %s108, 0
      %p284 = por %p282, %p283
      %p285 = scmp.ne.s32.totalorder %s274, %s277
      %p286 = scmp.eq.s32.totalorder %s113, 1
      %p287 = por %p285, %p286
      %p288 = scmp.ne.s32.totalorder %s277, %s278
      %p289 = scmp.eq.s32.totalorder %s113, 0
      %p290 = por %p288, %p289
      %p291 = scmp.ne.s32.totalorder %s277, %s278
      %p292 = scmp.eq.s32.totalorder %s114, 1
      %p293 = por %p291, %p292
      %p295 = scmp.ne.s32.totalorder %s278, %s294
      %p296 = scmp.eq.s32.totalorder %s114, 0
      %p297 = por %p295, %p296
      %s298 = ssub.s32 %s108, %s115
      %p299 = scmp.eq.s32.totalorder %s298, 0
      %s301 = sadd.s32 %s300, 1
      %s302 = scalar_select %p299, %s300, %s301
      %p305 = pneg %p299
      %p306 = scmp.eq.s32.totalorder %s108, 1
      %p307 = por %p305, %p306
      %p308 = scmp.ne.s32.totalorder %s300, %s303
      %p309 = scmp.eq.s32.totalorder %s108, 0
      %p310 = por %p308, %p309
      %p311 = scmp.ne.s32.totalorder %s300, %s303
      %p312 = scmp.eq.s32.totalorder %s113, 1
      %p313 = por %p311, %p312
      %p314 = scmp.ne.s32.totalorder %s303, %s304
      %p315 = scmp.eq.s32.totalorder %s113, 0
      %p316 = por %p314, %p315
      %p317 = scmp.ne.s32.totalorder %s303, %s304
      %p318 = scmp.eq.s32.totalorder %s114, 1
      %p319 = por %p317, %p318
      %p321 = scmp.ne.s32.totalorder %s304, %s320
      %p322 = scmp.eq.s32.totalorder %s114, 0
      %p323 = por %p321, %p322
      %s324 = ssub.s32 %s108, %s115
      %p325 = scmp.eq.s32.totalorder %s324, 0
      %s327 = sadd.s32 %s326, 1
      %s328 = scalar_select %p325, %s326, %s327
      %p331 = pneg %p325
      %p332 = scmp.eq.s32.totalorder %s108, 1
      %p333 = por %p331, %p332
      %p334 = scmp.ne.s32.totalorder %s326, %s329
      %p335 = scmp.eq.s32.totalorder %s108, 0
      %p336 = por %p334, %p335
      %p337 = scmp.ne.s32.totalorder %s326, %s329
      %p338 = scmp.eq.s32.totalorder %s113, 1
      %p339 = por %p337, %p338
      %p340 = scmp.ne.s32.totalorder %s329, %s330
      %p341 = scmp.eq.s32.totalorder %s113, 0
      %p342 = por %p340, %p341
      %p343 = scmp.ne.s32.totalorder %s329, %s330
      %p344 = scmp.eq.s32.totalorder %s114, 1
      %p345 = por %p343, %p344
      %p347 = scmp.ne.s32.totalorder %s330, %s346
      %p348 = scmp.eq.s32.totalorder %s114, 0
      %p349 = por %p347, %p348
      %s350 = ssub.s32 %s108, %s115
      %p351 = scmp.eq.s32.totalorder %s350, 0
      %s353 = sadd.s32 %s352, 1
      %s354 = scalar_select %p351, %s352, %s353
      %p357 = pneg %p351
      %p358 = scmp.eq.s32.totalorder %s108, 1
      %p359 = por %p357, %p358
      %p360 = scmp.ne.s32.totalorder %s352, %s355
      %p361 = scmp.eq.s32.totalorder %s108, 0
      %p362 = por %p360, %p361
      %p363 = scmp.ne.s32.totalorder %s352, %s355
      %p364 = scmp.eq.s32.totalorder %s113, 1
      %p365 = por %p363, %p364
      %p366 = scmp.ne.s32.totalorder %s355, %s356
      %p367 = scmp.eq.s32.totalorder %s113, 0
      %p368 = por %p366, %p367
      %p369 = scmp.ne.s32.totalorder %s355, %s356
      %p370 = scmp.eq.s32.totalorder %s114, 1
      %p371 = por %p369, %p370
      %p373 = scmp.ne.s32.totalorder %s356, %s372
      %p374 = scmp.eq.s32.totalorder %s114, 0
      %p375 = por %p373, %p374
      %s376 = ssub.s32 %s108, %s115
      %p377 = scmp.eq.s32.totalorder %s376, 0
      %s379 = sadd.s32 %s378, 1
      %s380 = scalar_select %p377, %s378, %s379
      %p383 = pneg %p377
      %p384 = scmp.eq.s32.totalorder %s108, 1
      %p385 = por %p383, %p384
      %p386 = scmp.ne.s32.totalorder %s378, %s381
      %p387 = scmp.eq.s32.totalorder %s108, 0
      %p388 = por %p386, %p387
      %p389 = scmp.ne.s32.totalorder %s378, %s381
      %p390 = scmp.eq.s32.totalorder %s113, 1
      %p391 = por %p389, %p390
      %p392 = scmp.ne.s32.totalorder %s381, %s382
      %p393 = scmp.eq.s32.totalorder %s113, 0
      %p394 = por %p392, %p393
      %p395 = scmp.ne.s32.totalorder %s381, %s382
      %p396 = scmp.eq.s32.totalorder %s114, 1
      %p397 = por %p395, %p396
      %p399 = scmp.ne.s32.totalorder %s382, %s398
      %p400 = scmp.eq.s32.totalorder %s114, 0
      %p401 = por %p399, %p400
      %s402 = ssub.s32 %s108, %s115
      %p403 = scmp.eq.s32.totalorder %s402, 0
      %s405 = sadd.s32 %s404, 1
      %s406 = scalar_select %p403, %s404, %s405
      %p409 = pneg %p403
      %p410 = scmp.eq.s32.totalorder %s108, 1
      %p411 = por %p409, %p410
      %p412 = scmp.ne.s32.totalorder %s404, %s407
      %p413 = scmp.eq.s32.totalorder %s108, 0
      %p414 = por %p412, %p413
      %p415 = scmp.ne.s32.totalorder %s404, %s407
      %p416 = scmp.eq.s32.totalorder %s113, 1
      %p417 = por %p415, %p416
      %p418 = scmp.ne.s32.totalorder %s407, %s408
      %p419 = scmp.eq.s32.totalorder %s113, 0
      %p420 = por %p418, %p419
      %p421 = scmp.ne.s32.totalorder %s407, %s408
      %p422 = scmp.eq.s32.totalorder %s114, 1
      %p423 = por %p421, %p422
      %p425 = scmp.ne.s32.totalorder %s408, %s424
      %p426 = scmp.eq.s32.totalorder %s114, 0
      %p427 = por %p425, %p426
      %s428 = ssub.s32 %s108, %s115
      %p429 = scmp.eq.s32.totalorder %s428, 0
      %s431 = sadd.s32 %s430, 1
      %s432 = scalar_select %p429, %s430, %s431
      %p435 = pneg %p429
      %p436 = scmp.eq.s32.totalorder %s108, 1
      %p437 = por %p435, %p436
      %p438 = scmp.ne.s32.totalorder %s430, %s433
      %p439 = scmp.eq.s32.totalorder %s108, 0
      %p440 = por %p438, %p439
      %p441 = scmp.ne.s32.totalorder %s430, %s433
      %p442 = scmp.eq.s32.totalorder %s113, 1
      %p443 = por %p441, %p442
      %p444 = scmp.ne.s32.totalorder %s433, %s434
      %p445 = scmp.eq.s32.totalorder %s113, 0
      %p446 = por %p444, %p445
      %p447 = scmp.ne.s32.totalorder %s433, %s434
      %p448 = scmp.eq.s32.totalorder %s114, 1
      %p449 = por %p447, %p448
      %p451 = scmp.ne.s32.totalorder %s434, %s450
      %p452 = scmp.eq.s32.totalorder %s114, 0
      %p453 = por %p451, %p452
      %s454 = ssub.s32 %s108, %s115
      %p455 = scmp.eq.s32.totalorder %s454, 0
      %s457 = sadd.s32 %s456, 1
      %s458 = scalar_select %p455, %s456, %s457
      %p461 = pneg %p455
      %p462 = scmp.eq.s32.totalorder %s108, 1
      %p463 = por %p461, %p462
      %p464 = scmp.ne.s32.totalorder %s456, %s459
      %p465 = scmp.eq.s32.totalorder %s108, 0
      %p466 = por %p464, %p465
      %p467 = scmp.ne.s32.totalorder %s456, %s459
      %p468 = scmp.eq.s32.totalorder %s113, 1
      %p469 = por %p467, %p468
      %p470 = scmp.ne.s32.totalorder %s459, %s460
      %p471 = scmp.eq.s32.totalorder %s113, 0
      %p472 = por %p470, %p471
      %p473 = scmp.ne.s32.totalorder %s459, %s460
      %p474 = scmp.eq.s32.totalorder %s114, 1
      %p475 = por %p473, %p474
      %p477 = scmp.ne.s32.totalorder %s460, %s476
      %p478 = scmp.eq.s32.totalorder %s114, 0
      %p479 = por %p477, %p478
      %s480 = ssub.s32 %s108, %s115
      %p481 = scmp.eq.s32.totalorder %s480, 0
      %s483 = sadd.s32 %s482, 1
      %s484 = scalar_select %p481, %s482, %s483
      %p487 = pneg %p481
      %p488 = scmp.eq.s32.totalorder %s108, 1
      %p489 = por %p487, %p488
      %p490 = scmp.ne.s32.totalorder %s482, %s485
      %p491 = scmp.eq.s32.totalorder %s108, 0
      %p492 = por %p490, %p491
      %p493 = scmp.ne.s32.totalorder %s482, %s485
      %p494 = scmp.eq.s32.totalorder %s113, 1
      %p495 = por %p493, %p494
      %p496 = scmp.ne.s32.totalorder %s485, %s486
      %p497 = scmp.eq.s32.totalorder %s113, 0
      %p498 = por %p496, %p497
      %p499 = scmp.ne.s32.totalorder %s485, %s486
      %p500 = scmp.eq.s32.totalorder %s114, 1
      %p501 = por %p499, %p500
      %p503 = scmp.ne.s32.totalorder %s486, %s502
      %p504 = scmp.eq.s32.totalorder %s114, 0
      %p505 = por %p503, %p504
      %s506 = ssub.s32 %s108, %s115
      %p507 = scmp.eq.s32.totalorder %s506, 0
      %s509 = sadd.s32 %s508, 1
      %s510 = scalar_select %p507, %s508, %s509
      %p513 = pneg %p507
      %p514 = scmp.eq.s32.totalorder %s108, 1
      %p515 = por %p513, %p514
      %p516 = scmp.ne.s32.totalorder %s508, %s511
      %p517 = scmp.eq.s32.totalorder %s108, 0
      %p518 = por %p516, %p517
      %p519 = scmp.ne.s32.totalorder %s508, %s511
      %p520 = scmp.eq.s32.totalorder %s113, 1
      %p521 = por %p519, %p520
      %p522 = scmp.ne.s32.totalorder %s511, %s512
      %p523 = scmp.eq.s32.totalorder %s113, 0
      %p524 = por %p522, %p523
      %p525 = scmp.ne.s32.totalorder %s511, %s512
      %p526 = scmp.eq.s32.totalorder %s114, 1
      %p527 = por %p525, %p526
      %p529 = scmp.ne.s32.totalorder %s512, %s528
      %p530 = scmp.eq.s32.totalorder %s114, 0
      %p531 = por %p529, %p530
      %s532 = ssub.s32 %s108, %s115
      %p533 = scmp.eq.s32.totalorder %s532, 0
      %s535 = sadd.s32 %s534, 1
      %s536 = scalar_select %p533, %s534, %s535
      %p539 = pneg %p533
      %p540 = scmp.eq.s32.totalorder %s108, 1
      %p541 = por %p539, %p540
      %p542 = scmp.ne.s32.totalorder %s534, %s537
      %p543 = scmp.eq.s32.totalorder %s108, 0
      %p544 = por %p542, %p543
      %p545 = scmp.ne.s32.totalorder %s534, %s537
      %p546 = scmp.eq.s32.totalorder %s113, 1
      %p547 = por %p545, %p546
      %p548 = scmp.ne.s32.totalorder %s537, %s538
      %p549 = scmp.eq.s32.totalorder %s113, 0
      %p550 = por %p548, %p549
      %p551 = scmp.ne.s32.totalorder %s537, %s538
      %p552 = scmp.eq.s32.totalorder %s114, 1
      %p553 = por %p551, %p552
      %p555 = scmp.ne.s32.totalorder %s538, %s554
      %p556 = scmp.eq.s32.totalorder %s114, 0
      %p557 = por %p555, %p556
      %s558 = ssub.s32 %s108, %s115
      %p559 = scmp.eq.s32.totalorder %s558, 0
      %s561 = sadd.s32 %s560, 1
      %s562 = scalar_select %p559, %s560, %s561
      %p565 = pneg %p559
      %p566 = scmp.eq.s32.totalorder %s108, 1
      %p567 = por %p565, %p566
      %p568 = scmp.ne.s32.totalorder %s560, %s563
      %p569 = scmp.eq.s32.totalorder %s108, 0
      %p570 = por %p568, %p569
      %p571 = scmp.ne.s32.totalorder %s560, %s563
      %p572 = scmp.eq.s32.totalorder %s113, 1
      %p573 = por %p571, %p572
      %p574 = scmp.ne.s32.totalorder %s563, %s564
      %p575 = scmp.eq.s32.totalorder %s113, 0
      %p576 = por %p574, %p575
      %p577 = scmp.ne.s32.totalorder %s563, %s564
      %p578 = scmp.eq.s32.totalorder %s114, 1
      %p579 = por %p577, %p578
      %p581 = scmp.ne.s32.totalorder %s564, %s580
      %p582 = scmp.eq.s32.totalorder %s114, 0
      %p583 = por %p581, %p582
      %s584 = ssub.s32 %s108, %s115
      %p585 = scmp.eq.s32.totalorder %s584, 0
      %s587 = sadd.s32 %s586, 1
      %s588 = scalar_select %p585, %s586, %s587
      %p591 = pneg %p585
      %p592 = scmp.eq.s32.totalorder %s108, 1
      %p593 = por %p591, %p592
      %p594 = scmp.ne.s32.totalorder %s586, %s589
      %p595 = scmp.eq.s32.totalorder %s108, 0
      %p596 = por %p594, %p595
      %p597 = scmp.ne.s32.totalorder %s586, %s589
      %p598 = scmp.eq.s32.totalorder %s113, 1
      %p599 = por %p597, %p598
      %p600 = scmp.ne.s32.totalorder %s589, %s590
      %p601 = scmp.eq.s32.totalorder %s113, 0
      %p602 = por %p600, %p601
      %p603 = scmp.ne.s32.totalorder %s589, %s590
      %p604 = scmp.eq.s32.totalorder %s114, 1
      %p605 = por %p603, %p604
      %p607 = scmp.ne.s32.totalorder %s590, %s606
      %p608 = scmp.eq.s32.totalorder %s114, 0
      %p609 = por %p607, %p608
      %s610 = ssub.s32 %s108, %s115
      %p611 = scmp.eq.s32.totalorder %s610, 0
      %s613 = sadd.s32 %s612, 1
      %s614 = scalar_select %p611, %s612, %s613
      %p617 = pneg %p611
      %p618 = scmp.eq.s32.totalorder %s108, 1
      %p619 = por %p617, %p618
      %p620 = scmp.ne.s32.totalorder %s612, %s615
      %p621 = scmp.eq.s32.totalorder %s108, 0
      %p622 = por %p620, %p621
      %p623 = scmp.ne.s32.totalorder %s612, %s615
      %p624 = scmp.eq.s32.totalorder %s113, 1
      %p625 = por %p623, %p624
      %p626 = scmp.ne.s32.totalorder %s615, %s616
      %p627 = scmp.eq.s32.totalorder %s113, 0
      %p628 = por %p626, %p627
      %p629 = scmp.ne.s32.totalorder %s615, %s616
      %p630 = scmp.eq.s32.totalorder %s114, 1
      %p631 = por %p629, %p630
      %p633 = scmp.ne.s32.totalorder %s616, %s632
      %p634 = scmp.eq.s32.totalorder %s114, 0
      %p635 = por %p633, %p634
      %s636 = ssub.s32 %s108, %s115
      %p637 = scmp.eq.s32.totalorder %s636, 0
      %s639 = sadd.s32 %s638, 1
      %s640 = scalar_select %p637, %s638, %s639
      %p643 = pneg %p637
      %p644 = scmp.eq.s32.totalorder %s108, 1
      %p645 = por %p643, %p644
      %p646 = scmp.ne.s32.totalorder %s638, %s641
      %p647 = scmp.eq.s32.totalorder %s108, 0
      %p648 = por %p646, %p647
      %p649 = scmp.ne.s32.totalorder %s638, %s641
      %p650 = scmp.eq.s32.totalorder %s113, 1
      %p651 = por %p649, %p650
      %p652 = scmp.ne.s32.totalorder %s641, %s642
      %p653 = scmp.eq.s32.totalorder %s113, 0
      %p654 = por %p652, %p653
      %p655 = scmp.ne.s32.totalorder %s641, %s642
      %p656 = scmp.eq.s32.totalorder %s114, 1
      %p657 = por %p655, %p656
      %p659 = scmp.ne.s32.totalorder %s642, %s658
      %p660 = scmp.eq.s32.totalorder %s114, 0
      %p661 = por %p659, %p660
      %s662 = ssub.s32 %s108, %s115
      %p663 = scmp.eq.s32.totalorder %s662, 0
      %s665 = sadd.s32 %s664, 1
      %s666 = scalar_select %p663, %s664, %s665
      %p669 = pneg %p663
      %p670 = scmp.eq.s32.totalorder %s108, 1
      %p671 = por %p669, %p670
      %p672 = scmp.ne.s32.totalorder %s664, %s667
      %p673 = scmp.eq.s32.totalorder %s108, 0
      %p674 = por %p672, %p673
      %p675 = scmp.ne.s32.totalorder %s664, %s667
      %p676 = scmp.eq.s32.totalorder %s113, 1
      %p677 = por %p675, %p676
      %p678 = scmp.ne.s32.totalorder %s667, %s668
      %p679 = scmp.eq.s32.totalorder %s113, 0
      %p680 = por %p678, %p679
      %p681 = scmp.ne.s32.totalorder %s667, %s668
      %p682 = scmp.eq.s32.totalorder %s114, 1
      %p683 = por %p681, %p682
      %p685 = scmp.ne.s32.totalorder %s668, %s684
      %p686 = scmp.eq.s32.totalorder %s114, 0
      %p687 = por %p685, %p686
      %s688 = ssub.s32 %s108, %s115
      %p689 = scmp.eq.s32.totalorder %s688, 0
      %s691 = sadd.s32 %s690, 1
      %s692 = scalar_select %p689, %s690, %s691
      %p695 = pneg %p689
      %p696 = scmp.eq.s32.totalorder %s108, 1
      %p697 = por %p695, %p696
      %p698 = scmp.ne.s32.totalorder %s690, %s693
      %p699 = scmp.eq.s32.totalorder %s108, 0
      %p700 = por %p698, %p699
      %p701 = scmp.ne.s32.totalorder %s690, %s693
      %p702 = scmp.eq.s32.totalorder %s113, 1
      %p703 = por %p701, %p702
      %p704 = scmp.ne.s32.totalorder %s693, %s694
      %p705 = scmp.eq.s32.totalorder %s113, 0
      %p706 = por %p704, %p705
      %p707 = scmp.ne.s32.totalorder %s693, %s694
      %p708 = scmp.eq.s32.totalorder %s114, 1
      %p709 = por %p707, %p708
      %p711 = scmp.ne.s32.totalorder %s694, %s710
      %p712 = scmp.eq.s32.totalorder %s114, 0
      %p713 = por %p711, %p712
      %s714 = ssub.s32 %s108, %s115
      %p715 = scmp.eq.s32.totalorder %s714, 0
      %s717 = sadd.s32 %s716, 1
      %s718 = scalar_select %p715, %s716, %s717
      %p721 = pneg %p715
      %p722 = scmp.eq.s32.totalorder %s108, 1
      %p723 = por %p721, %p722
      %p724 = scmp.ne.s32.totalorder %s716, %s719
      %p725 = scmp.eq.s32.totalorder %s108, 0
      %p726 = por %p724, %p725
      %p727 = scmp.ne.s32.totalorder %s716, %s719
      %p728 = scmp.eq.s32.totalorder %s113, 1
      %p729 = por %p727, %p728
      %p730 = scmp.ne.s32.totalorder %s719, %s720
      %p731 = scmp.eq.s32.totalorder %s113, 0
      %p732 = por %p730, %p731
      %p733 = scmp.ne.s32.totalorder %s719, %s720
      %p734 = scmp.eq.s32.totalorder %s114, 1
      %p735 = por %p733, %p734
      %p737 = scmp.ne.s32.totalorder %s720, %s736
      %p738 = scmp.eq.s32.totalorder %s114, 0
      %p739 = por %p737, %p738
      %s740 = ssub.s32 %s108, %s115
      %p741 = scmp.eq.s32.totalorder %s740, 0
      %s743 = sadd.s32 %s742, 1
      %s744 = scalar_select %p741, %s742, %s743
      %p747 = pneg %p741
      %p748 = scmp.eq.s32.totalorder %s108, 1
      %p749 = por %p747, %p748
      %p750 = scmp.ne.s32.totalorder %s742, %s745
      %p751 = scmp.eq.s32.totalorder %s108, 0
      %p752 = por %p750, %p751
      %p753 = scmp.ne.s32.totalorder %s742, %s745
      %p754 = scmp.eq.s32.totalorder %s113, 1
      %p755 = por %p753, %p754
      %p756 = scmp.ne.s32.totalorder %s745, %s746
      %p757 = scmp.eq.s32.totalorder %s113, 0
      %p758 = por %p756, %p757
      %p759 = scmp.ne.s32.totalorder %s745, %s746
      %p760 = scmp.eq.s32.totalorder %s114, 1
      %p761 = por %p759, %p760
      %p763 = scmp.ne.s32.totalorder %s746, %s762
      %p764 = scmp.eq.s32.totalorder %s114, 0
      %p765 = por %p763, %p764
      %s766 = ssub.s32 %s108, %s115
      %p767 = scmp.eq.s32.totalorder %s766, 0
      %s769 = sadd.s32 %s768, 1
      %s770 = scalar_select %p767, %s768, %s769
      %p773 = pneg %p767
      %p774 = scmp.eq.s32.totalorder %s108, 1
      %p775 = por %p773, %p774
      %p776 = scmp.ne.s32.totalorder %s768, %s771
      %p777 = scmp.eq.s32.totalorder %s108, 0
      %p778 = por %p776, %p777
      %p779 = scmp.ne.s32.totalorder %s768, %s771
      %p780 = scmp.eq.s32.totalorder %s113, 1
      %p781 = por %p779, %p780
      %p782 = scmp.ne.s32.totalorder %s771, %s772
      %p783 = scmp.eq.s32.totalorder %s113, 0
      %p784 = por %p782, %p783
      %p785 = scmp.ne.s32.totalorder %s771, %s772
      %p786 = scmp.eq.s32.totalorder %s114, 1
      %p787 = por %p785, %p786
      %p789 = scmp.ne.s32.totalorder %s772, %s788
      %p790 = scmp.eq.s32.totalorder %s114, 0
      %p791 = por %p789, %p790
      %s792 = ssub.s32 %s108, %s115
      %p793 = scmp.eq.s32.totalorder %s792, 0
      %s795 = sadd.s32 %s794, 1
      %s796 = scalar_select %p793, %s794, %s795
      %p799 = pneg %p793
      %p800 = scmp.eq.s32.totalorder %s108, 1
      %p801 = por %p799, %p800
      %p802 = scmp.ne.s32.totalorder %s794, %s797
      %p803 = scmp.eq.s32.totalorder %s108, 0
      %p804 = por %p802, %p803
      %p805 = scmp.ne.s32.totalorder %s794, %s797
      %p806 = scmp.eq.s32.totalorder %s113, 1
      %p807 = por %p805, %p806
      %p808 = scmp.ne.s32.totalorder %s797, %s798
      %p809 = scmp.eq.s32.totalorder %s113, 0
      %p810 = por %p808, %p809
      %p811 = scmp.ne.s32.totalorder %s797, %s798
      %p812 = scmp.eq.s32.totalorder %s114, 1
      %p813 = por %p811, %p812
      %p815 = scmp.ne.s32.totalorder %s798, %s814
      %p816 = scmp.eq.s32.totalorder %s114, 0
      %p817 = por %p815, %p816
      %s818 = ssub.s32 %s108, %s115
      %p819 = scmp.eq.s32.totalorder %s818, 0
      %s821 = sadd.s32 %s820, 1
      %s822 = scalar_select %p819, %s820, %s821
      %p825 = pneg %p819
      %p826 = scmp.eq.s32.totalorder %s108, 1
      %p827 = por %p825, %p826
      %p828 = scmp.ne.s32.totalorder %s820, %s823
      %p829 = scmp.eq.s32.totalorder %s108, 0
      %p830 = por %p828, %p829
      %p831 = scmp.ne.s32.totalorder %s820, %s823
      %p832 = scmp.eq.s32.totalorder %s113, 1
      %p833 = por %p831, %p832
      %p834 = scmp.ne.s32.totalorder %s823, %s824
      %p835 = scmp.eq.s32.totalorder %s113, 0
      %p836 = por %p834, %p835
      %p837 = scmp.ne.s32.totalorder %s823, %s824
      %p838 = scmp.eq.s32.totalorder %s114, 1
      %p839 = por %p837, %p838
      %p841 = scmp.ne.s32.totalorder %s824, %s840
      %p842 = scmp.eq.s32.totalorder %s114, 0
      %p843 = por %p841, %p842
      %s844 = ssub.s32 %s108, %s115
      %p845 = scmp.eq.s32.totalorder %s844, 0
      %s847 = sadd.s32 %s846, 1
      %s848 = scalar_select %p845, %s846, %s847
      %p851 = pneg %p845
      %p852 = scmp.eq.s32.totalorder %s108, 1
      %p853 = por %p851, %p852
      %p854 = scmp.ne.s32.totalorder %s846, %s849
      %p855 = scmp.eq.s32.totalorder %s108, 0
      %p856 = por %p854, %p855
      %p857 = scmp.ne.s32.totalorder %s846, %s849
      %p858 = scmp.eq.s32.totalorder %s113, 1
      %p859 = por %p857, %p858
      %p860 = scmp.ne.s32.totalorder %s849, %s850
      %p861 = scmp.eq.s32.totalorder %s113, 0
      %p862 = por %p860, %p861
      %p863 = scmp.ne.s32.totalorder %s849, %s850
      %p864 = scmp.eq.s32.totalorder %s114, 1
      %p865 = por %p863, %p864
      %p867 = scmp.ne.s32.totalorder %s850, %s866
      %p868 = scmp.eq.s32.totalorder %s114, 0
      %p869 = por %p867, %p868
      %s870 = ssub.s32 %s108, %s115
      %p871 = scmp.eq.s32.totalorder %s870, 0
      %s873 = sadd.s32 %s872, 1
      %s874 = scalar_select %p871, %s872, %s873
      %p877 = pneg %p871
      %p878 = scmp.eq.s32.totalorder %s108, 1
      %p879 = por %p877, %p878
      %p880 = scmp.ne.s32.totalorder %s872, %s875
      %p881 = scmp.eq.s32.totalorder %s108, 0
      %p882 = por %p880, %p881
      %p883 = scmp.ne.s32.totalorder %s872, %s875
      %p884 = scmp.eq.s32.totalorder %s113, 1
      %p885 = por %p883, %p884
      %p886 = scmp.ne.s32.totalorder %s875, %s876
      %p887 = scmp.eq.s32.totalorder %s113, 0
      %p888 = por %p886, %p887
      %p889 = scmp.ne.s32.totalorder %s875, %s876
      %p890 = scmp.eq.s32.totalorder %s114, 1
      %p891 = por %p889, %p890
      %p893 = scmp.ne.s32.totalorder %s876, %s892
      %p894 = scmp.eq.s32.totalorder %s114, 0
      %p895 = por %p893, %p894
      %p896 = scmp.le.s32.totalorder 1, %s108
      %p897 = scmp.lt.s32.totalorder %s108, 3
      %p898 = pnand %p896, %p897
      %p899 = pneg %p898
      // Predicated region
      $region9: #{fwd.1} parent=5 // pred_check
        _
      $region10: #{fwd.1} parent=5 // pred_check_branch
        %901 = sbr.rel (%p898) target = $region12
      $region11: #{fwd.1} parent=5 // pred_region
        %s902 = ssub.s32 %s108, 1
      $region12: #{fwd.1} parent=5 // pred_fallthru
        _
      %p903 = scmp.lt.s32.totalorder %s108, 2
      // Predicated region
      $region13: #{fwd.1} parent=5 // pred_check
        %p904 = pneg %p903
      $region14: #{fwd.1} parent=5 // pred_check_branch
        %906 = sbr.rel (%p904) target = $region16
      $region15: #{fwd.1} parent=5 // pred_region
        // Predicated region
        $region17: #{fwd.1} parent=15 // pred_check
          %p907 = pneg %p128
        $region18: #{fwd.1} parent=15 // pred_check_branch
          %909 = sbr.rel (%p907) target = $region20
        $region19: #{fwd.1} parent=15 // pred_region
          %s910 = sand.u32 %s118, 1
          %s911 = scalar_lea.sflag [#allocation3], %s910
          %s912 = sand.u32 %s118, 1
          %s913 = smul.addr %s912, 18
          %s914 = scalar_lea.vmem [#allocation2], %s913
          %916 = vsyncadd %s911, 0
          %s917 = smul.addr %s108, 9
          %s918 = smul.addr %s917, 2
          %s919 = scalar_lea.hbm %s1, %s918
          %s921 = sshll.u32 %s919, 4
          %s922 = int_to_ptr.hbm [resolvable:$true] %s921
          %s923 = sshll.u32 %s914, 4
          %s924 = int_to_ptr.vmem [resolvable:$true] %s923
          %926 = dma.hbm_to_vmem [thread:$0]  %s922, 288, %s924, %s911
        $region20: #{fwd.1} parent=15 // pred_fallthru
          _
        // Predicated region
        $region21: #{fwd.1} parent=15 // pred_check
          %p927 = pneg %p154
        $region22: #{fwd.1} parent=15 // pred_check_branch
          %929 = sbr.rel (%p927) target = $region24
        $region23: #{fwd.1} parent=15 // pred_region
          %p930 = scmp.lt.s32.totalorder %s108, 1
          %s931 = scalar_select %p930, %s108, 1
          %s932 = smul.addr %s931, 2
          %s933 = scalar_lea.vmem %s3, %s932
        $region24: #{fwd.1} parent=15 // pred_fallthru
          _
        // Predicated region
        $region25: #{fwd.1} parent=15 // pred_check
          %p934 = pneg %p180
        $region26: #{fwd.1} parent=15 // pred_check_branch
          %936 = sbr.rel (%p934) target = $region28
        $region27: #{fwd.1} parent=15 // pred_region
          %p937 = scmp.lt.s32.totalorder %s108, 1
          %s938 = scalar_select %p937, %s108, 1
          %s939 = smul.addr %s938, 2
          %s940 = scalar_lea.vmem %s5, %s939
        $region28: #{fwd.1} parent=15 // pred_fallthru
          _
        // Predicated region
        $region29: #{fwd.1} parent=15 // pred_check
          %p941 = pneg %p206
        $region30: #{fwd.1} parent=15 // pred_check_branch
          %943 = sbr.rel (%p941) target = $region32
        $region31: #{fwd.1} parent=15 // pred_region
          %s944 = sand.u32 %s108, 1
          %s945 = scalar_lea.sflag [#allocation6], %s944
          %s946 = sand.u32 %s196, 1
          %s947 = smul.addr %s946, 2064
          %s948 = scalar_lea.vmem [#allocation5], %s947
          %950 = vsyncadd %s945, 0
          %s951 = smul.addr %s108, 516
          %s952 = smul.addr %s951, 4
          %s953 = scalar_lea.hbm %s7, %s952
          %s954 = sshll.u32 %s953, 4
          %s955 = int_to_ptr.hbm [resolvable:$true] %s954
          %s956 = sshll.u32 %s948, 4
          %s957 = int_to_ptr.vmem [resolvable:$true] %s956
          %962 = dma.hbm_to_vmem [thread:$0]  %s955, 33024, %s957, %s945, 256, 256, 16
        $region32: #{fwd.1} parent=15 // pred_fallthru
          _
        // Predicated region
        $region33: #{fwd.1} parent=15 // pred_check
          %p963 = pneg %p232
        $region34: #{fwd.1} parent=15 // pred_check_branch
          %965 = sbr.rel (%p963) target = $region36
        $region35: #{fwd.1} parent=15 // pred_region
          %s966 = sand.u32 %s108, 1
          %s967 = scalar_lea.sflag [#allocation6], %s966
          %s968 = sand.u32 %s222, 1
          %s969 = smul.addr %s968, 4
          %s970 = scalar_lea.vmem [#allocation7], %s969
          %972 = vsyncadd %s967, 0
          %s973 = smul.addr %s108, 4
          %s974 = scalar_lea.hbm %s9, %s973
          %s976 = sshll.u32 %s974, 4
          %s977 = int_to_ptr.hbm [resolvable:$true] %s976
          %s978 = sshll.u32 %s970, 4
          %s979 = int_to_ptr.vmem [resolvable:$true] %s978
          %981 = dma.hbm_to_vmem [thread:$0]  %s977, 64, %s979, %s967
        $region36: #{fwd.1} parent=15 // pred_fallthru
          _
        // Predicated region
        $region37: #{fwd.1} parent=15 // pred_check
          %p982 = pneg %p258
        $region38: #{fwd.1} parent=15 // pred_check_branch
          %984 = sbr.rel (%p982) target = $region40
        $region39: #{fwd.1} parent=15 // pred_region
          %s985 = sand.u32 %s108, 1
          %s986 = scalar_lea.sflag [#allocation9], %s985
          %s987 = sand.u32 %s248, 1
          %s988 = smul.addr %s987, 256
          %s989 = scalar_lea.vmem [#allocation8], %s988
          %991 = vsyncadd %s986, 0
          %s992 = smul.addr %s108, 64
          %s993 = smul.addr %s992, 4
          %s994 = scalar_lea.hbm %s11, %s993
          %s995 = sshll.u32 %s994, 4
          %s996 = int_to_ptr.hbm [resolvable:$true] %s995
          %s997 = sshll.u32 %s989, 4
          %s998 = int_to_ptr.vmem [resolvable:$true] %s997
          %1003 = dma.hbm_to_vmem [thread:$0]  %s996, 4096, %s998, %s986, 64, 64, 4
        $region40: #{fwd.1} parent=15 // pred_fallthru
          _
        // Predicated region
        $region41: #{fwd.1} parent=15 // pred_check
          %p1004 = pneg %p284
        $region42: #{fwd.1} parent=15 // pred_check_branch
          %1006 = sbr.rel (%p1004) target = $region44
        $region43: #{fwd.1} parent=15 // pred_region
          %s1007 = sand.u32 %s108, 1
          %s1008 = scalar_lea.sflag [#allocation9], %s1007
          %s1009 = sand.u32 %s274, 1
          %s1010 = scalar_lea.vmem [#allocation10], %s1009
          %1012 = vsyncadd %s1008, 0
          %s1013 = scalar_lea.hbm %s13, %s108
          %s1015 = sshll.u32 %s1013, 4
          %s1016 = int_to_ptr.hbm [resolvable:$true] %s1015
          %s1017 = sshll.u32 %s1010, 4
          %s1018 = int_to_ptr.vmem [resolvable:$true] %s1017
          %1020 = dma.hbm_to_vmem [thread:$0]  %s1016, 16, %s1018, %s1008
        $region44: #{fwd.1} parent=15 // pred_fallthru
          _
        // Predicated region
        $region45: #{fwd.1} parent=15 // pred_check
          %p1021 = pneg %p310
        $region46: #{fwd.1} parent=15 // pred_check_branch
          %1023 = sbr.rel (%p1021) target = $region48
        $region47: #{fwd.1} parent=15 // pred_region
          %s1024 = sand.u32 %s108, 1
          %s1025 = scalar_lea.sflag [#allocation12], %s1024
          %s1026 = sand.u32 %s300, 1
          %s1027 = smul.addr %s1026, 64
          %s1028 = scalar_lea.vmem [#allocation11], %s1027
          %1030 = vsyncadd %s1025, 0
          %s1031 = smul.addr %s108, 16
          %s1032 = smul.addr %s1031, 4
          %s1033 = scalar_lea.hbm %s15, %s1032
          %s1034 = sshll.u32 %s1033, 4
          %s1035 = int_to_ptr.hbm [resolvable:$true] %s1034
          %s1036 = sshll.u32 %s1028, 4
          %s1037 = int_to_ptr.vmem [resolvable:$true] %s1036
          %1042 = dma.hbm_to_vmem [thread:$0]  %s1035, 1024, %s1037, %s1025, 64, 64, 4
        $region48: #{fwd.1} parent=15 // pred_fallthru
          _
        // Predicated region
        $region49: #{fwd.1} parent=15 // pred_check
          %p1043 = pneg %p336
        $region50: #{fwd.1} parent=15 // pred_check_branch
          %1045 = sbr.rel (%p1043) target = $region52
        $region51: #{fwd.1} parent=15 // pred_region
          %s1046 = sand.u32 %s108, 1
          %s1047 = scalar_lea.sflag [#allocation12], %s1046
          %s1048 = sand.u32 %s326, 1
          %s1049 = scalar_lea.vmem [#allocation13], %s1048
          %1051 = vsyncadd %s1047, 0
          %s1052 = scalar_lea.hbm %s17, %s108
          %s1054 = sshll.u32 %s1052, 4
          %s1055 = int_to_ptr.hbm [resolvable:$true] %s1054
          %s1056 = sshll.u32 %s1049, 4
          %s1057 = int_to_ptr.vmem [resolvable:$true] %s1056
          %1059 = dma.hbm_to_vmem [thread:$0]  %s1055, 16, %s1057, %s1047
        $region52: #{fwd.1} parent=15 // pred_fallthru
          _
        // Predicated region
        $region53: #{fwd.1} parent=15 // pred_check
          %p1060 = pneg %p362
        $region54: #{fwd.1} parent=15 // pred_check_branch
          %1062 = sbr.rel (%p1060) target = $region56
        $region55: #{fwd.1} parent=15 // pred_region
          %s1063 = sand.u32 %s108, 1
          %s1064 = scalar_lea.sflag [#allocation15], %s1063
          %s1065 = sand.u32 %s352, 1
          %s1066 = smul.addr %s1065, 64
          %s1067 = scalar_lea.vmem [#allocation14], %s1066
          %1069 = vsyncadd %s1064, 0
          %s1070 = smul.addr %s108, 16
          %s1071 = smul.addr %s1070, 4
          %s1072 = scalar_lea.hbm %s19, %s1071
          %s1073 = sshll.u32 %s1072, 4
          %s1074 = int_to_ptr.hbm [resolvable:$true] %s1073
          %s1075 = sshll.u32 %s1067, 4
          %s1076 = int_to_ptr.vmem [resolvable:$true] %s1075
          %1081 = dma.hbm_to_vmem [thread:$0]  %s1074, 1024, %s1076, %s1064, 64, 64, 4
        $region56: #{fwd.1} parent=15 // pred_fallthru
          _
        // Predicated region
        $region57: #{fwd.1} parent=15 // pred_check
          %p1082 = pneg %p388
        $region58: #{fwd.1} parent=15 // pred_check_branch
          %1084 = sbr.rel (%p1082) target = $region60
        $region59: #{fwd.1} parent=15 // pred_region
          %s1085 = sand.u32 %s108, 1
          %s1086 = scalar_lea.sflag [#allocation15], %s1085
          %s1087 = sand.u32 %s378, 1
          %s1088 = scalar_lea.vmem [#allocation16], %s1087
          %1090 = vsyncadd %s1086, 0
          %s1091 = scalar_lea.hbm %s21, %s108
          %s1093 = sshll.u32 %s1091, 4
          %s1094 = int_to_ptr.hbm [resolvable:$true] %s1093
          %s1095 = sshll.u32 %s1088, 4
          %s1096 = int_to_ptr.vmem [resolvable:$true] %s1095
          %1098 = dma.hbm_to_vmem [thread:$0]  %s1094, 16, %s1096, %s1086
        $region60: #{fwd.1} parent=15 // pred_fallthru
          _
        // Predicated region
        $region61: #{fwd.1} parent=15 // pred_check
          %p1099 = pneg %p414
        $region62: #{fwd.1} parent=15 // pred_check_branch
          %1101 = sbr.rel (%p1099) target = $region64
        $region63: #{fwd.1} parent=15 // pred_region
          %s1102 = sand.u32 %s108, 1
          %s1103 = scalar_lea.sflag [#allocation18], %s1102
          %s1104 = sand.u32 %s404, 1
          %s1105 = smul.addr %s1104, 64
          %s1106 = scalar_lea.vmem [#allocation17], %s1105
          %1108 = vsyncadd %s1103, 0
          %s1109 = smul.addr %s108, 16
          %s1110 = smul.addr %s1109, 4
          %s1111 = scalar_lea.hbm %s23, %s1110
          %s1112 = sshll.u32 %s1111, 4
          %s1113 = int_to_ptr.hbm [resolvable:$true] %s1112
          %s1114 = sshll.u32 %s1106, 4
          %s1115 = int_to_ptr.vmem [resolvable:$true] %s1114
          %1120 = dma.hbm_to_vmem [thread:$0]  %s1113, 1024, %s1115, %s1103, 64, 64, 4
        $region64: #{fwd.1} parent=15 // pred_fallthru
          _
        // Predicated region
        $region65: #{fwd.1} parent=15 // pred_check
          %p1121 = pneg %p440
        $region66: #{fwd.1} parent=15 // pred_check_branch
          %1123 = sbr.rel (%p1121) target = $region68
        $region67: #{fwd.1} parent=15 // pred_region
          %s1124 = sand.u32 %s108, 1
          %s1125 = scalar_lea.sflag [#allocation18], %s1124
          %s1126 = sand.u32 %s430, 1
          %s1127 = scalar_lea.vmem [#allocation19], %s1126
          %1129 = vsyncadd %s1125, 0
          %s1130 = scalar_lea.hbm %s25, %s108
          %s1132 = sshll.u32 %s1130, 4
          %s1133 = int_to_ptr.hbm [resolvable:$true] %s1132
          %s1134 = sshll.u32 %s1127, 4
          %s1135 = int_to_ptr.vmem [resolvable:$true] %s1134
          %1137 = dma.hbm_to_vmem [thread:$0]  %s1133, 16, %s1135, %s1125
        $region68: #{fwd.1} parent=15 // pred_fallthru
          _
        // Predicated region
        $region69: #{fwd.1} parent=15 // pred_check
          %p1138 = pneg %p466
        $region70: #{fwd.1} parent=15 // pred_check_branch
          %1140 = sbr.rel (%p1138) target = $region72
        $region71: #{fwd.1} parent=15 // pred_region
          %p1141 = scmp.lt.s32.totalorder %s108, 1
          %s1142 = scalar_select %p1141, %s108, 1
          %s1143 = smul.addr %s1142, 16
          %s1144 = smul.addr %s1143, 4
          %s1145 = scalar_lea.vmem %s27, %s1144
        $region72: #{fwd.1} parent=15 // pred_fallthru
          _
        // Predicated region
        $region73: #{fwd.1} parent=15 // pred_check
          %p1146 = pneg %p492
        $region74: #{fwd.1} parent=15 // pred_check_branch
          %1148 = sbr.rel (%p1146) target = $region76
        $region75: #{fwd.1} parent=15 // pred_region
          %s1149 = sand.u32 %s108, 1
          %s1150 = scalar_lea.sflag [#allocation21], %s1149
          %s1151 = sand.u32 %s482, 1
          %s1152 = scalar_lea.vmem [#allocation20], %s1151
          %1154 = vsyncadd %s1150, 0
          %s1155 = scalar_lea.hbm %s29, %s108
          %s1157 = sshll.u32 %s1155, 4
          %s1158 = int_to_ptr.hbm [resolvable:$true] %s1157
          %s1159 = sshll.u32 %s1152, 4
          %s1160 = int_to_ptr.vmem [resolvable:$true] %s1159
          %1162 = dma.hbm_to_vmem [thread:$0]  %s1158, 16, %s1160, %s1150
        $region76: #{fwd.1} parent=15 // pred_fallthru
          _
        // Predicated region
        $region77: #{fwd.1} parent=15 // pred_check
          %p1163 = pneg %p518
        $region78: #{fwd.1} parent=15 // pred_check_branch
          %1165 = sbr.rel (%p1163) target = $region80
        $region79: #{fwd.1} parent=15 // pred_region
          %s1166 = sand.u32 %s108, 1
          %s1167 = scalar_lea.sflag [#allocation21], %s1166
          %s1168 = sand.u32 %s508, 1
          %s1169 = scalar_lea.vmem [#allocation22], %s1168
          %1171 = vsyncadd %s1167, 0
          %s1172 = scalar_lea.hbm %s31, %s108
          %s1174 = sshll.u32 %s1172, 4
          %s1175 = int_to_ptr.hbm [resolvable:$true] %s1174
          %s1176 = sshll.u32 %s1169, 4
          %s1177 = int_to_ptr.vmem [resolvable:$true] %s1176
          %1179 = dma.hbm_to_vmem [thread:$0]  %s1175, 16, %s1177, %s1167
        $region80: #{fwd.1} parent=15 // pred_fallthru
          _
        // Predicated region
        $region81: #{fwd.1} parent=15 // pred_check
          %p1180 = pneg %p544
        $region82: #{fwd.1} parent=15 // pred_check_branch
          %1182 = sbr.rel (%p1180) target = $region84
        $region83: #{fwd.1} parent=15 // pred_region
          %s1183 = sand.u32 %s108, 1
          %s1184 = scalar_lea.sflag [#allocation24], %s1183
          %s1185 = sand.u32 %s534, 1
          %s1186 = scalar_lea.vmem [#allocation23], %s1185
          %1188 = vsyncadd %s1184, 0
          %s1189 = scalar_lea.hbm %s33, %s108
          %s1191 = sshll.u32 %s1189, 4
          %s1192 = int_to_ptr.hbm [resolvable:$true] %s1191
          %s1193 = sshll.u32 %s1186, 4
          %s1194 = int_to_ptr.vmem [resolvable:$true] %s1193
          %1196 = dma.hbm_to_vmem [thread:$0]  %s1192, 16, %s1194, %s1184
        $region84: #{fwd.1} parent=15 // pred_fallthru
          _
        // Predicated region
        $region85: #{fwd.1} parent=15 // pred_check
          %p1197 = pneg %p570
        $region86: #{fwd.1} parent=15 // pred_check_branch
          %1199 = sbr.rel (%p1197) target = $region88
        $region87: #{fwd.1} parent=15 // pred_region
          %s1200 = sand.u32 %s108, 1
          %s1201 = scalar_lea.sflag [#allocation24], %s1200
          %s1202 = sand.u32 %s560, 1
          %s1203 = smul.addr %s1202, 32
          %s1204 = scalar_lea.vmem [#allocation25], %s1203
          %1206 = vsyncadd %s1201, 0
          %s1207 = smul.addr %s108, 4
          %s1208 = smul.addr %s1207, 8
          %s1209 = scalar_lea.hbm %s35, %s1208
          %s1210 = sshll.u32 %s1209, 4
          %s1211 = int_to_ptr.hbm [resolvable:$true] %s1210
          %s1212 = sshll.u32 %s1204, 4
          %s1213 = int_to_ptr.vmem [resolvable:$true] %s1212
          %1218 = dma.hbm_to_vmem [thread:$0]  %s1211, 512, %s1213, %s1201, 128, 128, 8
        $region88: #{fwd.1} parent=15 // pred_fallthru
          _
        // Predicated region
        $region89: #{fwd.1} parent=15 // pred_check
          %p1219 = pneg %p596
        $region90: #{fwd.1} parent=15 // pred_check_branch
          %1221 = sbr.rel (%p1219) target = $region92
        $region91: #{fwd.1} parent=15 // pred_region
          %p1222 = scmp.lt.s32.totalorder %s108, 1
          %s1223 = scalar_select %p1222, %s108, 1
          %s1224 = smul.addr %s1223, 16
          %s1225 = smul.addr %s1224, 8
          %s1226 = scalar_lea.vmem %s37, %s1225
        $region92: #{fwd.1} parent=15 // pred_fallthru
          _
        // Predicated region
        $region93: #{fwd.1} parent=15 // pred_check
          %p1227 = pneg %p622
        $region94: #{fwd.1} parent=15 // pred_check_branch
          %1229 = sbr.rel (%p1227) target = $region96
        $region95: #{fwd.1} parent=15 // pred_region
          %p1230 = scmp.lt.s32.totalorder %s108, 1
          %s1231 = scalar_select %p1230, %s108, 1
          %s1232 = smul.addr %s1231, 16
          %s1233 = smul.addr %s1232, 8
          %s1234 = scalar_lea.vmem %s39, %s1233
        $region96: #{fwd.1} parent=15 // pred_fallthru
          _
        // Predicated region
        $region97: #{fwd.1} parent=15 // pred_check
          %p1235 = pneg %p648
        $region98: #{fwd.1} parent=15 // pred_check_branch
          %1237 = sbr.rel (%p1235) target = $region100
        $region99: #{fwd.1} parent=15 // pred_region
          %s1238 = sand.u32 %s108, 1
          %s1239 = scalar_lea.sflag [#allocation27], %s1238
          %s1240 = sand.u32 %s638, 1
          %s1241 = smul.addr %s1240, 4
          %s1242 = scalar_lea.vmem [#allocation26], %s1241
          %1244 = vsyncadd %s1239, 0
          %s1245 = smul.addr %s108, 4
          %s1246 = scalar_lea.hbm %s41, %s1245
          %s1248 = sshll.u32 %s1246, 4
          %s1249 = int_to_ptr.hbm [resolvable:$true] %s1248
          %s1250 = sshll.u32 %s1242, 4
          %s1251 = int_to_ptr.vmem [resolvable:$true] %s1250
          %1253 = dma.hbm_to_vmem [thread:$0]  %s1249, 64, %s1251, %s1239
        $region100: #{fwd.1} parent=15 // pred_fallthru
          _
        // Predicated region
        $region101: #{fwd.1} parent=15 // pred_check
          %p1254 = pneg %p674
        $region102: #{fwd.1} parent=15 // pred_check_branch
          %1256 = sbr.rel (%p1254) target = $region104
        $region103: #{fwd.1} parent=15 // pred_region
          %s1257 = sand.u32 %s108, 1
          %s1258 = scalar_lea.sflag [#allocation27], %s1257
          %s1259 = sand.u32 %s664, 1
          %s1260 = smul.addr %s1259, 16
          %s1261 = scalar_lea.vmem [#allocation28], %s1260
          %1263 = vsyncadd %s1258, 0
          %s1264 = smul.addr %s108, 4
          %s1265 = smul.addr %s1264, 4
          %s1266 = scalar_lea.hbm %s43, %s1265
          %s1267 = sshll.u32 %s1266, 4
          %s1268 = int_to_ptr.hbm [resolvable:$true] %s1267
          %s1269 = sshll.u32 %s1261, 4
          %s1270 = int_to_ptr.vmem [resolvable:$true] %s1269
          %1275 = dma.hbm_to_vmem [thread:$0]  %s1268, 256, %s1270, %s1258, 64, 64, 4
        $region104: #{fwd.1} parent=15 // pred_fallthru
          _
        // Predicated region
        $region105: #{fwd.1} parent=15 // pred_check
          %p1276 = pneg %p700
        $region106: #{fwd.1} parent=15 // pred_check_branch
          %1278 = sbr.rel (%p1276) target = $region108
        $region107: #{fwd.1} parent=15 // pred_region
          %s1279 = sand.u32 %s108, 1
          %s1280 = scalar_lea.sflag [#allocation30], %s1279
          %s1281 = sand.u32 %s690, 1
          %s1282 = scalar_lea.vmem [#allocation29], %s1281
          %1284 = vsyncadd %s1280, 0
          %s1285 = scalar_lea.hbm %s45, %s108
          %s1287 = sshll.u32 %s1285, 4
          %s1288 = int_to_ptr.hbm [resolvable:$true] %s1287
          %s1289 = sshll.u32 %s1282, 4
          %s1290 = int_to_ptr.vmem [resolvable:$true] %s1289
          %1292 = dma.hbm_to_vmem [thread:$0]  %s1288, 16, %s1290, %s1280
        $region108: #{fwd.1} parent=15 // pred_fallthru
          _
        // Predicated region
        $region109: #{fwd.1} parent=15 // pred_check
          %p1293 = pneg %p726
        $region110: #{fwd.1} parent=15 // pred_check_branch
          %1295 = sbr.rel (%p1293) target = $region112
        $region111: #{fwd.1} parent=15 // pred_region
          %s1296 = sand.u32 %s108, 1
          %s1297 = scalar_lea.sflag [#allocation30], %s1296
          %s1298 = sand.u32 %s716, 1
          %s1299 = smul.addr %s1298, 16
          %s1300 = scalar_lea.vmem [#allocation31], %s1299
          %1302 = vsyncadd %s1297, 0
          %s1303 = smul.addr %s108, 4
          %s1304 = smul.addr %s1303, 4
          %s1305 = scalar_lea.hbm %s47, %s1304
          %s1306 = sshll.u32 %s1305, 4
          %s1307 = int_to_ptr.hbm [resolvable:$true] %s1306
          %s1308 = sshll.u32 %s1300, 4
          %s1309 = int_to_ptr.vmem [resolvable:$true] %s1308
          %1314 = dma.hbm_to_vmem [thread:$0]  %s1307, 256, %s1309, %s1297, 64, 64, 4
        $region112: #{fwd.1} parent=15 // pred_fallthru
          _
        // Predicated region
        $region113: #{fwd.1} parent=15 // pred_check
          %p1315 = pneg %p752
        $region114: #{fwd.1} parent=15 // pred_check_branch
          %1317 = sbr.rel (%p1315) target = $region116
        $region115: #{fwd.1} parent=15 // pred_region
          %s1318 = sand.u32 %s108, 1
          %s1319 = scalar_lea.sflag [#allocation33], %s1318
          %s1320 = sand.u32 %s742, 1
          %s1321 = scalar_lea.vmem [#allocation32], %s1320
          %1323 = vsyncadd %s1319, 0
          %s1324 = scalar_lea.hbm %s49, %s108
          %s1326 = sshll.u32 %s1324, 4
          %s1327 = int_to_ptr.hbm [resolvable:$true] %s1326
          %s1328 = sshll.u32 %s1321, 4
          %s1329 = int_to_ptr.vmem [resolvable:$true] %s1328
          %1331 = dma.hbm_to_vmem [thread:$0]  %s1327, 16, %s1329, %s1319
        $region116: #{fwd.1} parent=15 // pred_fallthru
          _
        // Predicated region
        $region117: #{fwd.1} parent=15 // pred_check
          %p1332 = pneg %p778
        $region118: #{fwd.1} parent=15 // pred_check_branch
          %1334 = sbr.rel (%p1332) target = $region120
        $region119: #{fwd.1} parent=15 // pred_region
          %s1335 = sand.u32 %s108, 1
          %s1336 = scalar_lea.sflag [#allocation33], %s1335
          %s1337 = sand.u32 %s768, 1
          %s1338 = smul.addr %s1337, 16
          %s1339 = scalar_lea.vmem [#allocation34], %s1338
          %1341 = vsyncadd %s1336, 0
          %s1342 = smul.addr %s108, 4
          %s1343 = smul.addr %s1342, 4
          %s1344 = scalar_lea.hbm %s51, %s1343
          %s1345 = sshll.u32 %s1344, 4
          %s1346 = int_to_ptr.hbm [resolvable:$true] %s1345
          %s1347 = sshll.u32 %s1339, 4
          %s1348 = int_to_ptr.vmem [resolvable:$true] %s1347
          %1353 = dma.hbm_to_vmem [thread:$0]  %s1346, 256, %s1348, %s1336, 64, 64, 4
        $region120: #{fwd.1} parent=15 // pred_fallthru
          _
        // Predicated region
        $region121: #{fwd.1} parent=15 // pred_check
          %p1354 = pneg %p804
        $region122: #{fwd.1} parent=15 // pred_check_branch
          %1356 = sbr.rel (%p1354) target = $region124
        $region123: #{fwd.1} parent=15 // pred_region
          %s1357 = sand.u32 %s794, 1
          %s1358 = scalar_lea.sflag [#allocation36], %s1357
          %s1359 = sand.u32 %s794, 1
          %s1360 = scalar_lea.vmem [#allocation35], %s1359
          %1362 = vsyncadd %s1358, 0
          %s1363 = scalar_lea.hbm %s53, %s108
          %s1365 = sshll.u32 %s1363, 4
          %s1366 = int_to_ptr.hbm [resolvable:$true] %s1365
          %s1367 = sshll.u32 %s1360, 4
          %s1368 = int_to_ptr.vmem [resolvable:$true] %s1367
          %1370 = dma.hbm_to_vmem [thread:$0]  %s1366, 16, %s1368, %s1358
        $region124: #{fwd.1} parent=15 // pred_fallthru
          _
      $region16: #{fwd.1} parent=5 // pred_fallthru
        _
      %p1371 = scmp.le.s32.totalorder 1, %s108
      %p1372 = scmp.lt.s32.totalorder %s108, 3
      %p1373 = pnand %p1371, %p1372
      %p1374 = pneg %p1373
      // Predicated region
      $region125: #{fwd.1} parent=5 // pred_check
        _
      $region126: #{fwd.1} parent=5 // pred_check_branch
        %1376 = sbr.rel (%p1373) target = $region128
      $region127: #{fwd.1} parent=5 // pred_region
        %s1377 = ssub.s32 %s108, 1
        %s1378 = sand.u32 %s121, 1
        %s1379 = scalar_lea.sflag [#allocation3], %s1378
        %s1380 = sand.u32 %s121, 1
        %s1381 = smul.addr %s1380, 18
        %s1382 = scalar_lea.vmem [#allocation2], %s1381
        // Predicated region
        $region129: #{fwd.1} parent=127 // pred_check
          %p1383 = pneg %p134
        $region130: #{fwd.1} parent=127 // pred_check_branch
          %1385 = sbr.rel (%p1383) target = $region132
        $region131: #{fwd.1} parent=127 // pred_region
          %1387 = dma.done %s1379, 288
        $region132: #{fwd.1} parent=127 // pred_fallthru
          _
        %s1388 = sand.u32 %s113, 1
        %s1389 = scalar_lea.sflag [#allocation6], %s1388
        %s1390 = sand.u32 %s199, 1
        %s1391 = smul.addr %s1390, 2064
        %s1392 = scalar_lea.vmem [#allocation5], %s1391
        // Predicated region
        $region133: #{fwd.1} parent=127 // pred_check
          %p1393 = pneg %p212
        $region134: #{fwd.1} parent=127 // pred_check_branch
          %1395 = sbr.rel (%p1393) target = $region136
        $region135: #{fwd.1} parent=127 // pred_region
          %1397 = dma.done %s1389, 33024
        $region136: #{fwd.1} parent=127 // pred_fallthru
          _
        %s1398 = sand.u32 %s113, 1
        %s1399 = scalar_lea.sflag [#allocation6], %s1398
        %s1400 = sand.u32 %s225, 1
        %s1401 = smul.addr %s1400, 4
        %s1402 = scalar_lea.vmem [#allocation7], %s1401
        // Predicated region
        $region137: #{fwd.1} parent=127 // pred_check
          %p1403 = pneg %p238
        $region138: #{fwd.1} parent=127 // pred_check_branch
          %1405 = sbr.rel (%p1403) target = $region140
        $region139: #{fwd.1} parent=127 // pred_region
          %1407 = dma.done %s1399, 64
        $region140: #{fwd.1} parent=127 // pred_fallthru
          _
        %s1408 = sand.u32 %s113, 1
        %s1409 = scalar_lea.sflag [#allocation9], %s1408
        %s1410 = sand.u32 %s251, 1
        %s1411 = smul.addr %s1410, 256
        %s1412 = scalar_lea.vmem [#allocation8], %s1411
        // Predicated region
        $region141: #{fwd.1} parent=127 // pred_check
          %p1413 = pneg %p264
        $region142: #{fwd.1} parent=127 // pred_check_branch
          %1415 = sbr.rel (%p1413) target = $region144
        $region143: #{fwd.1} parent=127 // pred_region
          %1417 = dma.done %s1409, 4096
        $region144: #{fwd.1} parent=127 // pred_fallthru
          _
        %s1418 = sand.u32 %s113, 1
        %s1419 = scalar_lea.sflag [#allocation9], %s1418
        %s1420 = sand.u32 %s277, 1
        %s1421 = scalar_lea.vmem [#allocation10], %s1420
        // Predicated region
        $region145: #{fwd.1} parent=127 // pred_check
          %p1422 = pneg %p290
        $region146: #{fwd.1} parent=127 // pred_check_branch
          %1424 = sbr.rel (%p1422) target = $region148
        $region147: #{fwd.1} parent=127 // pred_region
          %1426 = dma.done %s1419, 16
        $region148: #{fwd.1} parent=127 // pred_fallthru
          _
        %s1427 = sand.u32 %s113, 1
        %s1428 = scalar_lea.sflag [#allocation12], %s1427
        %s1429 = sand.u32 %s303, 1
        %s1430 = smul.addr %s1429, 64
        %s1431 = scalar_lea.vmem [#allocation11], %s1430
        // Predicated region
        $region149: #{fwd.1} parent=127 // pred_check
          %p1432 = pneg %p316
        $region150: #{fwd.1} parent=127 // pred_check_branch
          %1434 = sbr.rel (%p1432) target = $region152
        $region151: #{fwd.1} parent=127 // pred_region
          %1436 = dma.done %s1428, 1024
        $region152: #{fwd.1} parent=127 // pred_fallthru
          _
        %s1437 = sand.u32 %s113, 1
        %s1438 = scalar_lea.sflag [#allocation12], %s1437
        %s1439 = sand.u32 %s329, 1
        %s1440 = scalar_lea.vmem [#allocation13], %s1439
        // Predicated region
        $region153: #{fwd.1} parent=127 // pred_check
          %p1441 = pneg %p342
        $region154: #{fwd.1} parent=127 // pred_check_branch
          %1443 = sbr.rel (%p1441) target = $region156
        $region155: #{fwd.1} parent=127 // pred_region
          %1445 = dma.done %s1438, 16
        $region156: #{fwd.1} parent=127 // pred_fallthru
          _
        %s1446 = sand.u32 %s113, 1
        %s1447 = scalar_lea.sflag [#allocation15], %s1446
        %s1448 = sand.u32 %s355, 1
        %s1449 = smul.addr %s1448, 64
        %s1450 = scalar_lea.vmem [#allocation14], %s1449
        // Predicated region
        $region157: #{fwd.1} parent=127 // pred_check
          %p1451 = pneg %p368
        $region158: #{fwd.1} parent=127 // pred_check_branch
          %1453 = sbr.rel (%p1451) target = $region160
        $region159: #{fwd.1} parent=127 // pred_region
          %1455 = dma.done %s1447, 1024
        $region160: #{fwd.1} parent=127 // pred_fallthru
          _
        %s1456 = sand.u32 %s113, 1
        %s1457 = scalar_lea.sflag [#allocation15], %s1456
        %s1458 = sand.u32 %s381, 1
        %s1459 = scalar_lea.vmem [#allocation16], %s1458
        // Predicated region
        $region161: #{fwd.1} parent=127 // pred_check
          %p1460 = pneg %p394
        $region162: #{fwd.1} parent=127 // pred_check_branch
          %1462 = sbr.rel (%p1460) target = $region164
        $region163: #{fwd.1} parent=127 // pred_region
          %1464 = dma.done %s1457, 16
        $region164: #{fwd.1} parent=127 // pred_fallthru
          _
        %s1465 = sand.u32 %s113, 1
        %s1466 = scalar_lea.sflag [#allocation18], %s1465
        %s1467 = sand.u32 %s407, 1
        %s1468 = smul.addr %s1467, 64
        %s1469 = scalar_lea.vmem [#allocation17], %s1468
        // Predicated region
        $region165: #{fwd.1} parent=127 // pred_check
          %p1470 = pneg %p420
        $region166: #{fwd.1} parent=127 // pred_check_branch
          %1472 = sbr.rel (%p1470) target = $region168
        $region167: #{fwd.1} parent=127 // pred_region
          %1474 = dma.done %s1466, 1024
        $region168: #{fwd.1} parent=127 // pred_fallthru
          _
        %s1475 = sand.u32 %s113, 1
        %s1476 = scalar_lea.sflag [#allocation18], %s1475
        %s1477 = sand.u32 %s433, 1
        %s1478 = scalar_lea.vmem [#allocation19], %s1477
        // Predicated region
        $region169: #{fwd.1} parent=127 // pred_check
          %p1479 = pneg %p446
        $region170: #{fwd.1} parent=127 // pred_check_branch
          %1481 = sbr.rel (%p1479) target = $region172
        $region171: #{fwd.1} parent=127 // pred_region
          %1483 = dma.done %s1476, 16
        $region172: #{fwd.1} parent=127 // pred_fallthru
          _
        %s1484 = sand.u32 %s113, 1
        %s1485 = scalar_lea.sflag [#allocation21], %s1484
        %s1486 = sand.u32 %s485, 1
        %s1487 = scalar_lea.vmem [#allocation20], %s1486
        // Predicated region
        $region173: #{fwd.1} parent=127 // pred_check
          %p1488 = pneg %p498
        $region174: #{fwd.1} parent=127 // pred_check_branch
          %1490 = sbr.rel (%p1488) target = $region176
        $region175: #{fwd.1} parent=127 // pred_region
          %1492 = dma.done %s1485, 16
        $region176: #{fwd.1} parent=127 // pred_fallthru
          _
        %s1493 = sand.u32 %s113, 1
        %s1494 = scalar_lea.sflag [#allocation21], %s1493
        %s1495 = sand.u32 %s511, 1
        %s1496 = scalar_lea.vmem [#allocation22], %s1495
        // Predicated region
        $region177: #{fwd.1} parent=127 // pred_check
          %p1497 = pneg %p524
        $region178: #{fwd.1} parent=127 // pred_check_branch
          %1499 = sbr.rel (%p1497) target = $region180
        $region179: #{fwd.1} parent=127 // pred_region
          %1501 = dma.done %s1494, 16
        $region180: #{fwd.1} parent=127 // pred_fallthru
          _
        %s1502 = sand.u32 %s113, 1
        %s1503 = scalar_lea.sflag [#allocation24], %s1502
        %s1504 = sand.u32 %s537, 1
        %s1505 = scalar_lea.vmem [#allocation23], %s1504
        // Predicated region
        $region181: #{fwd.1} parent=127 // pred_check
          %p1506 = pneg %p550
        $region182: #{fwd.1} parent=127 // pred_check_branch
          %1508 = sbr.rel (%p1506) target = $region184
        $region183: #{fwd.1} parent=127 // pred_region
          %1510 = dma.done %s1503, 16
        $region184: #{fwd.1} parent=127 // pred_fallthru
          _
        %s1511 = sand.u32 %s113, 1
        %s1512 = scalar_lea.sflag [#allocation24], %s1511
        %s1513 = sand.u32 %s563, 1
        %s1514 = smul.addr %s1513, 32
        %s1515 = scalar_lea.vmem [#allocation25], %s1514
        // Predicated region
        $region185: #{fwd.1} parent=127 // pred_check
          %p1516 = pneg %p576
        $region186: #{fwd.1} parent=127 // pred_check_branch
          %1518 = sbr.rel (%p1516) target = $region188
        $region187: #{fwd.1} parent=127 // pred_region
          %1520 = dma.done %s1512, 512
        $region188: #{fwd.1} parent=127 // pred_fallthru
          _
        %s1521 = sand.u32 %s113, 1
        %s1522 = scalar_lea.sflag [#allocation27], %s1521
        %s1523 = sand.u32 %s641, 1
        %s1524 = smul.addr %s1523, 4
        %s1525 = scalar_lea.vmem [#allocation26], %s1524
        // Predicated region
        $region189: #{fwd.1} parent=127 // pred_check
          %p1526 = pneg %p654
        $region190: #{fwd.1} parent=127 // pred_check_branch
          %1528 = sbr.rel (%p1526) target = $region192
        $region191: #{fwd.1} parent=127 // pred_region
          %1530 = dma.done %s1522, 64
        $region192: #{fwd.1} parent=127 // pred_fallthru
          _
        %s1531 = sand.u32 %s113, 1
        %s1532 = scalar_lea.sflag [#allocation27], %s1531
        %s1533 = sand.u32 %s667, 1
        %s1534 = smul.addr %s1533, 16
        %s1535 = scalar_lea.vmem [#allocation28], %s1534
        // Predicated region
        $region193: #{fwd.1} parent=127 // pred_check
          %p1536 = pneg %p680
        $region194: #{fwd.1} parent=127 // pred_check_branch
          %1538 = sbr.rel (%p1536) target = $region196
        $region195: #{fwd.1} parent=127 // pred_region
          %1540 = dma.done %s1532, 256
        $region196: #{fwd.1} parent=127 // pred_fallthru
          _
        %s1541 = sand.u32 %s113, 1
        %s1542 = scalar_lea.sflag [#allocation30], %s1541
        %s1543 = sand.u32 %s693, 1
        %s1544 = scalar_lea.vmem [#allocation29], %s1543
        // Predicated region
        $region197: #{fwd.1} parent=127 // pred_check
          %p1545 = pneg %p706
        $region198: #{fwd.1} parent=127 // pred_check_branch
          %1547 = sbr.rel (%p1545) target = $region200
        $region199: #{fwd.1} parent=127 // pred_region
          %1549 = dma.done %s1542, 16
        $region200: #{fwd.1} parent=127 // pred_fallthru
          _
        %s1550 = sand.u32 %s113, 1
        %s1551 = scalar_lea.sflag [#allocation30], %s1550
        %s1552 = sand.u32 %s719, 1
        %s1553 = smul.addr %s1552, 16
        %s1554 = scalar_lea.vmem [#allocation31], %s1553
        // Predicated region
        $region201: #{fwd.1} parent=127 // pred_check
          %p1555 = pneg %p732
        $region202: #{fwd.1} parent=127 // pred_check_branch
          %1557 = sbr.rel (%p1555) target = $region204
        $region203: #{fwd.1} parent=127 // pred_region
          %1559 = dma.done %s1551, 256
        $region204: #{fwd.1} parent=127 // pred_fallthru
          _
        %s1560 = sand.u32 %s113, 1
        %s1561 = scalar_lea.sflag [#allocation33], %s1560
        %s1562 = sand.u32 %s745, 1
        %s1563 = scalar_lea.vmem [#allocation32], %s1562
        // Predicated region
        $region205: #{fwd.1} parent=127 // pred_check
          %p1564 = pneg %p758
        $region206: #{fwd.1} parent=127 // pred_check_branch
          %1566 = sbr.rel (%p1564) target = $region208
        $region207: #{fwd.1} parent=127 // pred_region
          %1568 = dma.done %s1561, 16
        $region208: #{fwd.1} parent=127 // pred_fallthru
          _
        %s1569 = sand.u32 %s113, 1
        %s1570 = scalar_lea.sflag [#allocation33], %s1569
        %s1571 = sand.u32 %s771, 1
        %s1572 = smul.addr %s1571, 16
        %s1573 = scalar_lea.vmem [#allocation34], %s1572
        // Predicated region
        $region209: #{fwd.1} parent=127 // pred_check
          %p1574 = pneg %p784
        $region210: #{fwd.1} parent=127 // pred_check_branch
          %1576 = sbr.rel (%p1574) target = $region212
        $region211: #{fwd.1} parent=127 // pred_region
          %1578 = dma.done %s1570, 256
        $region212: #{fwd.1} parent=127 // pred_fallthru
          _
        %s1579 = sand.u32 %s797, 1
        %s1580 = scalar_lea.sflag [#allocation36], %s1579
        %s1581 = sand.u32 %s797, 1
        %s1582 = scalar_lea.vmem [#allocation35], %s1581
        // Predicated region
        $region213: #{fwd.1} parent=127 // pred_check
          %p1583 = pneg %p810
        $region214: #{fwd.1} parent=127 // pred_check_branch
          %1585 = sbr.rel (%p1583) target = $region216
        $region215: #{fwd.1} parent=127 // pred_region
          %1587 = dma.done %s1580, 16
        $region216: #{fwd.1} parent=127 // pred_fallthru
          _
        %s1588 = sand.u32 %s121, 1
        %s1589 = scalar_lea.sflag [#allocation3], %s1588
        %s1590 = sand.u32 %s121, 1
        %s1591 = smul.addr %s1590, 18
        %s1592 = scalar_lea.vmem [#allocation2], %s1591
        %p1593 = pneg %p134
        %p1594 = pneg %p131
        %p1595 = scmp.lt.s32.totalorder %s113, 1
        %s1596 = scalar_select %p1595, %s113, 1
        %s1597 = smul.addr %s1596, 2
        %s1598 = scalar_lea.vmem %s3, %s1597
        %p1599 = pneg %p160
        %p1600 = pneg %p157
        %p1601 = scmp.lt.s32.totalorder %s113, 1
        %s1602 = scalar_select %p1601, %s113, 1
        %s1603 = smul.addr %s1602, 2
        %s1604 = scalar_lea.vmem %s5, %s1603
        %p1605 = pneg %p186
        %p1606 = pneg %p183
        %s1607 = sand.u32 %s113, 1
        %s1608 = scalar_lea.sflag [#allocation6], %s1607
        %s1609 = sand.u32 %s199, 1
        %s1610 = smul.addr %s1609, 2064
        %s1611 = scalar_lea.vmem [#allocation5], %s1610
        %p1612 = pneg %p212
        %p1613 = pneg %p209
        %s1614 = sand.u32 %s113, 1
        %s1615 = scalar_lea.sflag [#allocation6], %s1614
        %s1616 = sand.u32 %s225, 1
        %s1617 = smul.addr %s1616, 4
        %s1618 = scalar_lea.vmem [#allocation7], %s1617
        %p1619 = pneg %p238
        %p1620 = pneg %p235
        %s1621 = sand.u32 %s113, 1
        %s1622 = scalar_lea.sflag [#allocation9], %s1621
        %s1623 = sand.u32 %s251, 1
        %s1624 = smul.addr %s1623, 256
        %s1625 = scalar_lea.vmem [#allocation8], %s1624
        %p1626 = pneg %p264
        %p1627 = pneg %p261
        %s1628 = sand.u32 %s113, 1
        %s1629 = scalar_lea.sflag [#allocation9], %s1628
        %s1630 = sand.u32 %s277, 1
        %s1631 = scalar_lea.vmem [#allocation10], %s1630
        %p1632 = pneg %p290
        %p1633 = pneg %p287
        %s1634 = sand.u32 %s113, 1
        %s1635 = scalar_lea.sflag [#allocation12], %s1634
        %s1636 = sand.u32 %s303, 1
        %s1637 = smul.addr %s1636, 64
        %s1638 = scalar_lea.vmem [#allocation11], %s1637
        %p1639 = pneg %p316
        %p1640 = pneg %p313
        %s1641 = sand.u32 %s113, 1
        %s1642 = scalar_lea.sflag [#allocation12], %s1641
        %s1643 = sand.u32 %s329, 1
        %s1644 = scalar_lea.vmem [#allocation13], %s1643
        %p1645 = pneg %p342
        %p1646 = pneg %p339
        %s1647 = sand.u32 %s113, 1
        %s1648 = scalar_lea.sflag [#allocation15], %s1647
        %s1649 = sand.u32 %s355, 1
        %s1650 = smul.addr %s1649, 64
        %s1651 = scalar_lea.vmem [#allocation14], %s1650
        %p1652 = pneg %p368
        %p1653 = pneg %p365
        %s1654 = sand.u32 %s113, 1
        %s1655 = scalar_lea.sflag [#allocation15], %s1654
        %s1656 = sand.u32 %s381, 1
        %s1657 = scalar_lea.vmem [#allocation16], %s1656
        %p1658 = pneg %p394
        %p1659 = pneg %p391
        %s1660 = sand.u32 %s113, 1
        %s1661 = scalar_lea.sflag [#allocation18], %s1660
        %s1662 = sand.u32 %s407, 1
        %s1663 = smul.addr %s1662, 64
        %s1664 = scalar_lea.vmem [#allocation17], %s1663
        %p1665 = pneg %p420
        %p1666 = pneg %p417
        %s1667 = sand.u32 %s113, 1
        %s1668 = scalar_lea.sflag [#allocation18], %s1667
        %s1669 = sand.u32 %s433, 1
        %s1670 = scalar_lea.vmem [#allocation19], %s1669
        %p1671 = pneg %p446
        %p1672 = pneg %p443
        %p1673 = scmp.lt.s32.totalorder %s113, 1
        %s1674 = scalar_select %p1673, %s113, 1
        %s1675 = smul.addr %s1674, 16
        %s1676 = smul.addr %s1675, 4
        %s1677 = scalar_lea.vmem %s27, %s1676
        %p1678 = pneg %p472
        %p1679 = pneg %p469
        %s1680 = sand.u32 %s113, 1
        %s1681 = scalar_lea.sflag [#allocation21], %s1680
        %s1682 = sand.u32 %s485, 1
        %s1683 = scalar_lea.vmem [#allocation20], %s1682
        %p1684 = pneg %p498
        %p1685 = pneg %p495
        %s1686 = sand.u32 %s113, 1
        %s1687 = scalar_lea.sflag [#allocation21], %s1686
        %s1688 = sand.u32 %s511, 1
        %s1689 = scalar_lea.vmem [#allocation22], %s1688
        %p1690 = pneg %p524
        %p1691 = pneg %p521
        %s1692 = sand.u32 %s113, 1
        %s1693 = scalar_lea.sflag [#allocation24], %s1692
        %s1694 = sand.u32 %s537, 1
        %s1695 = scalar_lea.vmem [#allocation23], %s1694
        %p1696 = pneg %p550
        %p1697 = pneg %p547
        %s1698 = sand.u32 %s113, 1
        %s1699 = scalar_lea.sflag [#allocation24], %s1698
        %s1700 = sand.u32 %s563, 1
        %s1701 = smul.addr %s1700, 32
        %s1702 = scalar_lea.vmem [#allocation25], %s1701
        %p1703 = pneg %p576
        %p1704 = pneg %p573
        %p1705 = scmp.lt.s32.totalorder %s113, 1
        %s1706 = scalar_select %p1705, %s113, 1
        %s1707 = smul.addr %s1706, 16
        %s1708 = smul.addr %s1707, 8
        %s1709 = scalar_lea.vmem %s37, %s1708
        %p1710 = pneg %p602
        %p1711 = pneg %p599
        %p1712 = scmp.lt.s32.totalorder %s113, 1
        %s1713 = scalar_select %p1712, %s113, 1
        %s1714 = smul.addr %s1713, 16
        %s1715 = smul.addr %s1714, 8
        %s1716 = scalar_lea.vmem %s39, %s1715
        %p1717 = pneg %p628
        %p1718 = pneg %p625
        %s1719 = sand.u32 %s113, 1
        %s1720 = scalar_lea.sflag [#allocation27], %s1719
        %s1721 = sand.u32 %s641, 1
        %s1722 = smul.addr %s1721, 4
        %s1723 = scalar_lea.vmem [#allocation26], %s1722
        %p1724 = pneg %p654
        %p1725 = pneg %p651
        %s1726 = sand.u32 %s113, 1
        %s1727 = scalar_lea.sflag [#allocation27], %s1726
        %s1728 = sand.u32 %s667, 1
        %s1729 = smul.addr %s1728, 16
        %s1730 = scalar_lea.vmem [#allocation28], %s1729
        %p1731 = pneg %p680
        %p1732 = pneg %p677
        %s1733 = sand.u32 %s113, 1
        %s1734 = scalar_lea.sflag [#allocation30], %s1733
        %s1735 = sand.u32 %s693, 1
        %s1736 = scalar_lea.vmem [#allocation29], %s1735
        %p1737 = pneg %p706
        %p1738 = pneg %p703
        %s1739 = sand.u32 %s113, 1
        %s1740 = scalar_lea.sflag [#allocation30], %s1739
        %s1741 = sand.u32 %s719, 1
        %s1742 = smul.addr %s1741, 16
        %s1743 = scalar_lea.vmem [#allocation31], %s1742
        %p1744 = pneg %p732
        %p1745 = pneg %p729
        %s1746 = sand.u32 %s113, 1
        %s1747 = scalar_lea.sflag [#allocation33], %s1746
        %s1748 = sand.u32 %s745, 1
        %s1749 = scalar_lea.vmem [#allocation32], %s1748
        %p1750 = pneg %p758
        %p1751 = pneg %p755
        %s1752 = sand.u32 %s113, 1
        %s1753 = scalar_lea.sflag [#allocation33], %s1752
        %s1754 = sand.u32 %s771, 1
        %s1755 = smul.addr %s1754, 16
        %s1756 = scalar_lea.vmem [#allocation34], %s1755
        %p1757 = pneg %p784
        %p1758 = pneg %p781
        %s1759 = sand.u32 %s797, 1
        %s1760 = scalar_lea.sflag [#allocation36], %s1759
        %s1761 = sand.u32 %s797, 1
        %s1762 = scalar_lea.vmem [#allocation35], %s1761
        %p1763 = pneg %p810
        %p1764 = pneg %p807
        %p1765 = pneg %p836
        %p1766 = pneg %p833
        %s1767 = sand.u32 %s823, 1
        %s1768 = scalar_lea.sflag [#allocation4], %s1767
        %s1769 = sand.u32 %s823, 1
        %s1770 = smul.addr %s1769, 2
        %s1771 = scalar_lea.vmem [#allocation37], %s1770
        %p1772 = pneg %p862
        %p1773 = pneg %p859
        %s1774 = sand.u32 %s113, 1
        %s1775 = scalar_lea.sflag [#allocation39], %s1774
        %s1776 = sand.u32 %s849, 1
        %s1777 = smul.addr %s1776, 2
        %s1778 = scalar_lea.vmem [#allocation38], %s1777
        %p1779 = pneg %p888
        %p1780 = pneg %p885
        %s1781 = sand.u32 %s113, 1
        %s1782 = scalar_lea.sflag [#allocation39], %s1781
        %s1783 = sand.u32 %s875, 1
        %s1784 = smul.addr %s1783, 2
        %s1785 = scalar_lea.vmem [#allocation40], %s1784
        %p1786 = scmp.lt.s32.totalorder %s113, 1
        %s1787 = scalar_select %p1786, %s113, 1
        %s1788 = smul.addr %s1787, 2
        %s1789 = scalar_lea.vmem %s3, %s1788
        %p1790 = scmp.lt.s32.totalorder %s113, 1
        %s1791 = scalar_select %p1790, %s113, 1
        %s1792 = smul.addr %s1791, 2
        %s1793 = scalar_lea.vmem %s5, %s1792
        %p1794 = scmp.lt.s32.totalorder %s113, 1
        %s1795 = scalar_select %p1794, %s113, 1
        %s1796 = smul.addr %s1795, 16
        %s1797 = smul.addr %s1796, 4
        %s1798 = scalar_lea.vmem %s27, %s1797
        %p1799 = scmp.lt.s32.totalorder %s113, 1
        %s1800 = scalar_select %p1799, %s113, 1
        %s1801 = smul.addr %s1800, 16
        %s1802 = smul.addr %s1801, 8
        %s1803 = scalar_lea.vmem %s37, %s1802
        %p1804 = scmp.lt.s32.totalorder %s113, 1
        %s1805 = scalar_select %p1804, %s113, 1
        %s1806 = smul.addr %s1805, 16
        %s1807 = smul.addr %s1806, 8
        %s1808 = scalar_lea.vmem %s39, %s1807
        %v1810 = vld [vmem:[%s1382] sm:$0xff]
        %v1811 = vld [vmem:[%s1382 + $0x8] sm:$0xff]
        %v1812 = vld [vmem:[%s1382 + $0x10] sm:$0x3]
        %v1813 = vld [vmem:[%s1392] sm:$0xff]
        %v1814 = vld [vmem:[%s1392 + $0x8] sm:$0xff]
        %v1815 = vld [vmem:[%s1392 + $0x10] sm:$0xff]
        %v1816 = vld [vmem:[%s1392 + $0x18] sm:$0xff]
        %v1817 = vld [vmem:[%s1392 + $0x20] sm:$0xff]
        %v1818 = vld [vmem:[%s1392 + $0x28] sm:$0xff]
        %v1819 = vld [vmem:[%s1392 + $0x30] sm:$0xff]
        %v1820 = vld [vmem:[%s1392 + $0x38] sm:$0xff]
        %v1821 = vld [vmem:[%s1392 + $0x40] sm:$0xff]
        %v1822 = vld [vmem:[%s1392 + $0x48] sm:$0xff]
        %v1823 = vld [vmem:[%s1392 + $0x50] sm:$0xff]
        %v1824 = vld [vmem:[%s1392 + $0x58] sm:$0xff]
        %v1825 = vld [vmem:[%s1392 + $0x60] sm:$0xff]
        %v1826 = vld [vmem:[%s1392 + $0x68] sm:$0xff]
        %v1827 = vld [vmem:[%s1392 + $0x70] sm:$0xff]
        %v1828 = vld [vmem:[%s1392 + $0x78] sm:$0xff]
        %v1829 = vld [vmem:[%s1392 + $0x80] sm:$0xff]
        %v1830 = vld [vmem:[%s1392 + $0x88] sm:$0xff]
        %v1831 = vld [vmem:[%s1392 + $0x90] sm:$0xff]
        %v1832 = vld [vmem:[%s1392 + $0x98] sm:$0xff]
        %v1833 = vld [vmem:[%s1392 + $0xa0] sm:$0xff]
        %v1834 = vld [vmem:[%s1392 + $0xa8] sm:$0xff]
        %v1835 = vld [vmem:[%s1392 + $0xb0] sm:$0xff]
        %v1836 = vld [vmem:[%s1392 + $0xb8] sm:$0xff]
        %v1837 = vld [vmem:[%s1392 + $0xc0] sm:$0xff]
        %v1838 = vld [vmem:[%s1392 + $0xc8] sm:$0xff]
        %v1839 = vld [vmem:[%s1392 + $0xd0] sm:$0xff]
        %v1840 = vld [vmem:[%s1392 + $0xd8] sm:$0xff]
        %v1841 = vld [vmem:[%s1392 + $0xe0] sm:$0xff]
        %v1842 = vld [vmem:[%s1392 + $0xe8] sm:$0xff]
        %v1843 = vld [vmem:[%s1392 + $0xf0] sm:$0xff]
        %v1844 = vld [vmem:[%s1392 + $0xf8] sm:$0xff]
        %v1845 = vld [vmem:[%s1392 + $0x100] sm:$0xff]
        %v1846 = vld [vmem:[%s1392 + $0x108] sm:$0xff]
        %v1847 = vld [vmem:[%s1392 + $0x110] sm:$0xff]
        %v1848 = vld [vmem:[%s1392 + $0x118] sm:$0xff]
        %v1849 = vld [vmem:[%s1392 + $0x120] sm:$0xff]
        %v1850 = vld [vmem:[%s1392 + $0x128] sm:$0xff]
        %v1851 = vld [vmem:[%s1392 + $0x130] sm:$0xff]
        %v1852 = vld [vmem:[%s1392 + $0x138] sm:$0xff]
        %v1853 = vld [vmem:[%s1392 + $0x140] sm:$0xff]
        %v1854 = vld [vmem:[%s1392 + $0x148] sm:$0xff]
        %v1855 = vld [vmem:[%s1392 + $0x150] sm:$0xff]
        %v1856 = vld [vmem:[%s1392 + $0x158] sm:$0xff]
        %v1857 = vld [vmem:[%s1392 + $0x160] sm:$0xff]
        %v1858 = vld [vmem:[%s1392 + $0x168] sm:$0xff]
        %v1859 = vld [vmem:[%s1392 + $0x170] sm:$0xff]
        %v1860 = vld [vmem:[%s1392 + $0x178] sm:$0xff]
        %v1861 = vld [vmem:[%s1392 + $0x180] sm:$0xff]
        %v1862 = vld [vmem:[%s1392 + $0x188] sm:$0xff]
        %v1863 = vld [vmem:[%s1392 + $0x190] sm:$0xff]
        %v1864 = vld [vmem:[%s1392 + $0x198] sm:$0xff]
        %v1865 = vld [vmem:[%s1392 + $0x1a0] sm:$0xff]
        %v1866 = vld [vmem:[%s1392 + $0x1a8] sm:$0xff]
        %v1867 = vld [vmem:[%s1392 + $0x1b0] sm:$0xff]
        %v1868 = vld [vmem:[%s1392 + $0x1b8] sm:$0xff]
        %v1869 = vld [vmem:[%s1392 + $0x1c0] sm:$0xff]
        %v1870 = vld [vmem:[%s1392 + $0x1c8] sm:$0xff]
        %v1871 = vld [vmem:[%s1392 + $0x1d0] sm:$0xff]
        %v1872 = vld [vmem:[%s1392 + $0x1d8] sm:$0xff]
        %v1873 = vld [vmem:[%s1392 + $0x1e0] sm:$0xff]
        %v1874 = vld [vmem:[%s1392 + $0x1e8] sm:$0xff]
        %v1875 = vld [vmem:[%s1392 + $0x1f0] sm:$0xff]
        %v1876 = vld [vmem:[%s1392 + $0x1f8] sm:$0xff]
        %v1877 = vld [vmem:[%s1392 + $0x200] sm:$0xff]
        %v1878 = vld [vmem:[%s1392 + $0x208] sm:$0xff]
        %v1879 = vld [vmem:[%s1392 + $0x210] sm:$0xff]
        %v1880 = vld [vmem:[%s1392 + $0x218] sm:$0xff]
        %v1881 = vld [vmem:[%s1392 + $0x220] sm:$0xff]
        %v1882 = vld [vmem:[%s1392 + $0x228] sm:$0xff]
        %v1883 = vld [vmem:[%s1392 + $0x230] sm:$0xff]
        %v1884 = vld [vmem:[%s1392 + $0x238] sm:$0xff]
        %v1885 = vld [vmem:[%s1392 + $0x240] sm:$0xff]
        %v1886 = vld [vmem:[%s1392 + $0x248] sm:$0xff]
        %v1887 = vld [vmem:[%s1392 + $0x250] sm:$0xff]
        %v1888 = vld [vmem:[%s1392 + $0x258] sm:$0xff]
        %v1889 = vld [vmem:[%s1392 + $0x260] sm:$0xff]
        %v1890 = vld [vmem:[%s1392 + $0x268] sm:$0xff]
        %v1891 = vld [vmem:[%s1392 + $0x270] sm:$0xff]
        %v1892 = vld [vmem:[%s1392 + $0x278] sm:$0xff]
        %v1893 = vld [vmem:[%s1392 + $0x280] sm:$0xff]
        %v1894 = vld [vmem:[%s1392 + $0x288] sm:$0xff]
        %v1895 = vld [vmem:[%s1392 + $0x290] sm:$0xff]
        %v1896 = vld [vmem:[%s1392 + $0x298] sm:$0xff]
        %v1897 = vld [vmem:[%s1392 + $0x2a0] sm:$0xff]
        %v1898 = vld [vmem:[%s1392 + $0x2a8] sm:$0xff]
        %v1899 = vld [vmem:[%s1392 + $0x2b0] sm:$0xff]
        %v1900 = vld [vmem:[%s1392 + $0x2b8] sm:$0xff]
        %v1901 = vld [vmem:[%s1392 + $0x2c0] sm:$0xff]
        %v1902 = vld [vmem:[%s1392 + $0x2c8] sm:$0xff]
        %v1903 = vld [vmem:[%s1392 + $0x2d0] sm:$0xff]
        %v1904 = vld [vmem:[%s1392 + $0x2d8] sm:$0xff]
        %v1905 = vld [vmem:[%s1392 + $0x2e0] sm:$0xff]
        %v1906 = vld [vmem:[%s1392 + $0x2e8] sm:$0xff]
        %v1907 = vld [vmem:[%s1392 + $0x2f0] sm:$0xff]
        %v1908 = vld [vmem:[%s1392 + $0x2f8] sm:$0xff]
        %v1909 = vld [vmem:[%s1392 + $0x300] sm:$0xff]
        %v1910 = vld [vmem:[%s1392 + $0x308] sm:$0xff]
        %v1911 = vld [vmem:[%s1392 + $0x310] sm:$0xff]
        %v1912 = vld [vmem:[%s1392 + $0x318] sm:$0xff]
        %v1913 = vld [vmem:[%s1392 + $0x320] sm:$0xff]
        %v1914 = vld [vmem:[%s1392 + $0x328] sm:$0xff]
        %v1915 = vld [vmem:[%s1392 + $0x330] sm:$0xff]
        %v1916 = vld [vmem:[%s1392 + $0x338] sm:$0xff]
        %v1917 = vld [vmem:[%s1392 + $0x340] sm:$0xff]
        %v1918 = vld [vmem:[%s1392 + $0x348] sm:$0xff]
        %v1919 = vld [vmem:[%s1392 + $0x350] sm:$0xff]
        %v1920 = vld [vmem:[%s1392 + $0x358] sm:$0xff]
        %v1921 = vld [vmem:[%s1392 + $0x360] sm:$0xff]
        %v1922 = vld [vmem:[%s1392 + $0x368] sm:$0xff]
        %v1923 = vld [vmem:[%s1392 + $0x370] sm:$0xff]
        %v1924 = vld [vmem:[%s1392 + $0x378] sm:$0xff]
        %v1925 = vld [vmem:[%s1392 + $0x380] sm:$0xff]
        %v1926 = vld [vmem:[%s1392 + $0x388] sm:$0xff]
        %v1927 = vld [vmem:[%s1392 + $0x390] sm:$0xff]
        %v1928 = vld [vmem:[%s1392 + $0x398] sm:$0xff]
        %v1929 = vld [vmem:[%s1392 + $0x3a0] sm:$0xff]
        %v1930 = vld [vmem:[%s1392 + $0x3a8] sm:$0xff]
        %v1931 = vld [vmem:[%s1392 + $0x3b0] sm:$0xff]
        %v1932 = vld [vmem:[%s1392 + $0x3b8] sm:$0xff]
        %v1933 = vld [vmem:[%s1392 + $0x3c0] sm:$0xff]
        %v1934 = vld [vmem:[%s1392 + $0x3c8] sm:$0xff]
        %v1935 = vld [vmem:[%s1392 + $0x3d0] sm:$0xff]
        %v1936 = vld [vmem:[%s1392 + $0x3d8] sm:$0xff]
        %v1937 = vld [vmem:[%s1392 + $0x3e0] sm:$0xff]
        %v1938 = vld [vmem:[%s1392 + $0x3e8] sm:$0xff]
        %v1939 = vld [vmem:[%s1392 + $0x3f0] sm:$0xff]
        %v1940 = vld [vmem:[%s1392 + $0x3f8] sm:$0xff]
        %v1941 = vld [vmem:[%s1392 + $0x400] sm:$0xff]
        %v1942 = vld [vmem:[%s1392 + $0x408] sm:$0xff]
        %v1943 = vld [vmem:[%s1392 + $0x410] sm:$0xff]
        %v1944 = vld [vmem:[%s1392 + $0x418] sm:$0xff]
        %v1945 = vld [vmem:[%s1392 + $0x420] sm:$0xff]
        %v1946 = vld [vmem:[%s1392 + $0x428] sm:$0xff]
        %v1947 = vld [vmem:[%s1392 + $0x430] sm:$0xff]
        %v1948 = vld [vmem:[%s1392 + $0x438] sm:$0xff]
        %v1949 = vld [vmem:[%s1392 + $0x440] sm:$0xff]
        %v1950 = vld [vmem:[%s1392 + $0x448] sm:$0xff]
        %v1951 = vld [vmem:[%s1392 + $0x450] sm:$0xff]
        %v1952 = vld [vmem:[%s1392 + $0x458] sm:$0xff]
        %v1953 = vld [vmem:[%s1392 + $0x460] sm:$0xff]
        %v1954 = vld [vmem:[%s1392 + $0x468] sm:$0xff]
        %v1955 = vld [vmem:[%s1392 + $0x470] sm:$0xff]
        %v1956 = vld [vmem:[%s1392 + $0x478] sm:$0xff]
        %v1957 = vld [vmem:[%s1392 + $0x480] sm:$0xff]
        %v1958 = vld [vmem:[%s1392 + $0x488] sm:$0xff]
        %v1959 = vld [vmem:[%s1392 + $0x490] sm:$0xff]
        %v1960 = vld [vmem:[%s1392 + $0x498] sm:$0xff]
        %v1961 = vld [vmem:[%s1392 + $0x4a0] sm:$0xff]
        %v1962 = vld [vmem:[%s1392 + $0x4a8] sm:$0xff]
        %v1963 = vld [vmem:[%s1392 + $0x4b0] sm:$0xff]
        %v1964 = vld [vmem:[%s1392 + $0x4b8] sm:$0xff]
        %v1965 = vld [vmem:[%s1392 + $0x4c0] sm:$0xff]
        %v1966 = vld [vmem:[%s1392 + $0x4c8] sm:$0xff]
        %v1967 = vld [vmem:[%s1392 + $0x4d0] sm:$0xff]
        %v1968 = vld [vmem:[%s1392 + $0x4d8] sm:$0xff]
        %v1969 = vld [vmem:[%s1392 + $0x4e0] sm:$0xff]
        %v1970 = vld [vmem:[%s1392 + $0x4e8] sm:$0xff]
        %v1971 = vld [vmem:[%s1392 + $0x4f0] sm:$0xff]
        %v1972 = vld [vmem:[%s1392 + $0x4f8] sm:$0xff]
        %v1973 = vld [vmem:[%s1392 + $0x500] sm:$0xff]
        %v1974 = vld [vmem:[%s1392 + $0x508] sm:$0xff]
        %v1975 = vld [vmem:[%s1392 + $0x510] sm:$0xff]
        %v1976 = vld [vmem:[%s1392 + $0x518] sm:$0xff]
        %v1977 = vld [vmem:[%s1392 + $0x520] sm:$0xff]
        %v1978 = vld [vmem:[%s1392 + $0x528] sm:$0xff]
        %v1979 = vld [vmem:[%s1392 + $0x530] sm:$0xff]
        %v1980 = vld [vmem:[%s1392 + $0x538] sm:$0xff]
        %v1981 = vld [vmem:[%s1392 + $0x540] sm:$0xff]
        %v1982 = vld [vmem:[%s1392 + $0x548] sm:$0xff]
        %v1983 = vld [vmem:[%s1392 + $0x550] sm:$0xff]
        %v1984 = vld [vmem:[%s1392 + $0x558] sm:$0xff]
        %v1985 = vld [vmem:[%s1392 + $0x560] sm:$0xff]
        %v1986 = vld [vmem:[%s1392 + $0x568] sm:$0xff]
        %v1987 = vld [vmem:[%s1392 + $0x570] sm:$0xff]
        %v1988 = vld [vmem:[%s1392 + $0x578] sm:$0xff]
        %v1989 = vld [vmem:[%s1392 + $0x580] sm:$0xff]
        %v1990 = vld [vmem:[%s1392 + $0x588] sm:$0xff]
        %v1991 = vld [vmem:[%s1392 + $0x590] sm:$0xff]
        %v1992 = vld [vmem:[%s1392 + $0x598] sm:$0xff]
        %v1993 = vld [vmem:[%s1392 + $0x5a0] sm:$0xff]
        %v1994 = vld [vmem:[%s1392 + $0x5a8] sm:$0xff]
        %v1995 = vld [vmem:[%s1392 + $0x5b0] sm:$0xff]
        %v1996 = vld [vmem:[%s1392 + $0x5b8] sm:$0xff]
        %v1997 = vld [vmem:[%s1392 + $0x5c0] sm:$0xff]
        %v1998 = vld [vmem:[%s1392 + $0x5c8] sm:$0xff]
        %v1999 = vld [vmem:[%s1392 + $0x5d0] sm:$0xff]
        %v2000 = vld [vmem:[%s1392 + $0x5d8] sm:$0xff]
        %v2001 = vld [vmem:[%s1392 + $0x5e0] sm:$0xff]
        %v2002 = vld [vmem:[%s1392 + $0x5e8] sm:$0xff]
        %v2003 = vld [vmem:[%s1392 + $0x5f0] sm:$0xff]
        %v2004 = vld [vmem:[%s1392 + $0x5f8] sm:$0xff]
        %v2005 = vld [vmem:[%s1392 + $0x600] sm:$0xff]
        %v2006 = vld [vmem:[%s1392 + $0x608] sm:$0xff]
        %v2007 = vld [vmem:[%s1392 + $0x610] sm:$0xff]
        %v2008 = vld [vmem:[%s1392 + $0x618] sm:$0xff]
        %v2009 = vld [vmem:[%s1392 + $0x620] sm:$0xff]
        %v2010 = vld [vmem:[%s1392 + $0x628] sm:$0xff]
        %v2011 = vld [vmem:[%s1392 + $0x630] sm:$0xff]
        %v2012 = vld [vmem:[%s1392 + $0x638] sm:$0xff]
        %v2013 = vld [vmem:[%s1392 + $0x640] sm:$0xff]
        %v2014 = vld [vmem:[%s1392 + $0x648] sm:$0xff]
        %v2015 = vld [vmem:[%s1392 + $0x650] sm:$0xff]
        %v2016 = vld [vmem:[%s1392 + $0x658] sm:$0xff]
        %v2017 = vld [vmem:[%s1392 + $0x660] sm:$0xff]
        %v2018 = vld [vmem:[%s1392 + $0x668] sm:$0xff]
        %v2019 = vld [vmem:[%s1392 + $0x670] sm:$0xff]
        %v2020 = vld [vmem:[%s1392 + $0x678] sm:$0xff]
        %v2021 = vld [vmem:[%s1392 + $0x680] sm:$0xff]
        %v2022 = vld [vmem:[%s1392 + $0x688] sm:$0xff]
        %v2023 = vld [vmem:[%s1392 + $0x690] sm:$0xff]
        %v2024 = vld [vmem:[%s1392 + $0x698] sm:$0xff]
        %v2025 = vld [vmem:[%s1392 + $0x6a0] sm:$0xff]
        %v2026 = vld [vmem:[%s1392 + $0x6a8] sm:$0xff]
        %v2027 = vld [vmem:[%s1392 + $0x6b0] sm:$0xff]
        %v2028 = vld [vmem:[%s1392 + $0x6b8] sm:$0xff]
        %v2029 = vld [vmem:[%s1392 + $0x6c0] sm:$0xff]
        %v2030 = vld [vmem:[%s1392 + $0x6c8] sm:$0xff]
        %v2031 = vld [vmem:[%s1392 + $0x6d0] sm:$0xff]
        %v2032 = vld [vmem:[%s1392 + $0x6d8] sm:$0xff]
        %v2033 = vld [vmem:[%s1392 + $0x6e0] sm:$0xff]
        %v2034 = vld [vmem:[%s1392 + $0x6e8] sm:$0xff]
        %v2035 = vld [vmem:[%s1392 + $0x6f0] sm:$0xff]
        %v2036 = vld [vmem:[%s1392 + $0x6f8] sm:$0xff]
        %v2037 = vld [vmem:[%s1392 + $0x700] sm:$0xff]
        %v2038 = vld [vmem:[%s1392 + $0x708] sm:$0xff]
        %v2039 = vld [vmem:[%s1392 + $0x710] sm:$0xff]
        %v2040 = vld [vmem:[%s1392 + $0x718] sm:$0xff]
        %v2041 = vld [vmem:[%s1392 + $0x720] sm:$0xff]
        %v2042 = vld [vmem:[%s1392 + $0x728] sm:$0xff]
        %v2043 = vld [vmem:[%s1392 + $0x730] sm:$0xff]
        %v2044 = vld [vmem:[%s1392 + $0x738] sm:$0xff]
        %v2045 = vld [vmem:[%s1392 + $0x740] sm:$0xff]
        %v2046 = vld [vmem:[%s1392 + $0x748] sm:$0xff]
        %v2047 = vld [vmem:[%s1392 + $0x750] sm:$0xff]
        %v2048 = vld [vmem:[%s1392 + $0x758] sm:$0xff]
        %v2049 = vld [vmem:[%s1392 + $0x760] sm:$0xff]
        %v2050 = vld [vmem:[%s1392 + $0x768] sm:$0xff]
        %v2051 = vld [vmem:[%s1392 + $0x770] sm:$0xff]
        %v2052 = vld [vmem:[%s1392 + $0x778] sm:$0xff]
        %v2053 = vld [vmem:[%s1392 + $0x780] sm:$0xff]
        %v2054 = vld [vmem:[%s1392 + $0x788] sm:$0xff]
        %v2055 = vld [vmem:[%s1392 + $0x790] sm:$0xff]
        %v2056 = vld [vmem:[%s1392 + $0x798] sm:$0xff]
        %v2057 = vld [vmem:[%s1392 + $0x7a0] sm:$0xff]
        %v2058 = vld [vmem:[%s1392 + $0x7a8] sm:$0xff]
        %v2059 = vld [vmem:[%s1392 + $0x7b0] sm:$0xff]
        %v2060 = vld [vmem:[%s1392 + $0x7b8] sm:$0xff]
        %v2061 = vld [vmem:[%s1392 + $0x7c0] sm:$0xff]
        %v2062 = vld [vmem:[%s1392 + $0x7c8] sm:$0xff]
        %v2063 = vld [vmem:[%s1392 + $0x7d0] sm:$0xff]
        %v2064 = vld [vmem:[%s1392 + $0x7d8] sm:$0xff]
        %v2065 = vld [vmem:[%s1392 + $0x7e0] sm:$0xff]
        %v2066 = vld [vmem:[%s1392 + $0x7e8] sm:$0xff]
        %v2067 = vld [vmem:[%s1392 + $0x7f0] sm:$0xff]
        %v2068 = vld [vmem:[%s1392 + $0x7f8] sm:$0xff]
        %v2069 = vld [vmem:[%s1392 + $0x800] sm:$0xff]
        %v2070 = vld [vmem:[%s1392 + $0x808] sm:$0xff]
        %v2071 = vld [vmem:[%s1402] sm:$0xf]
        %2075 = vst [vmem:[#allocation1] ss:$4 sm:$0xff] %v1810
        %s2076 = scalar_lea.vmem [#allocation1], 32
        %2077 = vst [vmem:[%s2076] ss:$4 sm:$0xff] %v1811
        %v2078 = vld.sshfl [vmem:[#allocation1] sm:$0xff pattern:$0x73625140]
        %v2079 = vld.sshfl [vmem:[#allocation1 + $0x8] sm:$0xff pattern:$0x73625140]
        %v2080 = vld.sshfl [vmem:[#allocation1 + $0x10] sm:$0xff pattern:$0x73625140]
        %v2081 = vld.sshfl [vmem:[#allocation1 + $0x18] sm:$0xff pattern:$0x73625140]
        %v2082 = vld.sshfl [vmem:[#allocation1 + $0x20] sm:$0xff pattern:$0x73625140]
        %v2083 = vld.sshfl [vmem:[#allocation1 + $0x28] sm:$0xff pattern:$0x73625140]
        %v2084 = vld.sshfl [vmem:[#allocation1 + $0x30] sm:$0xff pattern:$0x73625140]
        %v2085 = vld.sshfl [vmem:[#allocation1 + $0x38] sm:$0xff pattern:$0x73625140]
        %2086 = vst [vmem:[#allocation1] ss:$4 sm:$0xff] %v1812
        %v2087 = vld.sshfl [vmem:[#allocation1] sm:$0xff pattern:$0x73625140]
        %v2097 = vpack.c.bf16 %v2078, %v2078
        %v2098 = vpack.c.bf16 %v2079, %v2079
        %v2099 = vpack.c.bf16 %v2080, %v2080
        %v2100 = vpack.c.bf16 %v2081, %v2081
        %v2101 = vpack.c.bf16 %v2082, %v2082
        %v2102 = vpack.c.bf16 %v2083, %v2083
        %v2103 = vpack.c.bf16 %v2084, %v2084
        %v2104 = vpack.c.bf16 %v2085, %v2085
        %v2105 = vpack.c.bf16 %v2087, %v2087
        %v2107 = vperm.slane %v2071, 0
        %v2108 = vperm.slane %v2071, 1
        %v2109 = vperm.slane %v2071, 2
        %v2110 = vperm.slane %v2071, 3
        %v2373 = vunpack.c.l.b16 %v1813
        %v2374 = vunpack.c.h.b16 %v1813
        %v2375 = vunpack.c.l.b16 %v1814
        %v2376 = vunpack.c.h.b16 %v1814
        %v2377 = vunpack.c.l.b16 %v1815
        %v2378 = vunpack.c.h.b16 %v1815
        %v2379 = vunpack.c.l.b16 %v1816
        %v2380 = vunpack.c.h.b16 %v1816
        %v2381 = vunpack.c.l.b16 %v1817
        %v2382 = vunpack.c.h.b16 %v1817
        %v2383 = vunpack.c.l.b16 %v1818
        %v2384 = vunpack.c.h.b16 %v1818
        %v2385 = vunpack.c.l.b16 %v1819
        %v2386 = vunpack.c.h.b16 %v1819
        %v2387 = vunpack.c.l.b16 %v1820
        %v2388 = vunpack.c.h.b16 %v1820
        %v2389 = vunpack.c.l.b16 %v1821
        %v2390 = vunpack.c.h.b16 %v1821
        %v2391 = vunpack.c.l.b16 %v1822
        %v2392 = vunpack.c.h.b16 %v1822
        %v2393 = vunpack.c.l.b16 %v1823
        %v2394 = vunpack.c.h.b16 %v1823
        %v2395 = vunpack.c.l.b16 %v1824
        %v2396 = vunpack.c.h.b16 %v1824
        %v2397 = vunpack.c.l.b16 %v1825
        %v2398 = vunpack.c.h.b16 %v1825
        %v2399 = vunpack.c.l.b16 %v1826
        %v2400 = vunpack.c.h.b16 %v1826
        %v2401 = vunpack.c.l.b16 %v1827
        %v2402 = vunpack.c.h.b16 %v1827
        %v2403 = vunpack.c.l.b16 %v1828
        %v2404 = vunpack.c.h.b16 %v1828
        %v2405 = vunpack.c.l.b16 %v1829
        %v2406 = vunpack.c.h.b16 %v1829
        %v2407 = vunpack.c.l.b16 %v1830
        %v2408 = vunpack.c.h.b16 %v1830
        %v2409 = vunpack.c.l.b16 %v1831
        %v2410 = vunpack.c.h.b16 %v1831
        %v2411 = vunpack.c.l.b16 %v1832
        %v2412 = vunpack.c.h.b16 %v1832
        %v2413 = vunpack.c.l.b16 %v1833
        %v2414 = vunpack.c.h.b16 %v1833
        %v2415 = vunpack.c.l.b16 %v1834
        %v2416 = vunpack.c.h.b16 %v1834
        %v2417 = vunpack.c.l.b16 %v1835
        %v2418 = vunpack.c.h.b16 %v1835
        %v2419 = vunpack.c.l.b16 %v1836
        %v2420 = vunpack.c.h.b16 %v1836
        %v2421 = vunpack.c.l.b16 %v1837
        %v2422 = vunpack.c.h.b16 %v1837
        %v2423 = vunpack.c.l.b16 %v1838
        %v2424 = vunpack.c.h.b16 %v1838
        %v2425 = vunpack.c.l.b16 %v1839
        %v2426 = vunpack.c.h.b16 %v1839
        %v2427 = vunpack.c.l.b16 %v1840
        %v2428 = vunpack.c.h.b16 %v1840
        %v2429 = vunpack.c.l.b16 %v1841
        %v2430 = vunpack.c.h.b16 %v1841
        %v2431 = vunpack.c.l.b16 %v1842
        %v2432 = vunpack.c.h.b16 %v1842
        %v2433 = vunpack.c.l.b16 %v1843
        %v2434 = vunpack.c.h.b16 %v1843
        %v2435 = vunpack.c.l.b16 %v1844
        %v2436 = vunpack.c.h.b16 %v1844
        %v2437 = vunpack.c.l.b16 %v1845
        %v2438 = vunpack.c.h.b16 %v1845
        %v2439 = vunpack.c.l.b16 %v1846
        %v2440 = vunpack.c.h.b16 %v1846
        %v2441 = vunpack.c.l.b16 %v1847
        %v2442 = vunpack.c.h.b16 %v1847
        %v2443 = vunpack.c.l.b16 %v1848
        %v2444 = vunpack.c.h.b16 %v1848
        %v2445 = vunpack.c.l.b16 %v1849
        %v2446 = vunpack.c.h.b16 %v1849
        %v2447 = vunpack.c.l.b16 %v1850
        %v2448 = vunpack.c.h.b16 %v1850
        %v2449 = vunpack.c.l.b16 %v1851
        %v2450 = vunpack.c.h.b16 %v1851
        %v2451 = vunpack.c.l.b16 %v1852
        %v2452 = vunpack.c.h.b16 %v1852
        %v2453 = vunpack.c.l.b16 %v1853
        %v2454 = vunpack.c.h.b16 %v1853
        %v2455 = vunpack.c.l.b16 %v1854
        %v2456 = vunpack.c.h.b16 %v1854
        %v2457 = vunpack.c.l.b16 %v1855
        %v2458 = vunpack.c.h.b16 %v1855
        %v2459 = vunpack.c.l.b16 %v1856
        %v2460 = vunpack.c.h.b16 %v1856
        %v2461 = vunpack.c.l.b16 %v1857
        %v2462 = vunpack.c.h.b16 %v1857
        %v2463 = vunpack.c.l.b16 %v1858
        %v2464 = vunpack.c.h.b16 %v1858
        %v2465 = vunpack.c.l.b16 %v1859
        %v2466 = vunpack.c.h.b16 %v1859
        %v2467 = vunpack.c.l.b16 %v1860
        %v2468 = vunpack.c.h.b16 %v1860
        %v2469 = vunpack.c.l.b16 %v1861
        %v2470 = vunpack.c.h.b16 %v1861
        %v2471 = vunpack.c.l.b16 %v1862
        %v2472 = vunpack.c.h.b16 %v1862
        %v2473 = vunpack.c.l.b16 %v1863
        %v2474 = vunpack.c.h.b16 %v1863
        %v2475 = vunpack.c.l.b16 %v1864
        %v2476 = vunpack.c.h.b16 %v1864
        %v2477 = vunpack.c.l.b16 %v1865
        %v2478 = vunpack.c.h.b16 %v1865
        %v2479 = vunpack.c.l.b16 %v1866
        %v2480 = vunpack.c.h.b16 %v1866
        %v2481 = vunpack.c.l.b16 %v1867
        %v2482 = vunpack.c.h.b16 %v1867
        %v2483 = vunpack.c.l.b16 %v1868
        %v2484 = vunpack.c.h.b16 %v1868
        %v2485 = vunpack.c.l.b16 %v1869
        %v2486 = vunpack.c.h.b16 %v1869
        %v2487 = vunpack.c.l.b16 %v1870
        %v2488 = vunpack.c.h.b16 %v1870
        %v2489 = vunpack.c.l.b16 %v1871
        %v2490 = vunpack.c.h.b16 %v1871
        %v2491 = vunpack.c.l.b16 %v1872
        %v2492 = vunpack.c.h.b16 %v1872
        %v2493 = vunpack.c.l.b16 %v1873
        %v2494 = vunpack.c.h.b16 %v1873
        %v2495 = vunpack.c.l.b16 %v1874
        %v2496 = vunpack.c.h.b16 %v1874
        %v2497 = vunpack.c.l.b16 %v1875
        %v2498 = vunpack.c.h.b16 %v1875
        %v2499 = vunpack.c.l.b16 %v1876
        %v2500 = vunpack.c.h.b16 %v1876
        %v2501 = vunpack.c.l.b16 %v1877
        %v2502 = vunpack.c.h.b16 %v1877
        %v2503 = vunpack.c.l.b16 %v1878
        %v2504 = vunpack.c.h.b16 %v1878
        %v2505 = vunpack.c.l.b16 %v1879
        %v2506 = vunpack.c.h.b16 %v1879
        %v2507 = vunpack.c.l.b16 %v1880
        %v2508 = vunpack.c.h.b16 %v1880
        %v2509 = vunpack.c.l.b16 %v1881
        %v2510 = vunpack.c.h.b16 %v1881
        %v2511 = vunpack.c.l.b16 %v1882
        %v2512 = vunpack.c.h.b16 %v1882
        %v2513 = vunpack.c.l.b16 %v1883
        %v2514 = vunpack.c.h.b16 %v1883
        %v2515 = vunpack.c.l.b16 %v1884
        %v2516 = vunpack.c.h.b16 %v1884
        %v2517 = vunpack.c.l.b16 %v1885
        %v2518 = vunpack.c.h.b16 %v1885
        %v2519 = vunpack.c.l.b16 %v1886
        %v2520 = vunpack.c.h.b16 %v1886
        %v2521 = vunpack.c.l.b16 %v1887
        %v2522 = vunpack.c.h.b16 %v1887
        %v2523 = vunpack.c.l.b16 %v1888
        %v2524 = vunpack.c.h.b16 %v1888
        %v2525 = vunpack.c.l.b16 %v1889
        %v2526 = vunpack.c.h.b16 %v1889
        %v2527 = vunpack.c.l.b16 %v1890
        %v2528 = vunpack.c.h.b16 %v1890
        %v2529 = vunpack.c.l.b16 %v1891
        %v2530 = vunpack.c.h.b16 %v1891
        %v2531 = vunpack.c.l.b16 %v1892
        %v2532 = vunpack.c.h.b16 %v1892
        %v2533 = vunpack.c.l.b16 %v1893
        %v2534 = vunpack.c.h.b16 %v1893
        %v2535 = vunpack.c.l.b16 %v1894
        %v2536 = vunpack.c.h.b16 %v1894
        %v2537 = vunpack.c.l.b16 %v1895
        %v2538 = vunpack.c.h.b16 %v1895
        %v2539 = vunpack.c.l.b16 %v1896
        %v2540 = vunpack.c.h.b16 %v1896
        %v2541 = vunpack.c.l.b16 %v1897
        %v2542 = vunpack.c.h.b16 %v1897
        %v2543 = vunpack.c.l.b16 %v1898
        %v2544 = vunpack.c.h.b16 %v1898
        %v2545 = vunpack.c.l.b16 %v1899
        %v2546 = vunpack.c.h.b16 %v1899
        %v2547 = vunpack.c.l.b16 %v1900
        %v2548 = vunpack.c.h.b16 %v1900
        %v2549 = vunpack.c.l.b16 %v1901
        %v2550 = vunpack.c.h.b16 %v1901
        %v2551 = vunpack.c.l.b16 %v1902
        %v2552 = vunpack.c.h.b16 %v1902
        %v2553 = vunpack.c.l.b16 %v1903
        %v2554 = vunpack.c.h.b16 %v1903
        %v2555 = vunpack.c.l.b16 %v1904
        %v2556 = vunpack.c.h.b16 %v1904
        %v2557 = vunpack.c.l.b16 %v1905
        %v2558 = vunpack.c.h.b16 %v1905
        %v2559 = vunpack.c.l.b16 %v1906
        %v2560 = vunpack.c.h.b16 %v1906
        %v2561 = vunpack.c.l.b16 %v1907
        %v2562 = vunpack.c.h.b16 %v1907
        %v2563 = vunpack.c.l.b16 %v1908
        %v2564 = vunpack.c.h.b16 %v1908
        %v2565 = vunpack.c.l.b16 %v1909
        %v2566 = vunpack.c.h.b16 %v1909
        %v2567 = vunpack.c.l.b16 %v1910
        %v2568 = vunpack.c.h.b16 %v1910
        %v2569 = vunpack.c.l.b16 %v1911
        %v2570 = vunpack.c.h.b16 %v1911
        %v2571 = vunpack.c.l.b16 %v1912
        %v2572 = vunpack.c.h.b16 %v1912
        %v2573 = vunpack.c.l.b16 %v1913
        %v2574 = vunpack.c.h.b16 %v1913
        %v2575 = vunpack.c.l.b16 %v1914
        %v2576 = vunpack.c.h.b16 %v1914
        %v2577 = vunpack.c.l.b16 %v1915
        %v2578 = vunpack.c.h.b16 %v1915
        %v2579 = vunpack.c.l.b16 %v1916
        %v2580 = vunpack.c.h.b16 %v1916
        %v2581 = vunpack.c.l.b16 %v1917
        %v2582 = vunpack.c.h.b16 %v1917
        %v2583 = vunpack.c.l.b16 %v1918
        %v2584 = vunpack.c.h.b16 %v1918
        %v2585 = vunpack.c.l.b16 %v1919
        %v2586 = vunpack.c.h.b16 %v1919
        %v2587 = vunpack.c.l.b16 %v1920
        %v2588 = vunpack.c.h.b16 %v1920
        %v2589 = vunpack.c.l.b16 %v1921
        %v2590 = vunpack.c.h.b16 %v1921
        %v2591 = vunpack.c.l.b16 %v1922
        %v2592 = vunpack.c.h.b16 %v1922
        %v2593 = vunpack.c.l.b16 %v1923
        %v2594 = vunpack.c.h.b16 %v1923
        %v2595 = vunpack.c.l.b16 %v1924
        %v2596 = vunpack.c.h.b16 %v1924
        %v2597 = vunpack.c.l.b16 %v1925
        %v2598 = vunpack.c.h.b16 %v1925
        %v2599 = vunpack.c.l.b16 %v1926
        %v2600 = vunpack.c.h.b16 %v1926
        %v2601 = vunpack.c.l.b16 %v1927
        %v2602 = vunpack.c.h.b16 %v1927
        %v2603 = vunpack.c.l.b16 %v1928
        %v2604 = vunpack.c.h.b16 %v1928
        %v2605 = vunpack.c.l.b16 %v1929
        %v2606 = vunpack.c.h.b16 %v1929
        %v2607 = vunpack.c.l.b16 %v1930
        %v2608 = vunpack.c.h.b16 %v1930
        %v2609 = vunpack.c.l.b16 %v1931
        %v2610 = vunpack.c.h.b16 %v1931
        %v2611 = vunpack.c.l.b16 %v1932
        %v2612 = vunpack.c.h.b16 %v1932
        %v2613 = vunpack.c.l.b16 %v1933
        %v2614 = vunpack.c.h.b16 %v1933
        %v2615 = vunpack.c.l.b16 %v1934
        %v2616 = vunpack.c.h.b16 %v1934
        %v2617 = vunpack.c.l.b16 %v1935
        %v2618 = vunpack.c.h.b16 %v1935
        %v2619 = vunpack.c.l.b16 %v1936
        %v2620 = vunpack.c.h.b16 %v1936
        %v2621 = vunpack.c.l.b16 %v1937
        %v2622 = vunpack.c.h.b16 %v1937
        %v2623 = vunpack.c.l.b16 %v1938
        %v2624 = vunpack.c.h.b16 %v1938
        %v2625 = vunpack.c.l.b16 %v1939
        %v2626 = vunpack.c.h.b16 %v1939
        %v2627 = vunpack.c.l.b16 %v1940
        %v2628 = vunpack.c.h.b16 %v1940
        %v2629 = vunpack.c.l.b16 %v1941
        %v2630 = vunpack.c.h.b16 %v1941
        %v2631 = vunpack.c.l.b16 %v1942
        %v2632 = vunpack.c.h.b16 %v1942
        %v2633 = vunpack.c.l.b16 %v1943
        %v2634 = vunpack.c.h.b16 %v1943
        %v2635 = vunpack.c.l.b16 %v1944
        %v2636 = vunpack.c.h.b16 %v1944
        %v2637 = vunpack.c.l.b16 %v1945
        %v2638 = vunpack.c.h.b16 %v1945
        %v2639 = vunpack.c.l.b16 %v1946
        %v2640 = vunpack.c.h.b16 %v1946
        %v2641 = vunpack.c.l.b16 %v1947
        %v2642 = vunpack.c.h.b16 %v1947
        %v2643 = vunpack.c.l.b16 %v1948
        %v2644 = vunpack.c.h.b16 %v1948
        %v2645 = vunpack.c.l.b16 %v1949
        %v2646 = vunpack.c.h.b16 %v1949
        %v2647 = vunpack.c.l.b16 %v1950
        %v2648 = vunpack.c.h.b16 %v1950
        %v2649 = vunpack.c.l.b16 %v1951
        %v2650 = vunpack.c.h.b16 %v1951
        %v2651 = vunpack.c.l.b16 %v1952
        %v2652 = vunpack.c.h.b16 %v1952
        %v2653 = vunpack.c.l.b16 %v1953
        %v2654 = vunpack.c.h.b16 %v1953
        %v2655 = vunpack.c.l.b16 %v1954
        %v2656 = vunpack.c.h.b16 %v1954
        %v2657 = vunpack.c.l.b16 %v1955
        %v2658 = vunpack.c.h.b16 %v1955
        %v2659 = vunpack.c.l.b16 %v1956
        %v2660 = vunpack.c.h.b16 %v1956
        %v2661 = vunpack.c.l.b16 %v1957
        %v2662 = vunpack.c.h.b16 %v1957
        %v2663 = vunpack.c.l.b16 %v1958
        %v2664 = vunpack.c.h.b16 %v1958
        %v2665 = vunpack.c.l.b16 %v1959
        %v2666 = vunpack.c.h.b16 %v1959
        %v2667 = vunpack.c.l.b16 %v1960
        %v2668 = vunpack.c.h.b16 %v1960
        %v2669 = vunpack.c.l.b16 %v1961
        %v2670 = vunpack.c.h.b16 %v1961
        %v2671 = vunpack.c.l.b16 %v1962
        %v2672 = vunpack.c.h.b16 %v1962
        %v2673 = vunpack.c.l.b16 %v1963
        %v2674 = vunpack.c.h.b16 %v1963
        %v2675 = vunpack.c.l.b16 %v1964
        %v2676 = vunpack.c.h.b16 %v1964
        %v2677 = vunpack.c.l.b16 %v1965
        %v2678 = vunpack.c.h.b16 %v1965
        %v2679 = vunpack.c.l.b16 %v1966
        %v2680 = vunpack.c.h.b16 %v1966
        %v2681 = vunpack.c.l.b16 %v1967
        %v2682 = vunpack.c.h.b16 %v1967
        %v2683 = vunpack.c.l.b16 %v1968
        %v2684 = vunpack.c.h.b16 %v1968
        %v2685 = vunpack.c.l.b16 %v1969
        %v2686 = vunpack.c.h.b16 %v1969
        %v2687 = vunpack.c.l.b16 %v1970
        %v2688 = vunpack.c.h.b16 %v1970
        %v2689 = vunpack.c.l.b16 %v1971
        %v2690 = vunpack.c.h.b16 %v1971
        %v2691 = vunpack.c.l.b16 %v1972
        %v2692 = vunpack.c.h.b16 %v1972
        %v2693 = vunpack.c.l.b16 %v1973
        %v2694 = vunpack.c.h.b16 %v1973
        %v2695 = vunpack.c.l.b16 %v1974
        %v2696 = vunpack.c.h.b16 %v1974
        %v2697 = vunpack.c.l.b16 %v1975
        %v2698 = vunpack.c.h.b16 %v1975
        %v2699 = vunpack.c.l.b16 %v1976
        %v2700 = vunpack.c.h.b16 %v1976
        %v2701 = vunpack.c.l.b16 %v1977
        %v2702 = vunpack.c.h.b16 %v1977
        %v2703 = vunpack.c.l.b16 %v1978
        %v2704 = vunpack.c.h.b16 %v1978
        %v2705 = vunpack.c.l.b16 %v1979
        %v2706 = vunpack.c.h.b16 %v1979
        %v2707 = vunpack.c.l.b16 %v1980
        %v2708 = vunpack.c.h.b16 %v1980
        %v2709 = vunpack.c.l.b16 %v1981
        %v2710 = vunpack.c.h.b16 %v1981
        %v2711 = vunpack.c.l.b16 %v1982
        %v2712 = vunpack.c.h.b16 %v1982
        %v2713 = vunpack.c.l.b16 %v1983
        %v2714 = vunpack.c.h.b16 %v1983
        %v2715 = vunpack.c.l.b16 %v1984
        %v2716 = vunpack.c.h.b16 %v1984
        %v2717 = vunpack.c.l.b16 %v1985
        %v2718 = vunpack.c.h.b16 %v1985
        %v2719 = vunpack.c.l.b16 %v1986
        %v2720 = vunpack.c.h.b16 %v1986
        %v2721 = vunpack.c.l.b16 %v1987
        %v2722 = vunpack.c.h.b16 %v1987
        %v2723 = vunpack.c.l.b16 %v1988
        %v2724 = vunpack.c.h.b16 %v1988
        %v2725 = vunpack.c.l.b16 %v1989
        %v2726 = vunpack.c.h.b16 %v1989
        %v2727 = vunpack.c.l.b16 %v1990
        %v2728 = vunpack.c.h.b16 %v1990
        %v2729 = vunpack.c.l.b16 %v1991
        %v2730 = vunpack.c.h.b16 %v1991
        %v2731 = vunpack.c.l.b16 %v1992
        %v2732 = vunpack.c.h.b16 %v1992
        %v2733 = vunpack.c.l.b16 %v1993
        %v2734 = vunpack.c.h.b16 %v1993
        %v2735 = vunpack.c.l.b16 %v1994
        %v2736 = vunpack.c.h.b16 %v1994
        %v2737 = vunpack.c.l.b16 %v1995
        %v2738 = vunpack.c.h.b16 %v1995
        %v2739 = vunpack.c.l.b16 %v1996
        %v2740 = vunpack.c.h.b16 %v1996
        %v2741 = vunpack.c.l.b16 %v1997
        %v2742 = vunpack.c.h.b16 %v1997
        %v2743 = vunpack.c.l.b16 %v1998
        %v2744 = vunpack.c.h.b16 %v1998
        %v2745 = vunpack.c.l.b16 %v1999
        %v2746 = vunpack.c.h.b16 %v1999
        %v2747 = vunpack.c.l.b16 %v2000
        %v2748 = vunpack.c.h.b16 %v2000
        %v2749 = vunpack.c.l.b16 %v2001
        %v2750 = vunpack.c.h.b16 %v2001
        %v2751 = vunpack.c.l.b16 %v2002
        %v2752 = vunpack.c.h.b16 %v2002
        %v2753 = vunpack.c.l.b16 %v2003
        %v2754 = vunpack.c.h.b16 %v2003
        %v2755 = vunpack.c.l.b16 %v2004
        %v2756 = vunpack.c.h.b16 %v2004
        %v2757 = vunpack.c.l.b16 %v2005
        %v2758 = vunpack.c.h.b16 %v2005
        %v2759 = vunpack.c.l.b16 %v2006
        %v2760 = vunpack.c.h.b16 %v2006
        %v2761 = vunpack.c.l.b16 %v2007
        %v2762 = vunpack.c.h.b16 %v2007
        %v2763 = vunpack.c.l.b16 %v2008
        %v2764 = vunpack.c.h.b16 %v2008
        %v2765 = vunpack.c.l.b16 %v2009
        %v2766 = vunpack.c.h.b16 %v2009
        %v2767 = vunpack.c.l.b16 %v2010
        %v2768 = vunpack.c.h.b16 %v2010
        %v2769 = vunpack.c.l.b16 %v2011
        %v2770 = vunpack.c.h.b16 %v2011
        %v2771 = vunpack.c.l.b16 %v2012
        %v2772 = vunpack.c.h.b16 %v2012
        %v2773 = vunpack.c.l.b16 %v2013
        %v2774 = vunpack.c.h.b16 %v2013
        %v2775 = vunpack.c.l.b16 %v2014
        %v2776 = vunpack.c.h.b16 %v2014
        %v2777 = vunpack.c.l.b16 %v2015
        %v2778 = vunpack.c.h.b16 %v2015
        %v2779 = vunpack.c.l.b16 %v2016
        %v2780 = vunpack.c.h.b16 %v2016
        %v2781 = vunpack.c.l.b16 %v2017
        %v2782 = vunpack.c.h.b16 %v2017
        %v2783 = vunpack.c.l.b16 %v2018
        %v2784 = vunpack.c.h.b16 %v2018
        %v2785 = vunpack.c.l.b16 %v2019
        %v2786 = vunpack.c.h.b16 %v2019
        %v2787 = vunpack.c.l.b16 %v2020
        %v2788 = vunpack.c.h.b16 %v2020
        %v2789 = vunpack.c.l.b16 %v2021
        %v2790 = vunpack.c.h.b16 %v2021
        %v2791 = vunpack.c.l.b16 %v2022
        %v2792 = vunpack.c.h.b16 %v2022
        %v2793 = vunpack.c.l.b16 %v2023
        %v2794 = vunpack.c.h.b16 %v2023
        %v2795 = vunpack.c.l.b16 %v2024
        %v2796 = vunpack.c.h.b16 %v2024
        %v2797 = vunpack.c.l.b16 %v2025
        %v2798 = vunpack.c.h.b16 %v2025
        %v2799 = vunpack.c.l.b16 %v2026
        %v2800 = vunpack.c.h.b16 %v2026
        %v2801 = vunpack.c.l.b16 %v2027
        %v2802 = vunpack.c.h.b16 %v2027
        %v2803 = vunpack.c.l.b16 %v2028
        %v2804 = vunpack.c.h.b16 %v2028
        %v2805 = vunpack.c.l.b16 %v2029
        %v2806 = vunpack.c.h.b16 %v2029
        %v2807 = vunpack.c.l.b16 %v2030
        %v2808 = vunpack.c.h.b16 %v2030
        %v2809 = vunpack.c.l.b16 %v2031
        %v2810 = vunpack.c.h.b16 %v2031
        %v2811 = vunpack.c.l.b16 %v2032
        %v2812 = vunpack.c.h.b16 %v2032
        %v2813 = vunpack.c.l.b16 %v2033
        %v2814 = vunpack.c.h.b16 %v2033
        %v2815 = vunpack.c.l.b16 %v2034
        %v2816 = vunpack.c.h.b16 %v2034
        %v2817 = vunpack.c.l.b16 %v2035
        %v2818 = vunpack.c.h.b16 %v2035
        %v2819 = vunpack.c.l.b16 %v2036
        %v2820 = vunpack.c.h.b16 %v2036
        %v2821 = vunpack.c.l.b16 %v2037
        %v2822 = vunpack.c.h.b16 %v2037
        %v2823 = vunpack.c.l.b16 %v2038
        %v2824 = vunpack.c.h.b16 %v2038
        %v2825 = vunpack.c.l.b16 %v2039
        %v2826 = vunpack.c.h.b16 %v2039
        %v2827 = vunpack.c.l.b16 %v2040
        %v2828 = vunpack.c.h.b16 %v2040
        %v2829 = vunpack.c.l.b16 %v2041
        %v2830 = vunpack.c.h.b16 %v2041
        %v2831 = vunpack.c.l.b16 %v2042
        %v2832 = vunpack.c.h.b16 %v2042
        %v2833 = vunpack.c.l.b16 %v2043
        %v2834 = vunpack.c.h.b16 %v2043
        %v2835 = vunpack.c.l.b16 %v2044
        %v2836 = vunpack.c.h.b16 %v2044
        %v2837 = vunpack.c.l.b16 %v2045
        %v2838 = vunpack.c.h.b16 %v2045
        %v2839 = vunpack.c.l.b16 %v2046
        %v2840 = vunpack.c.h.b16 %v2046
        %v2841 = vunpack.c.l.b16 %v2047
        %v2842 = vunpack.c.h.b16 %v2047
        %v2843 = vunpack.c.l.b16 %v2048
        %v2844 = vunpack.c.h.b16 %v2048
        %v2845 = vunpack.c.l.b16 %v2049
        %v2846 = vunpack.c.h.b16 %v2049
        %v2847 = vunpack.c.l.b16 %v2050
        %v2848 = vunpack.c.h.b16 %v2050
        %v2849 = vunpack.c.l.b16 %v2051
        %v2850 = vunpack.c.h.b16 %v2051
        %v2851 = vunpack.c.l.b16 %v2052
        %v2852 = vunpack.c.h.b16 %v2052
        %v2853 = vunpack.c.l.b16 %v2053
        %v2854 = vunpack.c.h.b16 %v2053
        %v2855 = vunpack.c.l.b16 %v2054
        %v2856 = vunpack.c.h.b16 %v2054
        %v2857 = vunpack.c.l.b16 %v2055
        %v2858 = vunpack.c.h.b16 %v2055
        %v2859 = vunpack.c.l.b16 %v2056
        %v2860 = vunpack.c.h.b16 %v2056
        %v2861 = vunpack.c.l.b16 %v2057
        %v2862 = vunpack.c.h.b16 %v2057
        %v2863 = vunpack.c.l.b16 %v2058
        %v2864 = vunpack.c.h.b16 %v2058
        %v2865 = vunpack.c.l.b16 %v2059
        %v2866 = vunpack.c.h.b16 %v2059
        %v2867 = vunpack.c.l.b16 %v2060
        %v2868 = vunpack.c.h.b16 %v2060
        %v2869 = vunpack.c.l.b16 %v2061
        %v2870 = vunpack.c.h.b16 %v2061
        %v2871 = vunpack.c.l.b16 %v2062
        %v2872 = vunpack.c.h.b16 %v2062
        %v2873 = vunpack.c.l.b16 %v2063
        %v2874 = vunpack.c.h.b16 %v2063
        %v2875 = vunpack.c.l.b16 %v2064
        %v2876 = vunpack.c.h.b16 %v2064
        %v2877 = vunpack.c.l.b16 %v2065
        %v2878 = vunpack.c.h.b16 %v2065
        %v2879 = vunpack.c.l.b16 %v2066
        %v2880 = vunpack.c.h.b16 %v2066
        %v2881 = vunpack.c.l.b16 %v2067
        %v2882 = vunpack.c.h.b16 %v2067
        %v2883 = vunpack.c.l.b16 %v2068
        %v2884 = vunpack.c.h.b16 %v2068
        %v2885 = vunpack.c.l.b16 %v2069
        %v2886 = vunpack.c.h.b16 %v2069
        %v2887 = vunpack.c.l.b16 %v2070
        %v2888 = vunpack.c.h.b16 %v2070
        %v2889 = vpack.c.b16 %v2377, %v2373
        %v2890 = vpack.c.b16 %v2378, %v2374
        %v2891 = vpack.c.b16 %v2379, %v2375
        %v2892 = vpack.c.b16 %v2380, %v2376
        %v2893 = vpack.c.b16 %v2385, %v2381
        %v2894 = vpack.c.b16 %v2386, %v2382
        %v2895 = vpack.c.b16 %v2387, %v2383
        %v2896 = vpack.c.b16 %v2388, %v2384
        %v2897 = vpack.c.b16 %v2393, %v2389
        %v2898 = vpack.c.b16 %v2394, %v2390
        %v2899 = vpack.c.b16 %v2395, %v2391
        %v2900 = vpack.c.b16 %v2396, %v2392
        %v2901 = vpack.c.b16 %v2401, %v2397
        %v2902 = vpack.c.b16 %v2402, %v2398
        %v2903 = vpack.c.b16 %v2403, %v2399
        %v2904 = vpack.c.b16 %v2404, %v2400
        %v2905 = vpack.c.b16 %v2409, %v2405
        %v2906 = vpack.c.b16 %v2410, %v2406
        %v2907 = vpack.c.b16 %v2411, %v2407
        %v2908 = vpack.c.b16 %v2412, %v2408
        %v2909 = vpack.c.b16 %v2417, %v2413
        %v2910 = vpack.c.b16 %v2418, %v2414
        %v2911 = vpack.c.b16 %v2419, %v2415
        %v2912 = vpack.c.b16 %v2420, %v2416
        %v2913 = vpack.c.b16 %v2425, %v2421
        %v2914 = vpack.c.b16 %v2426, %v2422
        %v2915 = vpack.c.b16 %v2427, %v2423
        %v2916 = vpack.c.b16 %v2428, %v2424
        %v2917 = vpack.c.b16 %v2433, %v2429
        %v2918 = vpack.c.b16 %v2434, %v2430
        %v2919 = vpack.c.b16 %v2435, %v2431
        %v2920 = vpack.c.b16 %v2436, %v2432
        %v2921 = vpack.c.b16 %v2441, %v2437
        %v2922 = vpack.c.b16 %v2442, %v2438
        %v2923 = vpack.c.b16 %v2443, %v2439
        %v2924 = vpack.c.b16 %v2444, %v2440
        %v2925 = vpack.c.b16 %v2449, %v2445
        %v2926 = vpack.c.b16 %v2450, %v2446
        %v2927 = vpack.c.b16 %v2451, %v2447
        %v2928 = vpack.c.b16 %v2452, %v2448
        %v2929 = vpack.c.b16 %v2457, %v2453
        %v2930 = vpack.c.b16 %v2458, %v2454
        %v2931 = vpack.c.b16 %v2459, %v2455
        %v2932 = vpack.c.b16 %v2460, %v2456
        %v2933 = vpack.c.b16 %v2465, %v2461
        %v2934 = vpack.c.b16 %v2466, %v2462
        %v2935 = vpack.c.b16 %v2467, %v2463
        %v2936 = vpack.c.b16 %v2468, %v2464
        %v2937 = vpack.c.b16 %v2473, %v2469
        %v2938 = vpack.c.b16 %v2474, %v2470
        %v2939 = vpack.c.b16 %v2475, %v2471
        %v2940 = vpack.c.b16 %v2476, %v2472
        %v2941 = vpack.c.b16 %v2481, %v2477
        %v2942 = vpack.c.b16 %v2482, %v2478
        %v2943 = vpack.c.b16 %v2483, %v2479
        %v2944 = vpack.c.b16 %v2484, %v2480
        %v2945 = vpack.c.b16 %v2489, %v2485
        %v2946 = vpack.c.b16 %v2490, %v2486
        %v2947 = vpack.c.b16 %v2491, %v2487
        %v2948 = vpack.c.b16 %v2492, %v2488
        %v2949 = vpack.c.b16 %v2497, %v2493
        %v2950 = vpack.c.b16 %v2498, %v2494
        %v2951 = vpack.c.b16 %v2499, %v2495
        %v2952 = vpack.c.b16 %v2500, %v2496
        %v2953 = vpack.c.b16 %v2505, %v2501
        %v2954 = vpack.c.b16 %v2506, %v2502
        %v2955 = vpack.c.b16 %v2507, %v2503
        %v2956 = vpack.c.b16 %v2508, %v2504
        %v2957 = vpack.c.b16 %v2513, %v2509
        %v2958 = vpack.c.b16 %v2514, %v2510
        %v2959 = vpack.c.b16 %v2515, %v2511
        %v2960 = vpack.c.b16 %v2516, %v2512
        %v2961 = vpack.c.b16 %v2521, %v2517
        %v2962 = vpack.c.b16 %v2522, %v2518
        %v2963 = vpack.c.b16 %v2523, %v2519
        %v2964 = vpack.c.b16 %v2524, %v2520
        %v2965 = vpack.c.b16 %v2529, %v2525
        %v2966 = vpack.c.b16 %v2530, %v2526
        %v2967 = vpack.c.b16 %v2531, %v2527
        %v2968 = vpack.c.b16 %v2532, %v2528
        %v2969 = vpack.c.b16 %v2537, %v2533
        %v2970 = vpack.c.b16 %v2538, %v2534
        %v2971 = vpack.c.b16 %v2539, %v2535
        %v2972 = vpack.c.b16 %v2540, %v2536
        %v2973 = vpack.c.b16 %v2545, %v2541
        %v2974 = vpack.c.b16 %v2546, %v2542
        %v2975 = vpack.c.b16 %v2547, %v2543
        %v2976 = vpack.c.b16 %v2548, %v2544
        %v2977 = vpack.c.b16 %v2553, %v2549
        %v2978 = vpack.c.b16 %v2554, %v2550
        %v2979 = vpack.c.b16 %v2555, %v2551
        %v2980 = vpack.c.b16 %v2556, %v2552
        %v2981 = vpack.c.b16 %v2561, %v2557
        %v2982 = vpack.c.b16 %v2562, %v2558
        %v2983 = vpack.c.b16 %v2563, %v2559
        %v2984 = vpack.c.b16 %v2564, %v2560
        %v2985 = vpack.c.b16 %v2569, %v2565
        %v2986 = vpack.c.b16 %v2570, %v2566
        %v2987 = vpack.c.b16 %v2571, %v2567
        %v2988 = vpack.c.b16 %v2572, %v2568
        %v2989 = vpack.c.b16 %v2577, %v2573
        %v2990 = vpack.c.b16 %v2578, %v2574
        %v2991 = vpack.c.b16 %v2579, %v2575
        %v2992 = vpack.c.b16 %v2580, %v2576
        %v2993 = vpack.c.b16 %v2585, %v2581
        %v2994 = vpack.c.b16 %v2586, %v2582
        %v2995 = vpack.c.b16 %v2587, %v2583
        %v2996 = vpack.c.b16 %v2588, %v2584
        %v2997 = vpack.c.b16 %v2593, %v2589
        %v2998 = vpack.c.b16 %v2594, %v2590
        %v2999 = vpack.c.b16 %v2595, %v2591
        %v3000 = vpack.c.b16 %v2596, %v2592
        %v3001 = vpack.c.b16 %v2601, %v2597
        %v3002 = vpack.c.b16 %v2602, %v2598
        %v3003 = vpack.c.b16 %v2603, %v2599
        %v3004 = vpack.c.b16 %v2604, %v2600
        %v3005 = vpack.c.b16 %v2609, %v2605
        %v3006 = vpack.c.b16 %v2610, %v2606
        %v3007 = vpack.c.b16 %v2611, %v2607
        %v3008 = vpack.c.b16 %v2612, %v2608
        %v3009 = vpack.c.b16 %v2617, %v2613
        %v3010 = vpack.c.b16 %v2618, %v2614
        %v3011 = vpack.c.b16 %v2619, %v2615
        %v3012 = vpack.c.b16 %v2620, %v2616
        %v3013 = vpack.c.b16 %v2625, %v2621
        %v3014 = vpack.c.b16 %v2626, %v2622
        %v3015 = vpack.c.b16 %v2627, %v2623
        %v3016 = vpack.c.b16 %v2628, %v2624
        %v3017 = vpack.c.b16 %v2633, %v2629
        %v3018 = vpack.c.b16 %v2634, %v2630
        %v3019 = vpack.c.b16 %v2635, %v2631
        %v3020 = vpack.c.b16 %v2636, %v2632
        %v3021 = vpack.c.b16 %v2641, %v2637
        %v3022 = vpack.c.b16 %v2642, %v2638
        %v3023 = vpack.c.b16 %v2643, %v2639
        %v3024 = vpack.c.b16 %v2644, %v2640
        %v3025 = vpack.c.b16 %v2649, %v2645
        %v3026 = vpack.c.b16 %v2650, %v2646
        %v3027 = vpack.c.b16 %v2651, %v2647
        %v3028 = vpack.c.b16 %v2652, %v2648
        %v3029 = vpack.c.b16 %v2657, %v2653
        %v3030 = vpack.c.b16 %v2658, %v2654
        %v3031 = vpack.c.b16 %v2659, %v2655
        %v3032 = vpack.c.b16 %v2660, %v2656
        %v3033 = vpack.c.b16 %v2665, %v2661
        %v3034 = vpack.c.b16 %v2666, %v2662
        %v3035 = vpack.c.b16 %v2667, %v2663
        %v3036 = vpack.c.b16 %v2668, %v2664
        %v3037 = vpack.c.b16 %v2673, %v2669
        %v3038 = vpack.c.b16 %v2674, %v2670
        %v3039 = vpack.c.b16 %v2675, %v2671
        %v3040 = vpack.c.b16 %v2676, %v2672
        %v3041 = vpack.c.b16 %v2681, %v2677
        %v3042 = vpack.c.b16 %v2682, %v2678
        %v3043 = vpack.c.b16 %v2683, %v2679
        %v3044 = vpack.c.b16 %v2684, %v2680
        %v3045 = vpack.c.b16 %v2689, %v2685
        %v3046 = vpack.c.b16 %v2690, %v2686
        %v3047 = vpack.c.b16 %v2691, %v2687
        %v3048 = vpack.c.b16 %v2692, %v2688
        %v3049 = vpack.c.b16 %v2697, %v2693
        %v3050 = vpack.c.b16 %v2698, %v2694
        %v3051 = vpack.c.b16 %v2699, %v2695
        %v3052 = vpack.c.b16 %v2700, %v2696
        %v3053 = vpack.c.b16 %v2705, %v2701
        %v3054 = vpack.c.b16 %v2706, %v2702
        %v3055 = vpack.c.b16 %v2707, %v2703
        %v3056 = vpack.c.b16 %v2708, %v2704
        %v3057 = vpack.c.b16 %v2713, %v2709
        %v3058 = vpack.c.b16 %v2714, %v2710
        %v3059 = vpack.c.b16 %v2715, %v2711
        %v3060 = vpack.c.b16 %v2716, %v2712
        %v3061 = vpack.c.b16 %v2721, %v2717
        %v3062 = vpack.c.b16 %v2722, %v2718
        %v3063 = vpack.c.b16 %v2723, %v2719
        %v3064 = vpack.c.b16 %v2724, %v2720
        %v3065 = vpack.c.b16 %v2729, %v2725
        %v3066 = vpack.c.b16 %v2730, %v2726
        %v3067 = vpack.c.b16 %v2731, %v2727
        %v3068 = vpack.c.b16 %v2732, %v2728
        %v3069 = vpack.c.b16 %v2737, %v2733
        %v3070 = vpack.c.b16 %v2738, %v2734
        %v3071 = vpack.c.b16 %v2739, %v2735
        %v3072 = vpack.c.b16 %v2740, %v2736
        %v3073 = vpack.c.b16 %v2745, %v2741
        %v3074 = vpack.c.b16 %v2746, %v2742
        %v3075 = vpack.c.b16 %v2747, %v2743
        %v3076 = vpack.c.b16 %v2748, %v2744
        %v3077 = vpack.c.b16 %v2753, %v2749
        %v3078 = vpack.c.b16 %v2754, %v2750
        %v3079 = vpack.c.b16 %v2755, %v2751
        %v3080 = vpack.c.b16 %v2756, %v2752
        %v3081 = vpack.c.b16 %v2761, %v2757
        %v3082 = vpack.c.b16 %v2762, %v2758
        %v3083 = vpack.c.b16 %v2763, %v2759
        %v3084 = vpack.c.b16 %v2764, %v2760
        %v3085 = vpack.c.b16 %v2769, %v2765
        %v3086 = vpack.c.b16 %v2770, %v2766
        %v3087 = vpack.c.b16 %v2771, %v2767
        %v3088 = vpack.c.b16 %v2772, %v2768
        %v3089 = vpack.c.b16 %v2777, %v2773
        %v3090 = vpack.c.b16 %v2778, %v2774
        %v3091 = vpack.c.b16 %v2779, %v2775
        %v3092 = vpack.c.b16 %v2780, %v2776
        %v3093 = vpack.c.b16 %v2785, %v2781
        %v3094 = vpack.c.b16 %v2786, %v2782
        %v3095 = vpack.c.b16 %v2787, %v2783
        %v3096 = vpack.c.b16 %v2788, %v2784
        %v3097 = vpack.c.b16 %v2793, %v2789
        %v3098 = vpack.c.b16 %v2794, %v2790
        %v3099 = vpack.c.b16 %v2795, %v2791
        %v3100 = vpack.c.b16 %v2796, %v2792
        %v3101 = vpack.c.b16 %v2801, %v2797
        %v3102 = vpack.c.b16 %v2802, %v2798
        %v3103 = vpack.c.b16 %v2803, %v2799
        %v3104 = vpack.c.b16 %v2804, %v2800
        %v3105 = vpack.c.b16 %v2809, %v2805
        %v3106 = vpack.c.b16 %v2810, %v2806
        %v3107 = vpack.c.b16 %v2811, %v2807
        %v3108 = vpack.c.b16 %v2812, %v2808
        %v3109 = vpack.c.b16 %v2817, %v2813
        %v3110 = vpack.c.b16 %v2818, %v2814
        %v3111 = vpack.c.b16 %v2819, %v2815
        %v3112 = vpack.c.b16 %v2820, %v2816
        %v3113 = vpack.c.b16 %v2825, %v2821
        %v3114 = vpack.c.b16 %v2826, %v2822
        %v3115 = vpack.c.b16 %v2827, %v2823
        %v3116 = vpack.c.b16 %v2828, %v2824
        %v3117 = vpack.c.b16 %v2833, %v2829
        %v3118 = vpack.c.b16 %v2834, %v2830
        %v3119 = vpack.c.b16 %v2835, %v2831
        %v3120 = vpack.c.b16 %v2836, %v2832
        %v3121 = vpack.c.b16 %v2841, %v2837
        %v3122 = vpack.c.b16 %v2842, %v2838
        %v3123 = vpack.c.b16 %v2843, %v2839
        %v3124 = vpack.c.b16 %v2844, %v2840
        %v3125 = vpack.c.b16 %v2849, %v2845
        %v3126 = vpack.c.b16 %v2850, %v2846
        %v3127 = vpack.c.b16 %v2851, %v2847
        %v3128 = vpack.c.b16 %v2852, %v2848
        %v3129 = vpack.c.b16 %v2857, %v2853
        %v3130 = vpack.c.b16 %v2858, %v2854
        %v3131 = vpack.c.b16 %v2859, %v2855
        %v3132 = vpack.c.b16 %v2860, %v2856
        %v3133 = vpack.c.b16 %v2865, %v2861
        %v3134 = vpack.c.b16 %v2866, %v2862
        %v3135 = vpack.c.b16 %v2867, %v2863
        %v3136 = vpack.c.b16 %v2868, %v2864
        %v3137 = vpack.c.b16 %v2873, %v2869
        %v3138 = vpack.c.b16 %v2874, %v2870
        %v3139 = vpack.c.b16 %v2875, %v2871
        %v3140 = vpack.c.b16 %v2876, %v2872
        %v3141 = vpack.c.b16 %v2881, %v2877
        %v3142 = vpack.c.b16 %v2882, %v2878
        %v3143 = vpack.c.b16 %v2883, %v2879
        %v3144 = vpack.c.b16 %v2884, %v2880
        %v3145 = vpack.c.b16 %v2885, %v2885
        %v3146 = vpack.c.b16 %v2886, %v2886
        %v3147 = vpack.c.b16 %v2887, %v2887
        %v3148 = vpack.c.b16 %v2888, %v2888
        %vm3405 = vcmask 64512
        %v3407 = vsel %vm3405, %v2105, 0
        %vm3409 = vcmask 1043456
        %v3411 = vsel %vm3409, %v3145, 0
        %v3414 = vsel %vm3409, %v3146, 0
        %v3417 = vsel %vm3409, %v3147, 0
        %v3420 = vsel %vm3409, %v3148, 0
        %3422 = vmatpush.bf16.msra.mxu0 %v2917
        %3423 = vmatpush.bf16.msra.mxu0 %v2913
        %3424 = vmatpush.bf16.msra.mxu0 %v2909
        %3425 = vmatpush.bf16.msra.mxu0 %v2905
        %3426 = vmatpush.bf16.msra.mxu0 %v2901
        %3427 = vmatpush.bf16.msra.mxu0 %v2897
        %3428 = vmatpush.bf16.msra.mxu0 %v2893
        %3429 = vmatpush.bf16.msra.mxu0 %v2889
        %3430 = vmatmul.bf16.gmra.mxu0 %v2097
        %v3431 = vpop.f32.mrf.mxu0
        %v3432 = vadd.f32 %v2107, %v3431
        %v3433 = vpop.f32.mrf.mxu0
        %3434 = vdwg.mxu0
        %3435 = vmatpush.bf16.msra.mxu0 %v2949
        %3436 = vmatpush.bf16.msra.mxu0 %v2945
        %3437 = vmatpush.bf16.msra.mxu0 %v2941
        %3438 = vmatpush.bf16.msra.mxu0 %v2937
        %3439 = vmatpush.bf16.msra.mxu0 %v2933
        %3440 = vmatpush.bf16.msra.mxu0 %v2929
        %3441 = vmatpush.bf16.msra.mxu0 %v2925
        %3442 = vmatpush.bf16.msra.mxu0 %v2921
        %3443 = vmatmul.bf16.gmra.mxu0 %v2098
        %v3444 = vpop.f32.mrf.mxu0
        %v3445 = vadd.f32 %v3432, %v3444
        %v3446 = vpop.f32.mrf.mxu0
        %3447 = vdwg.mxu0
        %3448 = vmatpush.bf16.msra.mxu0 %v2981
        %3449 = vmatpush.bf16.msra.mxu0 %v2977
        %3450 = vmatpush.bf16.msra.mxu0 %v2973
        %3451 = vmatpush.bf16.msra.mxu0 %v2969
        %3452 = vmatpush.bf16.msra.mxu0 %v2965
        %3453 = vmatpush.bf16.msra.mxu0 %v2961
        %3454 = vmatpush.bf16.msra.mxu0 %v2957
        %3455 = vmatpush.bf16.msra.mxu0 %v2953
        %3456 = vmatmul.bf16.gmra.mxu0 %v2099
        %v3457 = vpop.f32.mrf.mxu0
        %v3458 = vadd.f32 %v3445, %v3457
        %v3459 = vpop.f32.mrf.mxu0
        %3460 = vdwg.mxu0
        %3461 = vmatpush.bf16.msra.mxu0 %v3013
        %3462 = vmatpush.bf16.msra.mxu0 %v3009
        %3463 = vmatpush.bf16.msra.mxu0 %v3005
        %3464 = vmatpush.bf16.msra.mxu0 %v3001
        %3465 = vmatpush.bf16.msra.mxu0 %v2997
        %3466 = vmatpush.bf16.msra.mxu0 %v2993
        %3467 = vmatpush.bf16.msra.mxu0 %v2989
        %3468 = vmatpush.bf16.msra.mxu0 %v2985
        %3469 = vmatmul.bf16.gmra.mxu0 %v2100
        %v3470 = vpop.f32.mrf.mxu0
        %v3471 = vadd.f32 %v3458, %v3470
        %v3472 = vpop.f32.mrf.mxu0
        %3473 = vdwg.mxu0
        %3474 = vmatpush.bf16.msra.mxu0 %v3045
        %3475 = vmatpush.bf16.msra.mxu0 %v3041
        %3476 = vmatpush.bf16.msra.mxu0 %v3037
        %3477 = vmatpush.bf16.msra.mxu0 %v3033
        %3478 = vmatpush.bf16.msra.mxu0 %v3029
        %3479 = vmatpush.bf16.msra.mxu0 %v3025
        %3480 = vmatpush.bf16.msra.mxu0 %v3021
        %3481 = vmatpush.bf16.msra.mxu0 %v3017
        %3482 = vmatmul.bf16.gmra.mxu0 %v2101
        %v3483 = vpop.f32.mrf.mxu0
        %v3484 = vadd.f32 %v3471, %v3483
        %v3485 = vpop.f32.mrf.mxu0
        %3486 = vdwg.mxu0
        %3487 = vmatpush.bf16.msra.mxu0 %v3077
        %3488 = vmatpush.bf16.msra.mxu0 %v3073
        %3489 = vmatpush.bf16.msra.mxu0 %v3069
        %3490 = vmatpush.bf16.msra.mxu0 %v3065
        %3491 = vmatpush.bf16.msra.mxu0 %v3061
        %3492 = vmatpush.bf16.msra.mxu0 %v3057
        %3493 = vmatpush.bf16.msra.mxu0 %v3053
        %3494 = vmatpush.bf16.msra.mxu0 %v3049
        %3495 = vmatmul.bf16.gmra.mxu0 %v2102
        %v3496 = vpop.f32.mrf.mxu0
        %v3497 = vadd.f32 %v3484, %v3496
        %v3498 = vpop.f32.mrf.mxu0
        %3499 = vdwg.mxu0
        %3500 = vmatpush.bf16.msra.mxu0 %v3109
        %3501 = vmatpush.bf16.msra.mxu0 %v3105
        %3502 = vmatpush.bf16.msra.mxu0 %v3101
        %3503 = vmatpush.bf16.msra.mxu0 %v3097
        %3504 = vmatpush.bf16.msra.mxu0 %v3093
        %3505 = vmatpush.bf16.msra.mxu0 %v3089
        %3506 = vmatpush.bf16.msra.mxu0 %v3085
        %3507 = vmatpush.bf16.msra.mxu0 %v3081
        %3508 = vmatmul.bf16.gmra.mxu0 %v2103
        %v3509 = vpop.f32.mrf.mxu0
        %v3510 = vadd.f32 %v3497, %v3509
        %v3511 = vpop.f32.mrf.mxu0
        %3512 = vdwg.mxu0
        %3513 = vmatpush.bf16.msra.mxu0 %v3141
        %3514 = vmatpush.bf16.msra.mxu0 %v3137
        %3515 = vmatpush.bf16.msra.mxu0 %v3133
        %3516 = vmatpush.bf16.msra.mxu0 %v3129
        %3517 = vmatpush.bf16.msra.mxu0 %v3125
        %3518 = vmatpush.bf16.msra.mxu0 %v3121
        %3519 = vmatpush.bf16.msra.mxu0 %v3117
        %3520 = vmatpush.bf16.msra.mxu0 %v3113
        %3521 = vmatmul.bf16.gmra.mxu0 %v2104
        %v3522 = vpop.f32.mrf.mxu0
        %v3523 = vadd.f32 %v3510, %v3522
        %v3524 = vpop.f32.mrf.mxu0
        %3525 = vdwg.mxu0
        %3526 = vmatpush.bf16.msra.mxu0 0
        %3527 = vmatpush.bf16.msra.mxu0 0
        %3528 = vmatpush.bf16.msra.mxu0 0
        %3529 = vmatpush.bf16.msra.mxu0 0
        %3530 = vmatpush.bf16.msra.mxu0 0
        %3531 = vmatpush.bf16.msra.mxu0 0
        %3532 = vmatpush.bf16.msra.mxu0 0
        %3533 = vmatpush.bf16.msra.mxu0 %v3411
        %3534 = vmatmul.bf16.gmra.mxu0 %v3407
        %v3535 = vpop.f32.mrf.mxu0
        %v3536 = vadd.f32 %v3523, %v3535
        %v3537 = vpop.f32.mrf.mxu0
        %3538 = vdwg.mxu0
        %3539 = vmatpush.bf16.msra.mxu0 %v2918
        %3540 = vmatpush.bf16.msra.mxu0 %v2914
        %3541 = vmatpush.bf16.msra.mxu0 %v2910
        %3542 = vmatpush.bf16.msra.mxu0 %v2906
        %3543 = vmatpush.bf16.msra.mxu0 %v2902
        %3544 = vmatpush.bf16.msra.mxu0 %v2898
        %3545 = vmatpush.bf16.msra.mxu0 %v2894
        %3546 = vmatpush.bf16.msra.mxu0 %v2890
        %3547 = vmatmul.bf16.gmra.mxu0 %v2097
        %v3548 = vpop.f32.mrf.mxu0
        %v3549 = vadd.f32 %v2108, %v3548
        %v3550 = vpop.f32.mrf.mxu0
        %3551 = vdwg.mxu0
        %3552 = vmatpush.bf16.msra.mxu0 %v2950
        %3553 = vmatpush.bf16.msra.mxu0 %v2946
        %3554 = vmatpush.bf16.msra.mxu0 %v2942
        %3555 = vmatpush.bf16.msra.mxu0 %v2938
        %3556 = vmatpush.bf16.msra.mxu0 %v2934
        %3557 = vmatpush.bf16.msra.mxu0 %v2930
        %3558 = vmatpush.bf16.msra.mxu0 %v2926
        %3559 = vmatpush.bf16.msra.mxu0 %v2922
        %3560 = vmatmul.bf16.gmra.mxu0 %v2098
        %v3561 = vpop.f32.mrf.mxu0
        %v3562 = vadd.f32 %v3549, %v3561
        %v3563 = vpop.f32.mrf.mxu0
        %3564 = vdwg.mxu0
        %3565 = vmatpush.bf16.msra.mxu0 %v2982
        %3566 = vmatpush.bf16.msra.mxu0 %v2978
        %3567 = vmatpush.bf16.msra.mxu0 %v2974
        %3568 = vmatpush.bf16.msra.mxu0 %v2970
        %3569 = vmatpush.bf16.msra.mxu0 %v2966
        %3570 = vmatpush.bf16.msra.mxu0 %v2962
        %3571 = vmatpush.bf16.msra.mxu0 %v2958
        %3572 = vmatpush.bf16.msra.mxu0 %v2954
        %3573 = vmatmul.bf16.gmra.mxu0 %v2099
        %v3574 = vpop.f32.mrf.mxu0
        %v3575 = vadd.f32 %v3562, %v3574
        %v3576 = vpop.f32.mrf.mxu0
        %3577 = vdwg.mxu0
        %3578 = vmatpush.bf16.msra.mxu0 %v3014
        %3579 = vmatpush.bf16.msra.mxu0 %v3010
        %3580 = vmatpush.bf16.msra.mxu0 %v3006
        %3581 = vmatpush.bf16.msra.mxu0 %v3002
        %3582 = vmatpush.bf16.msra.mxu0 %v2998
        %3583 = vmatpush.bf16.msra.mxu0 %v2994
        %3584 = vmatpush.bf16.msra.mxu0 %v2990
        %3585 = vmatpush.bf16.msra.mxu0 %v2986
        %3586 = vmatmul.bf16.gmra.mxu0 %v2100
        %v3587 = vpop.f32.mrf.mxu0
        %v3588 = vadd.f32 %v3575, %v3587
        %v3589 = vpop.f32.mrf.mxu0
        %3590 = vdwg.mxu0
        %3591 = vmatpush.bf16.msra.mxu0 %v3046
        %3592 = vmatpush.bf16.msra.mxu0 %v3042
        %3593 = vmatpush.bf16.msra.mxu0 %v3038
        %3594 = vmatpush.bf16.msra.mxu0 %v3034
        %3595 = vmatpush.bf16.msra.mxu0 %v3030
        %3596 = vmatpush.bf16.msra.mxu0 %v3026
        %3597 = vmatpush.bf16.msra.mxu0 %v3022
        %3598 = vmatpush.bf16.msra.mxu0 %v3018
        %3599 = vmatmul.bf16.gmra.mxu0 %v2101
        %v3600 = vpop.f32.mrf.mxu0
        %v3601 = vadd.f32 %v3588, %v3600
        %v3602 = vpop.f32.mrf.mxu0
        %3603 = vdwg.mxu0
        %3604 = vmatpush.bf16.msra.mxu0 %v3078
        %3605 = vmatpush.bf16.msra.mxu0 %v3074
        %3606 = vmatpush.bf16.msra.mxu0 %v3070
        %3607 = vmatpush.bf16.msra.mxu0 %v3066
        %3608 = vmatpush.bf16.msra.mxu0 %v3062
        %3609 = vmatpush.bf16.msra.mxu0 %v3058
        %3610 = vmatpush.bf16.msra.mxu0 %v3054
        %3611 = vmatpush.bf16.msra.mxu0 %v3050
        %3612 = vmatmul.bf16.gmra.mxu0 %v2102
        %v3613 = vpop.f32.mrf.mxu0
        %v3614 = vadd.f32 %v3601, %v3613
        %v3615 = vpop.f32.mrf.mxu0
        %3616 = vdwg.mxu0
        %3617 = vmatpush.bf16.msra.mxu0 %v3110
        %3618 = vmatpush.bf16.msra.mxu0 %v3106
        %3619 = vmatpush.bf16.msra.mxu0 %v3102
        %3620 = vmatpush.bf16.msra.mxu0 %v3098
        %3621 = vmatpush.bf16.msra.mxu0 %v3094
        %3622 = vmatpush.bf16.msra.mxu0 %v3090
        %3623 = vmatpush.bf16.msra.mxu0 %v3086
        %3624 = vmatpush.bf16.msra.mxu0 %v3082
        %3625 = vmatmul.bf16.gmra.mxu0 %v2103
        %v3626 = vpop.f32.mrf.mxu0
        %v3627 = vadd.f32 %v3614, %v3626
        %v3628 = vpop.f32.mrf.mxu0
        %3629 = vdwg.mxu0
        %3630 = vmatpush.bf16.msra.mxu0 %v3142
        %3631 = vmatpush.bf16.msra.mxu0 %v3138
        %3632 = vmatpush.bf16.msra.mxu0 %v3134
        %3633 = vmatpush.bf16.msra.mxu0 %v3130
        %3634 = vmatpush.bf16.msra.mxu0 %v3126
        %3635 = vmatpush.bf16.msra.mxu0 %v3122
        %3636 = vmatpush.bf16.msra.mxu0 %v3118
        %3637 = vmatpush.bf16.msra.mxu0 %v3114
        %3638 = vmatmul.bf16.gmra.mxu0 %v2104
        %v3639 = vpop.f32.mrf.mxu0
        %v3640 = vadd.f32 %v3627, %v3639
        %v3641 = vpop.f32.mrf.mxu0
        %3642 = vdwg.mxu0
        %3643 = vmatpush.bf16.msra.mxu0 0
        %3644 = vmatpush.bf16.msra.mxu0 0
        %3645 = vmatpush.bf16.msra.mxu0 0
        %3646 = vmatpush.bf16.msra.mxu0 0
        %3647 = vmatpush.bf16.msra.mxu0 0
        %3648 = vmatpush.bf16.msra.mxu0 0
        %3649 = vmatpush.bf16.msra.mxu0 0
        %3650 = vmatpush.bf16.msra.mxu0 %v3414
        %3651 = vmatmul.bf16.gmra.mxu0 %v3407
        %v3652 = vpop.f32.mrf.mxu0
        %v3653 = vadd.f32 %v3640, %v3652
        %v3654 = vpop.f32.mrf.mxu0
        %3655 = vdwg.mxu0
        %3656 = vmatpush.bf16.msra.mxu0 %v2919
        %3657 = vmatpush.bf16.msra.mxu0 %v2915
        %3658 = vmatpush.bf16.msra.mxu0 %v2911
        %3659 = vmatpush.bf16.msra.mxu0 %v2907
        %3660 = vmatpush.bf16.msra.mxu0 %v2903
        %3661 = vmatpush.bf16.msra.mxu0 %v2899
        %3662 = vmatpush.bf16.msra.mxu0 %v2895
        %3663 = vmatpush.bf16.msra.mxu0 %v2891
        %3664 = vmatmul.bf16.gmra.mxu0 %v2097
        %v3665 = vpop.f32.mrf.mxu0
        %v3666 = vadd.f32 %v2109, %v3665
        %v3667 = vpop.f32.mrf.mxu0
        %3668 = vdwg.mxu0
        %3669 = vmatpush.bf16.msra.mxu0 %v2951
        %3670 = vmatpush.bf16.msra.mxu0 %v2947
        %3671 = vmatpush.bf16.msra.mxu0 %v2943
        %3672 = vmatpush.bf16.msra.mxu0 %v2939
        %3673 = vmatpush.bf16.msra.mxu0 %v2935
        %3674 = vmatpush.bf16.msra.mxu0 %v2931
        %3675 = vmatpush.bf16.msra.mxu0 %v2927
        %3676 = vmatpush.bf16.msra.mxu0 %v2923
        %3677 = vmatmul.bf16.gmra.mxu0 %v2098
        %v3678 = vpop.f32.mrf.mxu0
        %v3679 = vadd.f32 %v3666, %v3678
        %v3680 = vpop.f32.mrf.mxu0
        %3681 = vdwg.mxu0
        %3682 = vmatpush.bf16.msra.mxu0 %v2983
        %3683 = vmatpush.bf16.msra.mxu0 %v2979
        %3684 = vmatpush.bf16.msra.mxu0 %v2975
        %3685 = vmatpush.bf16.msra.mxu0 %v2971
        %3686 = vmatpush.bf16.msra.mxu0 %v2967
        %3687 = vmatpush.bf16.msra.mxu0 %v2963
        %3688 = vmatpush.bf16.msra.mxu0 %v2959
        %3689 = vmatpush.bf16.msra.mxu0 %v2955
        %3690 = vmatmul.bf16.gmra.mxu0 %v2099
        %v3691 = vpop.f32.mrf.mxu0
        %v3692 = vadd.f32 %v3679, %v3691
        %v3693 = vpop.f32.mrf.mxu0
        %3694 = vdwg.mxu0
        %3695 = vmatpush.bf16.msra.mxu0 %v3015
        %3696 = vmatpush.bf16.msra.mxu0 %v3011
        %3697 = vmatpush.bf16.msra.mxu0 %v3007
        %3698 = vmatpush.bf16.msra.mxu0 %v3003
        %3699 = vmatpush.bf16.msra.mxu0 %v2999
        %3700 = vmatpush.bf16.msra.mxu0 %v2995
        %3701 = vmatpush.bf16.msra.mxu0 %v2991
        %3702 = vmatpush.bf16.msra.mxu0 %v2987
        %3703 = vmatmul.bf16.gmra.mxu0 %v2100
        %v3704 = vpop.f32.mrf.mxu0
        %v3705 = vadd.f32 %v3692, %v3704
        %v3706 = vpop.f32.mrf.mxu0
        %3707 = vdwg.mxu0
        %3708 = vmatpush.bf16.msra.mxu0 %v3047
        %3709 = vmatpush.bf16.msra.mxu0 %v3043
        %3710 = vmatpush.bf16.msra.mxu0 %v3039
        %3711 = vmatpush.bf16.msra.mxu0 %v3035
        %3712 = vmatpush.bf16.msra.mxu0 %v3031
        %3713 = vmatpush.bf16.msra.mxu0 %v3027
        %3714 = vmatpush.bf16.msra.mxu0 %v3023
        %3715 = vmatpush.bf16.msra.mxu0 %v3019
        %3716 = vmatmul.bf16.gmra.mxu0 %v2101
        %v3717 = vpop.f32.mrf.mxu0
        %v3718 = vadd.f32 %v3705, %v3717
        %v3719 = vpop.f32.mrf.mxu0
        %3720 = vdwg.mxu0
        %3721 = vmatpush.bf16.msra.mxu0 %v3079
        %3722 = vmatpush.bf16.msra.mxu0 %v3075
        %3723 = vmatpush.bf16.msra.mxu0 %v3071
        %3724 = vmatpush.bf16.msra.mxu0 %v3067
        %3725 = vmatpush.bf16.msra.mxu0 %v3063
        %3726 = vmatpush.bf16.msra.mxu0 %v3059
        %3727 = vmatpush.bf16.msra.mxu0 %v3055
        %3728 = vmatpush.bf16.msra.mxu0 %v3051
        %3729 = vmatmul.bf16.gmra.mxu0 %v2102
        %v3730 = vpop.f32.mrf.mxu0
        %v3731 = vadd.f32 %v3718, %v3730
        %v3732 = vpop.f32.mrf.mxu0
        %3733 = vdwg.mxu0
        %3734 = vmatpush.bf16.msra.mxu0 %v3111
        %3735 = vmatpush.bf16.msra.mxu0 %v3107
        %3736 = vmatpush.bf16.msra.mxu0 %v3103
        %3737 = vmatpush.bf16.msra.mxu0 %v3099
        %3738 = vmatpush.bf16.msra.mxu0 %v3095
        %3739 = vmatpush.bf16.msra.mxu0 %v3091
        %3740 = vmatpush.bf16.msra.mxu0 %v3087
        %3741 = vmatpush.bf16.msra.mxu0 %v3083
        %3742 = vmatmul.bf16.gmra.mxu0 %v2103
        %v3743 = vpop.f32.mrf.mxu0
        %v3744 = vadd.f32 %v3731, %v3743
        %v3745 = vpop.f32.mrf.mxu0
        %3746 = vdwg.mxu0
        %3747 = vmatpush.bf16.msra.mxu0 %v3143
        %3748 = vmatpush.bf16.msra.mxu0 %v3139
        %3749 = vmatpush.bf16.msra.mxu0 %v3135
        %3750 = vmatpush.bf16.msra.mxu0 %v3131
        %3751 = vmatpush.bf16.msra.mxu0 %v3127
        %3752 = vmatpush.bf16.msra.mxu0 %v3123
        %3753 = vmatpush.bf16.msra.mxu0 %v3119
        %3754 = vmatpush.bf16.msra.mxu0 %v3115
        %3755 = vmatmul.bf16.gmra.mxu0 %v2104
        %v3756 = vpop.f32.mrf.mxu0
        %v3757 = vadd.f32 %v3744, %v3756
        %v3758 = vpop.f32.mrf.mxu0
        %3759 = vdwg.mxu0
        %3760 = vmatpush.bf16.msra.mxu0 0
        %3761 = vmatpush.bf16.msra.mxu0 0
        %3762 = vmatpush.bf16.msra.mxu0 0
        %3763 = vmatpush.bf16.msra.mxu0 0
        %3764 = vmatpush.bf16.msra.mxu0 0
        %3765 = vmatpush.bf16.msra.mxu0 0
        %3766 = vmatpush.bf16.msra.mxu0 0
        %3767 = vmatpush.bf16.msra.mxu0 %v3417
        %3768 = vmatmul.bf16.gmra.mxu0 %v3407
        %v3769 = vpop.f32.mrf.mxu0
        %v3770 = vadd.f32 %v3757, %v3769
        %v3771 = vpop.f32.mrf.mxu0
        %3772 = vdwg.mxu0
        %3773 = vmatpush.bf16.msra.mxu0 %v2920
        %3774 = vmatpush.bf16.msra.mxu0 %v2916
        %3775 = vmatpush.bf16.msra.mxu0 %v2912
        %3776 = vmatpush.bf16.msra.mxu0 %v2908
        %3777 = vmatpush.bf16.msra.mxu0 %v2904
        %3778 = vmatpush.bf16.msra.mxu0 %v2900
        %3779 = vmatpush.bf16.msra.mxu0 %v2896
        %3780 = vmatpush.bf16.msra.mxu0 %v2892
        %3781 = vmatmul.bf16.gmra.mxu0 %v2097
        %v3782 = vpop.f32.mrf.mxu0
        %v3783 = vadd.f32 %v2110, %v3782
        %v3784 = vpop.f32.mrf.mxu0
        %3785 = vdwg.mxu0
        %3786 = vmatpush.bf16.msra.mxu0 %v2952
        %3787 = vmatpush.bf16.msra.mxu0 %v2948
        %3788 = vmatpush.bf16.msra.mxu0 %v2944
        %3789 = vmatpush.bf16.msra.mxu0 %v2940
        %3790 = vmatpush.bf16.msra.mxu0 %v2936
        %3791 = vmatpush.bf16.msra.mxu0 %v2932
        %3792 = vmatpush.bf16.msra.mxu0 %v2928
        %3793 = vmatpush.bf16.msra.mxu0 %v2924
        %3794 = vmatmul.bf16.gmra.mxu0 %v2098
        %v3795 = vpop.f32.mrf.mxu0
        %v3796 = vadd.f32 %v3783, %v3795
        %v3797 = vpop.f32.mrf.mxu0
        %3798 = vdwg.mxu0
        %3799 = vmatpush.bf16.msra.mxu0 %v2984
        %3800 = vmatpush.bf16.msra.mxu0 %v2980
        %3801 = vmatpush.bf16.msra.mxu0 %v2976
        %3802 = vmatpush.bf16.msra.mxu0 %v2972
        %3803 = vmatpush.bf16.msra.mxu0 %v2968
        %3804 = vmatpush.bf16.msra.mxu0 %v2964
        %3805 = vmatpush.bf16.msra.mxu0 %v2960
        %3806 = vmatpush.bf16.msra.mxu0 %v2956
        %3807 = vmatmul.bf16.gmra.mxu0 %v2099
        %v3808 = vpop.f32.mrf.mxu0
        %v3809 = vadd.f32 %v3796, %v3808
        %v3810 = vpop.f32.mrf.mxu0
        %3811 = vdwg.mxu0
        %3812 = vmatpush.bf16.msra.mxu0 %v3016
        %3813 = vmatpush.bf16.msra.mxu0 %v3012
        %3814 = vmatpush.bf16.msra.mxu0 %v3008
        %3815 = vmatpush.bf16.msra.mxu0 %v3004
        %3816 = vmatpush.bf16.msra.mxu0 %v3000
        %3817 = vmatpush.bf16.msra.mxu0 %v2996
        %3818 = vmatpush.bf16.msra.mxu0 %v2992
        %3819 = vmatpush.bf16.msra.mxu0 %v2988
        %3820 = vmatmul.bf16.gmra.mxu0 %v2100
        %v3821 = vpop.f32.mrf.mxu0
        %v3822 = vadd.f32 %v3809, %v3821
        %v3823 = vpop.f32.mrf.mxu0
        %3824 = vdwg.mxu0
        %3825 = vmatpush.bf16.msra.mxu0 %v3048
        %3826 = vmatpush.bf16.msra.mxu0 %v3044
        %3827 = vmatpush.bf16.msra.mxu0 %v3040
        %3828 = vmatpush.bf16.msra.mxu0 %v3036
        %3829 = vmatpush.bf16.msra.mxu0 %v3032
        %3830 = vmatpush.bf16.msra.mxu0 %v3028
        %3831 = vmatpush.bf16.msra.mxu0 %v3024
        %3832 = vmatpush.bf16.msra.mxu0 %v3020
        %3833 = vmatmul.bf16.gmra.mxu0 %v2101
        %v3834 = vpop.f32.mrf.mxu0
        %v3835 = vadd.f32 %v3822, %v3834
        %v3836 = vpop.f32.mrf.mxu0
        %3837 = vdwg.mxu0
        %3838 = vmatpush.bf16.msra.mxu0 %v3080
        %3839 = vmatpush.bf16.msra.mxu0 %v3076
        %3840 = vmatpush.bf16.msra.mxu0 %v3072
        %3841 = vmatpush.bf16.msra.mxu0 %v3068
        %3842 = vmatpush.bf16.msra.mxu0 %v3064
        %3843 = vmatpush.bf16.msra.mxu0 %v3060
        %3844 = vmatpush.bf16.msra.mxu0 %v3056
        %3845 = vmatpush.bf16.msra.mxu0 %v3052
        %3846 = vmatmul.bf16.gmra.mxu0 %v2102
        %v3847 = vpop.f32.mrf.mxu0
        %v3848 = vadd.f32 %v3835, %v3847
        %v3849 = vpop.f32.mrf.mxu0
        %3850 = vdwg.mxu0
        %3851 = vmatpush.bf16.msra.mxu0 %v3112
        %3852 = vmatpush.bf16.msra.mxu0 %v3108
        %3853 = vmatpush.bf16.msra.mxu0 %v3104
        %3854 = vmatpush.bf16.msra.mxu0 %v3100
        %3855 = vmatpush.bf16.msra.mxu0 %v3096
        %3856 = vmatpush.bf16.msra.mxu0 %v3092
        %3857 = vmatpush.bf16.msra.mxu0 %v3088
        %3858 = vmatpush.bf16.msra.mxu0 %v3084
        %3859 = vmatmul.bf16.gmra.mxu0 %v2103
        %v3860 = vpop.f32.mrf.mxu0
        %v3861 = vadd.f32 %v3848, %v3860
        %v3862 = vpop.f32.mrf.mxu0
        %3863 = vdwg.mxu0
        %3864 = vmatpush.bf16.msra.mxu0 %v3144
        %3865 = vmatpush.bf16.msra.mxu0 %v3140
        %3866 = vmatpush.bf16.msra.mxu0 %v3136
        %3867 = vmatpush.bf16.msra.mxu0 %v3132
        %3868 = vmatpush.bf16.msra.mxu0 %v3128
        %3869 = vmatpush.bf16.msra.mxu0 %v3124
        %3870 = vmatpush.bf16.msra.mxu0 %v3120
        %3871 = vmatpush.bf16.msra.mxu0 %v3116
        %3872 = vmatmul.bf16.gmra.mxu0 %v2104
        %v3873 = vpop.f32.mrf.mxu0
        %v3874 = vadd.f32 %v3861, %v3873
        %v3875 = vpop.f32.mrf.mxu0
        %3876 = vdwg.mxu0
        %3877 = vmatpush.bf16.msra.mxu0 0
        %3878 = vmatpush.bf16.msra.mxu0 0
        %3879 = vmatpush.bf16.msra.mxu0 0
        %3880 = vmatpush.bf16.msra.mxu0 0
        %3881 = vmatpush.bf16.msra.mxu0 0
        %3882 = vmatpush.bf16.msra.mxu0 0
        %3883 = vmatpush.bf16.msra.mxu0 0
        %3884 = vmatpush.bf16.msra.mxu0 %v3420
        %3885 = vmatmul.bf16.gmra.mxu0 %v3407
        %v3886 = vpop.f32.mrf.mxu0
        %v3887 = vadd.f32 %v3874, %v3886
        %v3888 = vpop.f32.mrf.mxu0
        %3889 = vdwg.mxu0
        %v3890 = vmax.f32 %v3536, 0.0
        %v3891 = vmax.f32 %v3653, 0.0
        %v3892 = vmax.f32 %v3770, 0.0
        %v3893 = vmax.f32 %v3887, 0.0
        %v3894 = vld [vmem:[%s1412] sm:$0xf]
        %v3895 = vld [vmem:[%s1412 + $0x4] sm:$0xf]
        %v3896 = vld [vmem:[%s1412 + $0x8] sm:$0xf]
        %v3897 = vld [vmem:[%s1412 + $0xc] sm:$0xf]
        %v3898 = vld [vmem:[%s1412 + $0x10] sm:$0xf]
        %v3899 = vld [vmem:[%s1412 + $0x14] sm:$0xf]
        %v3900 = vld [vmem:[%s1412 + $0x18] sm:$0xf]
        %v3901 = vld [vmem:[%s1412 + $0x1c] sm:$0xf]
        %v3902 = vld [vmem:[%s1412 + $0x20] sm:$0xf]
        %v3903 = vld [vmem:[%s1412 + $0x24] sm:$0xf]
        %v3904 = vld [vmem:[%s1412 + $0x28] sm:$0xf]
        %v3905 = vld [vmem:[%s1412 + $0x2c] sm:$0xf]
        %v3906 = vld [vmem:[%s1412 + $0x30] sm:$0xf]
        %v3907 = vld [vmem:[%s1412 + $0x34] sm:$0xf]
        %v3908 = vld [vmem:[%s1412 + $0x38] sm:$0xf]
        %v3909 = vld [vmem:[%s1412 + $0x3c] sm:$0xf]
        %v3910 = vld [vmem:[%s1412 + $0x40] sm:$0xf]
        %v3911 = vld [vmem:[%s1412 + $0x44] sm:$0xf]
        %v3912 = vld [vmem:[%s1412 + $0x48] sm:$0xf]
        %v3913 = vld [vmem:[%s1412 + $0x4c] sm:$0xf]
        %v3914 = vld [vmem:[%s1412 + $0x50] sm:$0xf]
        %v3915 = vld [vmem:[%s1412 + $0x54] sm:$0xf]
        %v3916 = vld [vmem:[%s1412 + $0x58] sm:$0xf]
        %v3917 = vld [vmem:[%s1412 + $0x5c] sm:$0xf]
        %v3918 = vld [vmem:[%s1412 + $0x60] sm:$0xf]
        %v3919 = vld [vmem:[%s1412 + $0x64] sm:$0xf]
        %v3920 = vld [vmem:[%s1412 + $0x68] sm:$0xf]
        %v3921 = vld [vmem:[%s1412 + $0x6c] sm:$0xf]
        %v3922 = vld [vmem:[%s1412 + $0x70] sm:$0xf]
        %v3923 = vld [vmem:[%s1412 + $0x74] sm:$0xf]
        %v3924 = vld [vmem:[%s1412 + $0x78] sm:$0xf]
        %v3925 = vld [vmem:[%s1412 + $0x7c] sm:$0xf]
        %v3926 = vld [vmem:[%s1412 + $0x80] sm:$0xf]
        %v3927 = vld [vmem:[%s1412 + $0x84] sm:$0xf]
        %v3928 = vld [vmem:[%s1412 + $0x88] sm:$0xf]
        %v3929 = vld [vmem:[%s1412 + $0x8c] sm:$0xf]
        %v3930 = vld [vmem:[%s1412 + $0x90] sm:$0xf]
        %v3931 = vld [vmem:[%s1412 + $0x94] sm:$0xf]
        %v3932 = vld [vmem:[%s1412 + $0x98] sm:$0xf]
        %v3933 = vld [vmem:[%s1412 + $0x9c] sm:$0xf]
        %v3934 = vld [vmem:[%s1412 + $0xa0] sm:$0xf]
        %v3935 = vld [vmem:[%s1412 + $0xa4] sm:$0xf]
        %v3936 = vld [vmem:[%s1412 + $0xa8] sm:$0xf]
        %v3937 = vld [vmem:[%s1412 + $0xac] sm:$0xf]
        %v3938 = vld [vmem:[%s1412 + $0xb0] sm:$0xf]
        %v3939 = vld [vmem:[%s1412 + $0xb4] sm:$0xf]
        %v3940 = vld [vmem:[%s1412 + $0xb8] sm:$0xf]
        %v3941 = vld [vmem:[%s1412 + $0xbc] sm:$0xf]
        %v3942 = vld [vmem:[%s1412 + $0xc0] sm:$0xf]
        %v3943 = vld [vmem:[%s1412 + $0xc4] sm:$0xf]
        %v3944 = vld [vmem:[%s1412 + $0xc8] sm:$0xf]
        %v3945 = vld [vmem:[%s1412 + $0xcc] sm:$0xf]
        %v3946 = vld [vmem:[%s1412 + $0xd0] sm:$0xf]
        %v3947 = vld [vmem:[%s1412 + $0xd4] sm:$0xf]
        %v3948 = vld [vmem:[%s1412 + $0xd8] sm:$0xf]
        %v3949 = vld [vmem:[%s1412 + $0xdc] sm:$0xf]
        %v3950 = vld [vmem:[%s1412 + $0xe0] sm:$0xf]
        %v3951 = vld [vmem:[%s1412 + $0xe4] sm:$0xf]
        %v3952 = vld [vmem:[%s1412 + $0xe8] sm:$0xf]
        %v3953 = vld [vmem:[%s1412 + $0xec] sm:$0xf]
        %v3954 = vld [vmem:[%s1412 + $0xf0] sm:$0xf]
        %v3955 = vld [vmem:[%s1412 + $0xf4] sm:$0xf]
        %v3956 = vld [vmem:[%s1412 + $0xf8] sm:$0xf]
        %v3957 = vld [vmem:[%s1412 + $0xfc] sm:$0xf]
        %v3958 = vld [vmem:[%s1421] sm:$0x1]
        %v3959 = vpack.c.bf16 %v3890, %v3890
        %v3960 = vpack.c.bf16 %v3891, %v3891
        %v3961 = vpack.c.bf16 %v3892, %v3892
        %v3962 = vpack.c.bf16 %v3893, %v3893
        %v3964 = vperm.slane %v3958, 0
        %v4030 = vunpack.c.l.b16 %v3894
        %v4031 = vunpack.c.l.b16 %v3895
        %v4032 = vunpack.c.l.b16 %v3896
        %v4033 = vunpack.c.l.b16 %v3897
        %v4034 = vunpack.c.l.b16 %v3898
        %v4035 = vunpack.c.l.b16 %v3899
        %v4036 = vunpack.c.l.b16 %v3900
        %v4037 = vunpack.c.l.b16 %v3901
        %v4038 = vunpack.c.l.b16 %v3902
        %v4039 = vunpack.c.l.b16 %v3903
        %v4040 = vunpack.c.l.b16 %v3904
        %v4041 = vunpack.c.l.b16 %v3905
        %v4042 = vunpack.c.l.b16 %v3906
        %v4043 = vunpack.c.l.b16 %v3907
        %v4044 = vunpack.c.l.b16 %v3908
        %v4045 = vunpack.c.l.b16 %v3909
        %v4046 = vunpack.c.l.b16 %v3910
        %v4047 = vunpack.c.l.b16 %v3911
        %v4048 = vunpack.c.l.b16 %v3912
        %v4049 = vunpack.c.l.b16 %v3913
        %v4050 = vunpack.c.l.b16 %v3914
        %v4051 = vunpack.c.l.b16 %v3915
        %v4052 = vunpack.c.l.b16 %v3916
        %v4053 = vunpack.c.l.b16 %v3917
        %v4054 = vunpack.c.l.b16 %v3918
        %v4055 = vunpack.c.l.b16 %v3919
        %v4056 = vunpack.c.l.b16 %v3920
        %v4057 = vunpack.c.l.b16 %v3921
        %v4058 = vunpack.c.l.b16 %v3922
        %v4059 = vunpack.c.l.b16 %v3923
        %v4060 = vunpack.c.l.b16 %v3924
        %v4061 = vunpack.c.l.b16 %v3925
        %v4062 = vunpack.c.l.b16 %v3926
        %v4063 = vunpack.c.l.b16 %v3927
        %v4064 = vunpack.c.l.b16 %v3928
        %v4065 = vunpack.c.l.b16 %v3929
        %v4066 = vunpack.c.l.b16 %v3930
        %v4067 = vunpack.c.l.b16 %v3931
        %v4068 = vunpack.c.l.b16 %v3932
        %v4069 = vunpack.c.l.b16 %v3933
        %v4070 = vunpack.c.l.b16 %v3934
        %v4071 = vunpack.c.l.b16 %v3935
        %v4072 = vunpack.c.l.b16 %v3936
        %v4073 = vunpack.c.l.b16 %v3937
        %v4074 = vunpack.c.l.b16 %v3938
        %v4075 = vunpack.c.l.b16 %v3939
        %v4076 = vunpack.c.l.b16 %v3940
        %v4077 = vunpack.c.l.b16 %v3941
        %v4078 = vunpack.c.l.b16 %v3942
        %v4079 = vunpack.c.l.b16 %v3943
        %v4080 = vunpack.c.l.b16 %v3944
        %v4081 = vunpack.c.l.b16 %v3945
        %v4082 = vunpack.c.l.b16 %v3946
        %v4083 = vunpack.c.l.b16 %v3947
        %v4084 = vunpack.c.l.b16 %v3948
        %v4085 = vunpack.c.l.b16 %v3949
        %v4086 = vunpack.c.l.b16 %v3950
        %v4087 = vunpack.c.l.b16 %v3951
        %v4088 = vunpack.c.l.b16 %v3952
        %v4089 = vunpack.c.l.b16 %v3953
        %v4090 = vunpack.c.l.b16 %v3954
        %v4091 = vunpack.c.l.b16 %v3955
        %v4092 = vunpack.c.l.b16 %v3956
        %v4093 = vunpack.c.l.b16 %v3957
        %v4094 = vpack.c.b16 %v4031, %v4030
        %v4095 = vpack.c.b16 %v4033, %v4032
        %v4096 = vpack.c.b16 %v4035, %v4034
        %v4097 = vpack.c.b16 %v4037, %v4036
        %v4098 = vpack.c.b16 %v4039, %v4038
        %v4099 = vpack.c.b16 %v4041, %v4040
        %v4100 = vpack.c.b16 %v4043, %v4042
        %v4101 = vpack.c.b16 %v4045, %v4044
        %v4102 = vpack.c.b16 %v4047, %v4046
        %v4103 = vpack.c.b16 %v4049, %v4048
        %v4104 = vpack.c.b16 %v4051, %v4050
        %v4105 = vpack.c.b16 %v4053, %v4052
        %v4106 = vpack.c.b16 %v4055, %v4054
        %v4107 = vpack.c.b16 %v4057, %v4056
        %v4108 = vpack.c.b16 %v4059, %v4058
        %v4109 = vpack.c.b16 %v4061, %v4060
        %v4110 = vpack.c.b16 %v4063, %v4062
        %v4111 = vpack.c.b16 %v4065, %v4064
        %v4112 = vpack.c.b16 %v4067, %v4066
        %v4113 = vpack.c.b16 %v4069, %v4068
        %v4114 = vpack.c.b16 %v4071, %v4070
        %v4115 = vpack.c.b16 %v4073, %v4072
        %v4116 = vpack.c.b16 %v4075, %v4074
        %v4117 = vpack.c.b16 %v4077, %v4076
        %v4118 = vpack.c.b16 %v4079, %v4078
        %v4119 = vpack.c.b16 %v4081, %v4080
        %v4120 = vpack.c.b16 %v4083, %v4082
        %v4121 = vpack.c.b16 %v4085, %v4084
        %v4122 = vpack.c.b16 %v4087, %v4086
        %v4123 = vpack.c.b16 %v4089, %v4088
        %v4124 = vpack.c.b16 %v4091, %v4090
        %v4125 = vpack.c.b16 %v4093, %v4092
        %4158 = vmatpush.bf16.msra.mxu0 %v4101
        %4159 = vmatpush.bf16.msra.mxu0 %v4100
        %4160 = vmatpush.bf16.msra.mxu0 %v4099
        %4161 = vmatpush.bf16.msra.mxu0 %v4098
        %4162 = vmatpush.bf16.msra.mxu0 %v4097
        %4163 = vmatpush.bf16.msra.mxu0 %v4096
        %4164 = vmatpush.bf16.msra.mxu0 %v4095
        %4165 = vmatpush.bf16.msra.mxu0 %v4094
        %4166 = vmatmul.bf16.gmra.mxu0 %v3959
        %v4167 = vpop.f32.mrf.mxu0
        %v4168 = vadd.f32 %v3964, %v4167
        %v4169 = vpop.f32.mrf.mxu0
        %4170 = vdwg.mxu0
        %4171 = vmatpush.bf16.msra.mxu0 %v4109
        %4172 = vmatpush.bf16.msra.mxu0 %v4108
        %4173 = vmatpush.bf16.msra.mxu0 %v4107
        %4174 = vmatpush.bf16.msra.mxu0 %v4106
        %4175 = vmatpush.bf16.msra.mxu0 %v4105
        %4176 = vmatpush.bf16.msra.mxu0 %v4104
        %4177 = vmatpush.bf16.msra.mxu0 %v4103
        %4178 = vmatpush.bf16.msra.mxu0 %v4102
        %4179 = vmatmul.bf16.gmra.mxu0 %v3960
        %v4180 = vpop.f32.mrf.mxu0
        %v4181 = vadd.f32 %v4168, %v4180
        %v4182 = vpop.f32.mrf.mxu0
        %4183 = vdwg.mxu0
        %4184 = vmatpush.bf16.msra.mxu0 %v4117
        %4185 = vmatpush.bf16.msra.mxu0 %v4116
        %4186 = vmatpush.bf16.msra.mxu0 %v4115
        %4187 = vmatpush.bf16.msra.mxu0 %v4114
        %4188 = vmatpush.bf16.msra.mxu0 %v4113
        %4189 = vmatpush.bf16.msra.mxu0 %v4112
        %4190 = vmatpush.bf16.msra.mxu0 %v4111
        %4191 = vmatpush.bf16.msra.mxu0 %v4110
        %4192 = vmatmul.bf16.gmra.mxu0 %v3961
        %v4193 = vpop.f32.mrf.mxu0
        %v4194 = vadd.f32 %v4181, %v4193
        %v4195 = vpop.f32.mrf.mxu0
        %4196 = vdwg.mxu0
        %4197 = vmatpush.bf16.msra.mxu0 %v4125
        %4198 = vmatpush.bf16.msra.mxu0 %v4124
        %4199 = vmatpush.bf16.msra.mxu0 %v4123
        %4200 = vmatpush.bf16.msra.mxu0 %v4122
        %4201 = vmatpush.bf16.msra.mxu0 %v4121
        %4202 = vmatpush.bf16.msra.mxu0 %v4120
        %4203 = vmatpush.bf16.msra.mxu0 %v4119
        %4204 = vmatpush.bf16.msra.mxu0 %v4118
        %4205 = vmatmul.bf16.gmra.mxu0 %v3962
        %v4206 = vpop.f32.mrf.mxu0
        %v4207 = vadd.f32 %v4194, %v4206
        %v4208 = vpop.f32.mrf.mxu0
        %4209 = vdwg.mxu0
        %v4210 = vmax.f32 %v4207, 0.0
        %v4211 = vld [vmem:[%s1431] sm:$0xf]
        %v4212 = vld [vmem:[%s1431 + $0x4] sm:$0xf]
        %v4213 = vld [vmem:[%s1431 + $0x8] sm:$0xf]
        %v4214 = vld [vmem:[%s1431 + $0xc] sm:$0xf]
        %v4215 = vld [vmem:[%s1431 + $0x10] sm:$0xf]
        %v4216 = vld [vmem:[%s1431 + $0x14] sm:$0xf]
        %v4217 = vld [vmem:[%s1431 + $0x18] sm:$0xf]
        %v4218 = vld [vmem:[%s1431 + $0x1c] sm:$0xf]
        %v4219 = vld [vmem:[%s1431 + $0x20] sm:$0xf]
        %v4220 = vld [vmem:[%s1431 + $0x24] sm:$0xf]
        %v4221 = vld [vmem:[%s1431 + $0x28] sm:$0xf]
        %v4222 = vld [vmem:[%s1431 + $0x2c] sm:$0xf]
        %v4223 = vld [vmem:[%s1431 + $0x30] sm:$0xf]
        %v4224 = vld [vmem:[%s1431 + $0x34] sm:$0xf]
        %v4225 = vld [vmem:[%s1431 + $0x38] sm:$0xf]
        %v4226 = vld [vmem:[%s1431 + $0x3c] sm:$0xf]
        %v4227 = vld [vmem:[%s1440] sm:$0x1]
        %v4228 = vld [vmem:[%s1450] sm:$0xf]
        %v4229 = vld [vmem:[%s1450 + $0x4] sm:$0xf]
        %v4230 = vld [vmem:[%s1450 + $0x8] sm:$0xf]
        %v4231 = vld [vmem:[%s1450 + $0xc] sm:$0xf]
        %v4232 = vld [vmem:[%s1450 + $0x10] sm:$0xf]
        %v4233 = vld [vmem:[%s1450 + $0x14] sm:$0xf]
        %v4234 = vld [vmem:[%s1450 + $0x18] sm:$0xf]
        %v4235 = vld [vmem:[%s1450 + $0x1c] sm:$0xf]
        %v4236 = vld [vmem:[%s1450 + $0x20] sm:$0xf]
        %v4237 = vld [vmem:[%s1450 + $0x24] sm:$0xf]
        %v4238 = vld [vmem:[%s1450 + $0x28] sm:$0xf]
        %v4239 = vld [vmem:[%s1450 + $0x2c] sm:$0xf]
        %v4240 = vld [vmem:[%s1450 + $0x30] sm:$0xf]
        %v4241 = vld [vmem:[%s1450 + $0x34] sm:$0xf]
        %v4242 = vld [vmem:[%s1450 + $0x38] sm:$0xf]
        %v4243 = vld [vmem:[%s1450 + $0x3c] sm:$0xf]
        %v4244 = vld [vmem:[%s1459] sm:$0x1]
        %v4245 = vpack.c.bf16 %v4210, %v4210
        %v4247 = vperm.slane %v4227, 0
        %v4265 = vunpack.c.l.b16 %v4211
        %v4266 = vunpack.c.l.b16 %v4212
        %v4267 = vunpack.c.l.b16 %v4213
        %v4268 = vunpack.c.l.b16 %v4214
        %v4269 = vunpack.c.l.b16 %v4215
        %v4270 = vunpack.c.l.b16 %v4216
        %v4271 = vunpack.c.l.b16 %v4217
        %v4272 = vunpack.c.l.b16 %v4218
        %v4273 = vunpack.c.l.b16 %v4219
        %v4274 = vunpack.c.l.b16 %v4220
        %v4275 = vunpack.c.l.b16 %v4221
        %v4276 = vunpack.c.l.b16 %v4222
        %v4277 = vunpack.c.l.b16 %v4223
        %v4278 = vunpack.c.l.b16 %v4224
        %v4279 = vunpack.c.l.b16 %v4225
        %v4280 = vunpack.c.l.b16 %v4226
        %v4281 = vpack.c.b16 %v4266, %v4265
        %v4282 = vpack.c.b16 %v4268, %v4267
        %v4283 = vpack.c.b16 %v4270, %v4269
        %v4284 = vpack.c.b16 %v4272, %v4271
        %v4285 = vpack.c.b16 %v4274, %v4273
        %v4286 = vpack.c.b16 %v4276, %v4275
        %v4287 = vpack.c.b16 %v4278, %v4277
        %v4288 = vpack.c.b16 %v4280, %v4279
        %4297 = vmatpush.bf16.msra.mxu0 %v4288
        %4298 = vmatpush.bf16.msra.mxu0 %v4287
        %4299 = vmatpush.bf16.msra.mxu0 %v4286
        %4300 = vmatpush.bf16.msra.mxu0 %v4285
        %4301 = vmatpush.bf16.msra.mxu0 %v4284
        %4302 = vmatpush.bf16.msra.mxu0 %v4283
        %4303 = vmatpush.bf16.msra.mxu0 %v4282
        %4304 = vmatpush.bf16.msra.mxu0 %v4281
        %4305 = vmatmul.bf16.gmra.mxu0 %v4245
        %v4306 = vpop.f32.mrf.mxu0
        %v4307 = vadd.f32 %v4247, %v4306
        %v4308 = vpop.f32.mrf.mxu0
        %4309 = vdwg.mxu0
        %v4310 = vmax.f32 %v4307, 0.0
        %v4311 = vpack.c.bf16 %v4310, %v4310
        %v4313 = vperm.slane %v4244, 0
        %v4331 = vunpack.c.l.b16 %v4228
        %v4332 = vunpack.c.l.b16 %v4229
        %v4333 = vunpack.c.l.b16 %v4230
        %v4334 = vunpack.c.l.b16 %v4231
        %v4335 = vunpack.c.l.b16 %v4232
        %v4336 = vunpack.c.l.b16 %v4233
        %v4337 = vunpack.c.l.b16 %v4234
        %v4338 = vunpack.c.l.b16 %v4235
        %v4339 = vunpack.c.l.b16 %v4236
        %v4340 = vunpack.c.l.b16 %v4237
        %v4341 = vunpack.c.l.b16 %v4238
        %v4342 = vunpack.c.l.b16 %v4239
        %v4343 = vunpack.c.l.b16 %v4240
        %v4344 = vunpack.c.l.b16 %v4241
        %v4345 = vunpack.c.l.b16 %v4242
        %v4346 = vunpack.c.l.b16 %v4243
        %v4347 = vpack.c.b16 %v4332, %v4331
        %v4348 = vpack.c.b16 %v4334, %v4333
        %v4349 = vpack.c.b16 %v4336, %v4335
        %v4350 = vpack.c.b16 %v4338, %v4337
        %v4351 = vpack.c.b16 %v4340, %v4339
        %v4352 = vpack.c.b16 %v4342, %v4341
        %v4353 = vpack.c.b16 %v4344, %v4343
        %v4354 = vpack.c.b16 %v4346, %v4345
        %4363 = vmatpush.bf16.msra.mxu0 %v4354
        %4364 = vmatpush.bf16.msra.mxu0 %v4353
        %4365 = vmatpush.bf16.msra.mxu0 %v4352
        %4366 = vmatpush.bf16.msra.mxu0 %v4351
        %4367 = vmatpush.bf16.msra.mxu0 %v4350
        %4368 = vmatpush.bf16.msra.mxu0 %v4349
        %4369 = vmatpush.bf16.msra.mxu0 %v4348
        %4370 = vmatpush.bf16.msra.mxu0 %v4347
        %4371 = vmatmul.bf16.gmra.mxu0 %v4311
        %v4372 = vpop.f32.mrf.mxu0
        %v4373 = vadd.f32 %v4313, %v4372
        %v4374 = vpop.f32.mrf.mxu0
        %4375 = vdwg.mxu0
        %v4376 = vadd.f32 %v4373, %v4210
        %v4377 = vmax.f32 %v4376, 0.0
        %v4378 = vld [vmem:[%s1469] sm:$0xf]
        %v4379 = vld [vmem:[%s1469 + $0x4] sm:$0xf]
        %v4380 = vld [vmem:[%s1469 + $0x8] sm:$0xf]
        %v4381 = vld [vmem:[%s1469 + $0xc] sm:$0xf]
        %v4382 = vld [vmem:[%s1469 + $0x10] sm:$0xf]
        %v4383 = vld [vmem:[%s1469 + $0x14] sm:$0xf]
        %v4384 = vld [vmem:[%s1469 + $0x18] sm:$0xf]
        %v4385 = vld [vmem:[%s1469 + $0x1c] sm:$0xf]
        %v4386 = vld [vmem:[%s1469 + $0x20] sm:$0xf]
        %v4387 = vld [vmem:[%s1469 + $0x24] sm:$0xf]
        %v4388 = vld [vmem:[%s1469 + $0x28] sm:$0xf]
        %v4389 = vld [vmem:[%s1469 + $0x2c] sm:$0xf]
        %v4390 = vld [vmem:[%s1469 + $0x30] sm:$0xf]
        %v4391 = vld [vmem:[%s1469 + $0x34] sm:$0xf]
        %v4392 = vld [vmem:[%s1469 + $0x38] sm:$0xf]
        %v4393 = vld [vmem:[%s1469 + $0x3c] sm:$0xf]
        %v4394 = vld [vmem:[%s1478] sm:$0x1]
        %v4395 = vpack.c.bf16 %v4377, %v4377
        %v4397 = vperm.slane %v4394, 0
        %v4415 = vunpack.c.l.b16 %v4378
        %v4416 = vunpack.c.l.b16 %v4379
        %v4417 = vunpack.c.l.b16 %v4380
        %v4418 = vunpack.c.l.b16 %v4381
        %v4419 = vunpack.c.l.b16 %v4382
        %v4420 = vunpack.c.l.b16 %v4383
        %v4421 = vunpack.c.l.b16 %v4384
        %v4422 = vunpack.c.l.b16 %v4385
        %v4423 = vunpack.c.l.b16 %v4386
        %v4424 = vunpack.c.l.b16 %v4387
        %v4425 = vunpack.c.l.b16 %v4388
        %v4426 = vunpack.c.l.b16 %v4389
        %v4427 = vunpack.c.l.b16 %v4390
        %v4428 = vunpack.c.l.b16 %v4391
        %v4429 = vunpack.c.l.b16 %v4392
        %v4430 = vunpack.c.l.b16 %v4393
        %v4431 = vpack.c.b16 %v4416, %v4415
        %v4432 = vpack.c.b16 %v4418, %v4417
        %v4433 = vpack.c.b16 %v4420, %v4419
        %v4434 = vpack.c.b16 %v4422, %v4421
        %v4435 = vpack.c.b16 %v4424, %v4423
        %v4436 = vpack.c.b16 %v4426, %v4425
        %v4437 = vpack.c.b16 %v4428, %v4427
        %v4438 = vpack.c.b16 %v4430, %v4429
        %4447 = vmatpush.bf16.msra.mxu0 %v4438
        %4448 = vmatpush.bf16.msra.mxu0 %v4437
        %4449 = vmatpush.bf16.msra.mxu0 %v4436
        %4450 = vmatpush.bf16.msra.mxu0 %v4435
        %4451 = vmatpush.bf16.msra.mxu0 %v4434
        %4452 = vmatpush.bf16.msra.mxu0 %v4433
        %4453 = vmatpush.bf16.msra.mxu0 %v4432
        %4454 = vmatpush.bf16.msra.mxu0 %v4431
        %4455 = vmatmul.bf16.gmra.mxu0 %v4395
        %v4456 = vpop.f32.mrf.mxu0
        %v4457 = vadd.f32 %v4397, %v4456
        %v4458 = vpop.f32.mrf.mxu0
        %4459 = vdwg.mxu0
        %v4460 = vld [vmem:[%s1798] sm:$0xf]
        %v4461 = vld [vmem:[%s1798 + $0x4] sm:$0xf]
        %v4462 = vld [vmem:[%s1798 + $0x8] sm:$0xf]
        %v4463 = vld [vmem:[%s1798 + $0xc] sm:$0xf]
        %v4464 = vld [vmem:[%s1798 + $0x10] sm:$0xf]
        %v4465 = vld [vmem:[%s1798 + $0x14] sm:$0xf]
        %v4466 = vld [vmem:[%s1798 + $0x18] sm:$0xf]
        %v4467 = vld [vmem:[%s1798 + $0x1c] sm:$0xf]
        %v4468 = vld [vmem:[%s1798 + $0x20] sm:$0xf]
        %v4469 = vld [vmem:[%s1798 + $0x24] sm:$0xf]
        %v4470 = vld [vmem:[%s1798 + $0x28] sm:$0xf]
        %v4471 = vld [vmem:[%s1798 + $0x2c] sm:$0xf]
        %v4472 = vld [vmem:[%s1798 + $0x30] sm:$0xf]
        %v4473 = vld [vmem:[%s1798 + $0x34] sm:$0xf]
        %v4474 = vld [vmem:[%s1798 + $0x38] sm:$0xf]
        %v4475 = vld [vmem:[%s1798 + $0x3c] sm:$0xf]
        %v4476 = vld [vmem:[%s1487] sm:$0x1]
        %v4477 = vld [vmem:[%s1496] sm:$0x1]
        %v4478 = vld [vmem:[%s1505] sm:$0x1]
        %v4479 = vpack.c.bf16 %v4457, %v4457
        %v4481 = vperm.slane %v4476, 0
        %v4499 = vunpack.c.l.b16 %v4460
        %v4500 = vunpack.c.l.b16 %v4461
        %v4501 = vunpack.c.l.b16 %v4462
        %v4502 = vunpack.c.l.b16 %v4463
        %v4503 = vunpack.c.l.b16 %v4464
        %v4504 = vunpack.c.l.b16 %v4465
        %v4505 = vunpack.c.l.b16 %v4466
        %v4506 = vunpack.c.l.b16 %v4467
        %v4507 = vunpack.c.l.b16 %v4468
        %v4508 = vunpack.c.l.b16 %v4469
        %v4509 = vunpack.c.l.b16 %v4470
        %v4510 = vunpack.c.l.b16 %v4471
        %v4511 = vunpack.c.l.b16 %v4472
        %v4512 = vunpack.c.l.b16 %v4473
        %v4513 = vunpack.c.l.b16 %v4474
        %v4514 = vunpack.c.l.b16 %v4475
        %v4515 = vpack.c.b16 %v4500, %v4499
        %v4516 = vpack.c.b16 %v4502, %v4501
        %v4517 = vpack.c.b16 %v4504, %v4503
        %v4518 = vpack.c.b16 %v4506, %v4505
        %v4519 = vpack.c.b16 %v4508, %v4507
        %v4520 = vpack.c.b16 %v4510, %v4509
        %v4521 = vpack.c.b16 %v4512, %v4511
        %v4522 = vpack.c.b16 %v4514, %v4513
        %4531 = vmatpush.bf16.msra.mxu0 %v4522
        %4532 = vmatpush.bf16.msra.mxu0 %v4521
        %4533 = vmatpush.bf16.msra.mxu0 %v4520
        %4534 = vmatpush.bf16.msra.mxu0 %v4519
        %4535 = vmatpush.bf16.msra.mxu0 %v4518
        %4536 = vmatpush.bf16.msra.mxu0 %v4517
        %4537 = vmatpush.bf16.msra.mxu0 %v4516
        %4538 = vmatpush.bf16.msra.mxu0 %v4515
        %4539 = vmatmul.bf16.gmra.mxu0 %v4479
        %v4540 = vpop.f32.mrf.mxu0
        %v4541 = vadd.f32 %v4481, %v4540
        %v4542 = vpop.f32.mrf.mxu0
        %4543 = vdwg.mxu0
        %vm4544 = vcmask 254976
        %v4545 = vsel %vm4544, %v4541, 0.0
        %4546 = vadd.xlane.f32.xlu0 %v4545
        %v4547 = vpop.xlane.xlu0 %4546
        %v4548 = vrcp.pop 32.0
        %v4549 = vmul.f32 32.0, %v4548
        %v4550 = vsub.f32 1.0, %v4549
        %v4551 = vmul.f32 %v4548, %v4550
        %v4552 = vadd.f32 %v4548, %v4551
        %vm4553 = vweird.f32 %v4548
        %v4554 = vsel %vm4553, %v4548, %v4552
        %v4555 = vmul.f32 %v4547, %v4554
        %v4556 = vsub.f32 %v4541, %v4555
        %v4557 = vmul.f32 %v4556, %v4556
        %v4558 = vsel %vm4544, %v4557, 0.0
        %4559 = vadd.xlane.f32.xlu0 %v4558
        %v4560 = vpop.xlane.xlu0 %4559
        %v4561 = vmul.f32 %v4560, %v4554
        %v4562 = vadd.f32 %v4561, 1e-05
        %v4563 = vrsqrt.pop %v4562
        %v4564 = vmul.f32 %v4563, %v4562
        %v4565 = vmul.f32 %v4564, %v4563
        %v4566 = vmul.f32 0.5, %v4565
        %v4567 = vsub.f32 1.5, %v4566
        %v4568 = vmul.f32 %v4563, %v4567
        %vm4569 = vweird.f32 %v4562
        %vm4570 = vweird.f32 %v4563
        %vm4571 = vmor %vm4569, %vm4570
        %v4572 = vsel %vm4571, %v4563, %v4568
        %v4573 = vmul.f32 %v4556, %v4572
        %v4575 = vperm.slane %v4477, 0
        %v4577 = vmul.f32 %v4573, %v4575
        %v4579 = vperm.slane %v4478, 0
        %v4581 = vadd.f32 %v4577, %v4579
        %v4582 = vld [vmem:[%s1789] sm:$0x3]
        %v4583 = vld [vmem:[%s1793] sm:$0x3]
        %v4584 = vld [vmem:[%s1515] sm:$0xff]
        %v4585 = vld [vmem:[%s1803] sm:$0xff]
        %v4586 = vld [vmem:[%s1803 + $0x8] sm:$0xff]
        %v4587 = vld [vmem:[%s1803 + $0x10] sm:$0xff]
        %v4588 = vld [vmem:[%s1803 + $0x18] sm:$0xff]
        %vm4589 = vcmask 261120
        %v4591 = vsel %vm4589, %v4581, 0
        %4593 = vmatpush.msra.mxu0 0.0
        %4594 = vmatpush.msra.mxu0 0.0
        %4595 = vmatpush.msra.mxu0 0.0
        %4596 = vmatpush.msra.mxu0 0.0
        %4597 = vmatpush.msra.mxu0 0.0
        %4598 = vmatpush.msra.mxu0 0.0
        %4599 = vmatpush.msra.mxu0 0.0
        %4600 = vmatpush.msra.mxu0 0.0
        %4601 = vmatpush.msra.mxu0 0.0
        %4602 = vmatpush.msra.mxu0 0.0
        %4603 = vmatpush.msra.mxu0 0.0
        %4604 = vmatpush.msra.mxu0 0.0
        %4605 = vmatpush.msra.mxu0 %v4588
        %4606 = vmatpush.msra.mxu0 %v4587
        %4607 = vmatpush.msra.mxu0 %v4586
        %4608 = vmatpush.msra.mxu0 %v4585
        %4609 = vmatmul.f32.gmra.mxu0 %v4591
        %v4610 = vpop.f32.mrf.mxu0
        %v4611 = vadd.f32 0.0, %v4610
        %4612 = vdwg.mxu0
        %v4613 = vsel %vm3405, %v1810, 0
        %4615 = vmatpush.msra.mxu0 0.0
        %4616 = vmatpush.msra.mxu0 0.0
        %4617 = vmatpush.msra.mxu0 0.0
        %4618 = vmatpush.msra.mxu0 0.0
        %4619 = vmatpush.msra.mxu0 0.0
        %4620 = vmatpush.msra.mxu0 0.0
        %4621 = vmatpush.msra.mxu0 0.0
        %4622 = vmatpush.msra.mxu0 0.0
        %4623 = vmatpush.msra.mxu0 0.0
        %4624 = vmatpush.msra.mxu0 0.0
        %4625 = vmatpush.msra.mxu0 0.0
        %4626 = vmatpush.msra.mxu0 0.0
        %4627 = vmatpush.msra.mxu0 0.0
        %4628 = vmatpush.msra.mxu0 0.0
        %4629 = vmatpush.msra.mxu0 0.0
        %4630 = vmatpush.msra.mxu0 %v4584
        %4631 = vmatmul.f32.gmra.mxu0 %v4613
        %v4632 = vpop.f32.mrf.mxu0
        %v4633 = vadd.f32 %v4611, %v4632
        %4634 = vdwg.mxu0
        %v4635 = vld [vmem:[%s1808] sm:$0xff]
        %v4636 = vld [vmem:[%s1808 + $0x8] sm:$0xff]
        %v4637 = vld [vmem:[%s1808 + $0x10] sm:$0xff]
        %v4638 = vld [vmem:[%s1808 + $0x18] sm:$0xff]
        %v4640 = vsel %vm4589, %v4582, 0
        %4642 = vmatpush.msra.mxu0 0.0
        %4643 = vmatpush.msra.mxu0 0.0
        %4644 = vmatpush.msra.mxu0 0.0
        %4645 = vmatpush.msra.mxu0 0.0
        %4646 = vmatpush.msra.mxu0 0.0
        %4647 = vmatpush.msra.mxu0 0.0
        %4648 = vmatpush.msra.mxu0 0.0
        %4649 = vmatpush.msra.mxu0 0.0
        %4650 = vmatpush.msra.mxu0 0.0
        %4651 = vmatpush.msra.mxu0 0.0
        %4652 = vmatpush.msra.mxu0 0.0
        %4653 = vmatpush.msra.mxu0 0.0
        %4654 = vmatpush.msra.mxu0 %v4638
        %4655 = vmatpush.msra.mxu0 %v4637
        %4656 = vmatpush.msra.mxu0 %v4636
        %4657 = vmatpush.msra.mxu0 %v4635
        %4658 = vmatmul.f32.gmra.mxu0 %v4640
        %v4659 = vpop.f32.mrf.mxu0
        %v4660 = vadd.f32 0.0, %v4659
        %4661 = vdwg.mxu0
        %v4662 = vadd.f32 %v4633, %v4660
        %v4663 = vld [vmem:[%s1525] sm:$0x1]
        %v4664 = vperm.slane %v4663, 0
        %v4665 = vadd.f32 %v4662, %v4664
        %v4666 = vsub.f32 0.0, %v4665
        %v4667 = vmul.f32 %v4666, 1.442695
        %v4668 = vpow.pop %v4667
        %v4669 = vadd.f32 %v4668, 1.0
        %v4670 = vrcp.pop %v4669
        %v4671 = vmul.f32 %v4669, %v4670
        %v4672 = vsub.f32 1.0, %v4671
        %v4673 = vmul.f32 %v4670, %v4672
        %v4674 = vadd.f32 %v4670, %v4673
        %vm4675 = vweird.f32 %v4669
        %vm4676 = vweird.f32 %v4670
        %vm4677 = vmor %vm4675, %vm4676
        %v4678 = vsel %vm4677, %v4670, %v4674
        %v4679 = vand.u32 2147483647, %v4669
        %vm4680 = vcmp.eq.f32.partialorder %v4679, 8.507059e+37
        %v4681 = vand.u32 %v4669, 2147483648
        %v4682 = vor.u32 1.1754944e-38, %v4681
        %v4683 = vsel %vm4680, %v4682, %v4678
        %v4684 = vmul.f32 1.0, %v4683
        %v4685 = vld [vmem:[%s1515 + $0x8] sm:$0xff]
        %v4686 = vld [vmem:[%s1803 + $0x20] sm:$0xff]
        %v4687 = vld [vmem:[%s1803 + $0x28] sm:$0xff]
        %v4688 = vld [vmem:[%s1803 + $0x30] sm:$0xff]
        %v4689 = vld [vmem:[%s1803 + $0x38] sm:$0xff]
        %4690 = vmatpush.msra.mxu0 0.0
        %4691 = vmatpush.msra.mxu0 0.0
        %4692 = vmatpush.msra.mxu0 0.0
        %4693 = vmatpush.msra.mxu0 0.0
        %4694 = vmatpush.msra.mxu0 0.0
        %4695 = vmatpush.msra.mxu0 0.0
        %4696 = vmatpush.msra.mxu0 0.0
        %4697 = vmatpush.msra.mxu0 0.0
        %4698 = vmatpush.msra.mxu0 0.0
        %4699 = vmatpush.msra.mxu0 0.0
        %4700 = vmatpush.msra.mxu0 0.0
        %4701 = vmatpush.msra.mxu0 0.0
        %4702 = vmatpush.msra.mxu0 %v4689
        %4703 = vmatpush.msra.mxu0 %v4688
        %4704 = vmatpush.msra.mxu0 %v4687
        %4705 = vmatpush.msra.mxu0 %v4686
        %4706 = vmatmul.f32.gmra.mxu0 %v4591
        %v4707 = vpop.f32.mrf.mxu0
        %v4708 = vadd.f32 0.0, %v4707
        %4709 = vdwg.mxu0
        %4710 = vmatpush.msra.mxu0 0.0
        %4711 = vmatpush.msra.mxu0 0.0
        %4712 = vmatpush.msra.mxu0 0.0
        %4713 = vmatpush.msra.mxu0 0.0
        %4714 = vmatpush.msra.mxu0 0.0
        %4715 = vmatpush.msra.mxu0 0.0
        %4716 = vmatpush.msra.mxu0 0.0
        %4717 = vmatpush.msra.mxu0 0.0
        %4718 = vmatpush.msra.mxu0 0.0
        %4719 = vmatpush.msra.mxu0 0.0
        %4720 = vmatpush.msra.mxu0 0.0
        %4721 = vmatpush.msra.mxu0 0.0
        %4722 = vmatpush.msra.mxu0 0.0
        %4723 = vmatpush.msra.mxu0 0.0
        %4724 = vmatpush.msra.mxu0 0.0
        %4725 = vmatpush.msra.mxu0 %v4685
        %4726 = vmatmul.f32.gmra.mxu0 %v4613
        %v4727 = vpop.f32.mrf.mxu0
        %v4728 = vadd.f32 %v4708, %v4727
        %4729 = vdwg.mxu0
        %v4730 = vld [vmem:[%s1808 + $0x20] sm:$0xff]
        %v4731 = vld [vmem:[%s1808 + $0x28] sm:$0xff]
        %v4732 = vld [vmem:[%s1808 + $0x30] sm:$0xff]
        %v4733 = vld [vmem:[%s1808 + $0x38] sm:$0xff]
        %4734 = vmatpush.msra.mxu0 0.0
        %4735 = vmatpush.msra.mxu0 0.0
        %4736 = vmatpush.msra.mxu0 0.0
        %4737 = vmatpush.msra.mxu0 0.0
        %4738 = vmatpush.msra.mxu0 0.0
        %4739 = vmatpush.msra.mxu0 0.0
        %4740 = vmatpush.msra.mxu0 0.0
        %4741 = vmatpush.msra.mxu0 0.0
        %4742 = vmatpush.msra.mxu0 0.0
        %4743 = vmatpush.msra.mxu0 0.0
        %4744 = vmatpush.msra.mxu0 0.0
        %4745 = vmatpush.msra.mxu0 0.0
        %4746 = vmatpush.msra.mxu0 %v4733
        %4747 = vmatpush.msra.mxu0 %v4732
        %4748 = vmatpush.msra.mxu0 %v4731
        %4749 = vmatpush.msra.mxu0 %v4730
        %4750 = vmatmul.f32.gmra.mxu0 %v4640
        %v4751 = vpop.f32.mrf.mxu0
        %v4752 = vadd.f32 0.0, %v4751
        %4753 = vdwg.mxu0
        %v4754 = vadd.f32 %v4728, %v4752
        %v4755 = vld [vmem:[%s1525 + $0x1] sm:$0x1]
        %v4756 = vperm.slane %v4755, 0
        %v4757 = vadd.f32 %v4754, %v4756
        %v4758 = vsub.f32 0.0, %v4757
        %v4759 = vmul.f32 %v4758, 1.442695
        %v4760 = vpow.pop %v4759
        %v4761 = vadd.f32 %v4760, 1.0
        %v4762 = vrcp.pop %v4761
        %v4763 = vmul.f32 %v4761, %v4762
        %v4764 = vsub.f32 1.0, %v4763
        %v4765 = vmul.f32 %v4762, %v4764
        %v4766 = vadd.f32 %v4762, %v4765
        %vm4767 = vweird.f32 %v4761
        %vm4768 = vweird.f32 %v4762
        %vm4769 = vmor %vm4767, %vm4768
        %v4770 = vsel %vm4769, %v4762, %v4766
        %v4771 = vand.u32 2147483647, %v4761
        %vm4772 = vcmp.eq.f32.partialorder %v4771, 8.507059e+37
        %v4773 = vand.u32 %v4761, 2147483648
        %v4774 = vor.u32 1.1754944e-38, %v4773
        %v4775 = vsel %vm4772, %v4774, %v4770
        %v4776 = vmul.f32 1.0, %v4775
        %v4777 = vld [vmem:[%s1515 + $0x10] sm:$0xff]
        %v4778 = vld [vmem:[%s1803 + $0x40] sm:$0xff]
        %v4779 = vld [vmem:[%s1803 + $0x48] sm:$0xff]
        %v4780 = vld [vmem:[%s1803 + $0x50] sm:$0xff]
        %v4781 = vld [vmem:[%s1803 + $0x58] sm:$0xff]
        %4782 = vmatpush.msra.mxu0 0.0
        %4783 = vmatpush.msra.mxu0 0.0
        %4784 = vmatpush.msra.mxu0 0.0
        %4785 = vmatpush.msra.mxu0 0.0
        %4786 = vmatpush.msra.mxu0 0.0
        %4787 = vmatpush.msra.mxu0 0.0
        %4788 = vmatpush.msra.mxu0 0.0
        %4789 = vmatpush.msra.mxu0 0.0
        %4790 = vmatpush.msra.mxu0 0.0
        %4791 = vmatpush.msra.mxu0 0.0
        %4792 = vmatpush.msra.mxu0 0.0
        %4793 = vmatpush.msra.mxu0 0.0
        %4794 = vmatpush.msra.mxu0 %v4781
        %4795 = vmatpush.msra.mxu0 %v4780
        %4796 = vmatpush.msra.mxu0 %v4779
        %4797 = vmatpush.msra.mxu0 %v4778
        %4798 = vmatmul.f32.gmra.mxu0 %v4591
        %v4799 = vpop.f32.mrf.mxu0
        %v4800 = vadd.f32 0.0, %v4799
        %4801 = vdwg.mxu0
        %4802 = vmatpush.msra.mxu0 0.0
        %4803 = vmatpush.msra.mxu0 0.0
        %4804 = vmatpush.msra.mxu0 0.0
        %4805 = vmatpush.msra.mxu0 0.0
        %4806 = vmatpush.msra.mxu0 0.0
        %4807 = vmatpush.msra.mxu0 0.0
        %4808 = vmatpush.msra.mxu0 0.0
        %4809 = vmatpush.msra.mxu0 0.0
        %4810 = vmatpush.msra.mxu0 0.0
        %4811 = vmatpush.msra.mxu0 0.0
        %4812 = vmatpush.msra.mxu0 0.0
        %4813 = vmatpush.msra.mxu0 0.0
        %4814 = vmatpush.msra.mxu0 0.0
        %4815 = vmatpush.msra.mxu0 0.0
        %4816 = vmatpush.msra.mxu0 0.0
        %4817 = vmatpush.msra.mxu0 %v4777
        %4818 = vmatmul.f32.gmra.mxu0 %v4613
        %v4819 = vpop.f32.mrf.mxu0
        %v4820 = vadd.f32 %v4800, %v4819
        %4821 = vdwg.mxu0
        %v4822 = vld [vmem:[%s1808 + $0x40] sm:$0xff]
        %v4823 = vld [vmem:[%s1808 + $0x48] sm:$0xff]
        %v4824 = vld [vmem:[%s1808 + $0x50] sm:$0xff]
        %v4825 = vld [vmem:[%s1808 + $0x58] sm:$0xff]
        %4826 = vmatpush.msra.mxu0 0.0
        %4827 = vmatpush.msra.mxu0 0.0
        %4828 = vmatpush.msra.mxu0 0.0
        %4829 = vmatpush.msra.mxu0 0.0
        %4830 = vmatpush.msra.mxu0 0.0
        %4831 = vmatpush.msra.mxu0 0.0
        %4832 = vmatpush.msra.mxu0 0.0
        %4833 = vmatpush.msra.mxu0 0.0
        %4834 = vmatpush.msra.mxu0 0.0
        %4835 = vmatpush.msra.mxu0 0.0
        %4836 = vmatpush.msra.mxu0 0.0
        %4837 = vmatpush.msra.mxu0 0.0
        %4838 = vmatpush.msra.mxu0 %v4825
        %4839 = vmatpush.msra.mxu0 %v4824
        %4840 = vmatpush.msra.mxu0 %v4823
        %4841 = vmatpush.msra.mxu0 %v4822
        %4842 = vmatmul.f32.gmra.mxu0 %v4640
        %v4843 = vpop.f32.mrf.mxu0
        %v4844 = vadd.f32 0.0, %v4843
        %4845 = vdwg.mxu0
        %v4846 = vadd.f32 %v4820, %v4844
        %v4847 = vld [vmem:[%s1525 + $0x2] sm:$0x1]
        %v4848 = vperm.slane %v4847, 0
        %v4849 = vadd.f32 %v4846, %v4848
        %v4850 = vtanh.pop %v4849
        %v4851 = vld [vmem:[%s1515 + $0x18] sm:$0xff]
        %v4852 = vld [vmem:[%s1803 + $0x60] sm:$0xff]
        %v4853 = vld [vmem:[%s1803 + $0x68] sm:$0xff]
        %v4854 = vld [vmem:[%s1803 + $0x70] sm:$0xff]
        %v4855 = vld [vmem:[%s1803 + $0x78] sm:$0xff]
        %4856 = vmatpush.msra.mxu0 0.0
        %4857 = vmatpush.msra.mxu0 0.0
        %4858 = vmatpush.msra.mxu0 0.0
        %4859 = vmatpush.msra.mxu0 0.0
        %4860 = vmatpush.msra.mxu0 0.0
        %4861 = vmatpush.msra.mxu0 0.0
        %4862 = vmatpush.msra.mxu0 0.0
        %4863 = vmatpush.msra.mxu0 0.0
        %4864 = vmatpush.msra.mxu0 0.0
        %4865 = vmatpush.msra.mxu0 0.0
        %4866 = vmatpush.msra.mxu0 0.0
        %4867 = vmatpush.msra.mxu0 0.0
        %4868 = vmatpush.msra.mxu0 %v4855
        %4869 = vmatpush.msra.mxu0 %v4854
        %4870 = vmatpush.msra.mxu0 %v4853
        %4871 = vmatpush.msra.mxu0 %v4852
        %4872 = vmatmul.f32.gmra.mxu0 %v4591
        %v4873 = vpop.f32.mrf.mxu0
        %v4874 = vadd.f32 0.0, %v4873
        %4875 = vdwg.mxu0
        %4876 = vmatpush.msra.mxu0 0.0
        %4877 = vmatpush.msra.mxu0 0.0
        %4878 = vmatpush.msra.mxu0 0.0
        %4879 = vmatpush.msra.mxu0 0.0
        %4880 = vmatpush.msra.mxu0 0.0
        %4881 = vmatpush.msra.mxu0 0.0
        %4882 = vmatpush.msra.mxu0 0.0
        %4883 = vmatpush.msra.mxu0 0.0
        %4884 = vmatpush.msra.mxu0 0.0
        %4885 = vmatpush.msra.mxu0 0.0
        %4886 = vmatpush.msra.mxu0 0.0
        %4887 = vmatpush.msra.mxu0 0.0
        %4888 = vmatpush.msra.mxu0 0.0
        %4889 = vmatpush.msra.mxu0 0.0
        %4890 = vmatpush.msra.mxu0 0.0
        %4891 = vmatpush.msra.mxu0 %v4851
        %4892 = vmatmul.f32.gmra.mxu0 %v4613
        %v4893 = vpop.f32.mrf.mxu0
        %v4894 = vadd.f32 %v4874, %v4893
        %4895 = vdwg.mxu0
        %v4896 = vld [vmem:[%s1808 + $0x60] sm:$0xff]
        %v4897 = vld [vmem:[%s1808 + $0x68] sm:$0xff]
        %v4898 = vld [vmem:[%s1808 + $0x70] sm:$0xff]
        %v4899 = vld [vmem:[%s1808 + $0x78] sm:$0xff]
        %4900 = vmatpush.msra.mxu0 0.0
        %4901 = vmatpush.msra.mxu0 0.0
        %4902 = vmatpush.msra.mxu0 0.0
        %4903 = vmatpush.msra.mxu0 0.0
        %4904 = vmatpush.msra.mxu0 0.0
        %4905 = vmatpush.msra.mxu0 0.0
        %4906 = vmatpush.msra.mxu0 0.0
        %4907 = vmatpush.msra.mxu0 0.0
        %4908 = vmatpush.msra.mxu0 0.0
        %4909 = vmatpush.msra.mxu0 0.0
        %4910 = vmatpush.msra.mxu0 0.0
        %4911 = vmatpush.msra.mxu0 0.0
        %4912 = vmatpush.msra.mxu0 %v4899
        %4913 = vmatpush.msra.mxu0 %v4898
        %4914 = vmatpush.msra.mxu0 %v4897
        %4915 = vmatpush.msra.mxu0 %v4896
        %4916 = vmatmul.f32.gmra.mxu0 %v4640
        %v4917 = vpop.f32.mrf.mxu0
        %v4918 = vadd.f32 0.0, %v4917
        %4919 = vdwg.mxu0
        %v4920 = vadd.f32 %v4894, %v4918
        %v4921 = vld [vmem:[%s1525 + $0x3] sm:$0x1]
        %v4922 = vperm.slane %v4921, 0
        %v4923 = vadd.f32 %v4920, %v4922
        %v4924 = vsub.f32 0.0, %v4923
        %v4925 = vmul.f32 %v4924, 1.442695
        %v4926 = vpow.pop %v4925
        %v4927 = vadd.f32 %v4926, 1.0
        %v4928 = vrcp.pop %v4927
        %v4929 = vmul.f32 %v4927, %v4928
        %v4930 = vsub.f32 1.0, %v4929
        %v4931 = vmul.f32 %v4928, %v4930
        %v4932 = vadd.f32 %v4928, %v4931
        %vm4933 = vweird.f32 %v4927
        %vm4934 = vweird.f32 %v4928
        %vm4935 = vmor %vm4933, %vm4934
        %v4936 = vsel %vm4935, %v4928, %v4932
        %v4937 = vand.u32 2147483647, %v4927
        %vm4938 = vcmp.eq.f32.partialorder %v4937, 8.507059e+37
        %v4939 = vand.u32 %v4927, 2147483648
        %v4940 = vor.u32 1.1754944e-38, %v4939
        %v4941 = vsel %vm4938, %v4940, %v4936
        %v4942 = vmul.f32 1.0, %v4941
        %v4943 = vmul.f32 %v4776, %v4583
        %v4944 = vmul.f32 %v4684, %v4850
        %v4945 = vadd.f32 %v4943, %v4944
        %v4946 = vtanh.pop %v4945
        %v4947 = vmul.f32 %v4942, %v4946
        %v4948 = vld [vmem:[%s1535] sm:$0xf]
        %v4949 = vld [vmem:[%s1535 + $0x4] sm:$0xf]
        %v4950 = vld [vmem:[%s1535 + $0x8] sm:$0xf]
        %v4951 = vld [vmem:[%s1535 + $0xc] sm:$0xf]
        %v4952 = vld [vmem:[%s1544] sm:$0x1]
        %v4953 = vpack.c.bf16 %v4947, %v4947
        %v4955 = vperm.slane %v4952, 0
        %v4961 = vunpack.c.l.b16 %v4948
        %v4962 = vunpack.c.l.b16 %v4949
        %v4963 = vunpack.c.l.b16 %v4950
        %v4964 = vunpack.c.l.b16 %v4951
        %v4965 = vpack.c.b16 %v4962, %v4961
        %v4966 = vpack.c.b16 %v4964, %v4963
        %v4970 = vsel %vm4589, %v4953, 0
        %4972 = vmatpush.bf16.msra.mxu0 0
        %4973 = vmatpush.bf16.msra.mxu0 0
        %4974 = vmatpush.bf16.msra.mxu0 0
        %4975 = vmatpush.bf16.msra.mxu0 0
        %4976 = vmatpush.bf16.msra.mxu0 0
        %4977 = vmatpush.bf16.msra.mxu0 0
        %4978 = vmatpush.bf16.msra.mxu0 %v4966
        %4979 = vmatpush.bf16.msra.mxu0 %v4965
        %4980 = vmatmul.bf16.gmra.mxu0 %v4970
        %v4981 = vpop.f32.mrf.mxu0
        %v4982 = vadd.f32 %v4955, %v4981
        %v4983 = vpop.f32.mrf.mxu0
        %4984 = vdwg.mxu0
        %vm4985 = vcmp.gt.f32.partialorder %v4982, 0.0
        %v4986 = vmin.f32 %v4982, 0.0
        %v4987 = vmul.f32 %v4986, 1.442695
        %v4988 = vpow.pop %v4987
        %v4989 = vsub.f32 %v4988, 1.0
        %v4990 = vsel %vm4985, %v4982, %v4989
        %v4991 = vld [vmem:[%s1554] sm:$0xf]
        %v4992 = vld [vmem:[%s1554 + $0x4] sm:$0xf]
        %v4993 = vld [vmem:[%s1554 + $0x8] sm:$0xf]
        %v4994 = vld [vmem:[%s1554 + $0xc] sm:$0xf]
        %v4995 = vld [vmem:[%s1563] sm:$0x1]
        %v4996 = vpack.c.bf16 %v4990, %v4990
        %v4998 = vperm.slane %v4995, 0
        %v5004 = vunpack.c.l.b16 %v4991
        %v5005 = vunpack.c.l.b16 %v4992
        %v5006 = vunpack.c.l.b16 %v4993
        %v5007 = vunpack.c.l.b16 %v4994
        %v5008 = vpack.c.b16 %v5005, %v5004
        %v5009 = vpack.c.b16 %v5007, %v5006
        %v5013 = vsel %vm4589, %v4996, 0
        %5015 = vmatpush.bf16.msra.mxu0 0
        %5016 = vmatpush.bf16.msra.mxu0 0
        %5017 = vmatpush.bf16.msra.mxu0 0
        %5018 = vmatpush.bf16.msra.mxu0 0
        %5019 = vmatpush.bf16.msra.mxu0 0
        %5020 = vmatpush.bf16.msra.mxu0 0
        %5021 = vmatpush.bf16.msra.mxu0 %v5009
        %5022 = vmatpush.bf16.msra.mxu0 %v5008
        %5023 = vmatmul.bf16.gmra.mxu0 %v5013
        %v5024 = vpop.f32.mrf.mxu0
        %v5025 = vadd.f32 %v4998, %v5024
        %v5026 = vpop.f32.mrf.mxu0
        %5027 = vdwg.mxu0
        %vm5028 = vcmp.gt.f32.partialorder %v5025, 0.0
        %v5029 = vmin.f32 %v5025, 0.0
        %v5030 = vmul.f32 %v5029, 1.442695
        %v5031 = vpow.pop %v5030
        %v5032 = vsub.f32 %v5031, 1.0
        %v5033 = vsel %vm5028, %v5025, %v5032
        %v5034 = vld [vmem:[%s1573] sm:$0xf]
        %v5035 = vld [vmem:[%s1573 + $0x4] sm:$0xf]
        %v5036 = vld [vmem:[%s1573 + $0x8] sm:$0xf]
        %v5037 = vld [vmem:[%s1573 + $0xc] sm:$0xf]
        %v5038 = vld [vmem:[%s1582] sm:$0x1]
        %v5039 = vpack.c.bf16 %v5033, %v5033
        %v5041 = vperm.slane %v5038, 0
        %v5047 = vunpack.c.l.b16 %v5034
        %v5048 = vunpack.c.l.b16 %v5035
        %v5049 = vunpack.c.l.b16 %v5036
        %v5050 = vunpack.c.l.b16 %v5037
        %v5051 = vpack.c.b16 %v5048, %v5047
        %v5052 = vpack.c.b16 %v5050, %v5049
        %v5056 = vsel %vm4589, %v5039, 0
        %5058 = vmatpush.bf16.msra.mxu0 0
        %5059 = vmatpush.bf16.msra.mxu0 0
        %5060 = vmatpush.bf16.msra.mxu0 0
        %5061 = vmatpush.bf16.msra.mxu0 0
        %5062 = vmatpush.bf16.msra.mxu0 0
        %5063 = vmatpush.bf16.msra.mxu0 0
        %5064 = vmatpush.bf16.msra.mxu0 %v5052
        %5065 = vmatpush.bf16.msra.mxu0 %v5051
        %5066 = vmatmul.bf16.gmra.mxu0 %v5056
        %v5067 = vpop.f32.mrf.mxu0
        %v5068 = vadd.f32 %v5041, %v5067
        %v5069 = vpop.f32.mrf.mxu0
        %5070 = vdwg.mxu0
        %5071 = vst [vmem:[%s1771] sm:$0x3] %v5068
        %5072 = vst.msk [vmem:[%s1778] sm:$0x3] %vm4544, %v4947
        %5073 = vst.msk [vmem:[%s1785] sm:$0x3] %vm4544, %v4945
        %s5074 = sand.u32 %s823, 1
        %s5075 = scalar_lea.sflag [#allocation4], %s5074
        %s5076 = sand.u32 %s823, 1
        %s5077 = smul.addr %s5076, 2
        %s5078 = scalar_lea.vmem [#allocation37], %s5077
        %s5079 = sand.u32 %s113, 1
        %s5080 = scalar_lea.sflag [#allocation39], %s5079
        %s5081 = sand.u32 %s849, 1
        %s5082 = smul.addr %s5081, 2
        %s5083 = scalar_lea.vmem [#allocation38], %s5082
        %s5084 = sand.u32 %s113, 1
        %s5085 = scalar_lea.sflag [#allocation39], %s5084
        %s5086 = sand.u32 %s875, 1
        %s5087 = smul.addr %s5086, 2
        %s5088 = scalar_lea.vmem [#allocation40], %s5087
        // Predicated region
        $region217: #{fwd.1} parent=127 // pred_check
          %p5089 = pneg %p833
        $region218: #{fwd.1} parent=127 // pred_check_branch
          %5091 = sbr.rel (%p5089) target = $region220
        $region219: #{fwd.1} parent=127 // pred_region
          %5093 = vsyncadd %s5075, 0
          %s5094 = smul.addr %s113, 2
          %s5095 = scalar_lea.hbm %s55, %s5094
          %s5097 = sshll.u32 %s5078, 4
          %s5098 = int_to_ptr.vmem [resolvable:$true] %s5097
          %s5099 = sshll.u32 %s5095, 4
          %s5100 = int_to_ptr.hbm [resolvable:$true] %s5099
          %5102 = dma.vmem_to_hbm [thread:$0]  %s5098, 32, %s5100, %s5075
        $region220: #{fwd.1} parent=127 // pred_fallthru
          _
        // Predicated region
        $region221: #{fwd.1} parent=127 // pred_check
          %p5103 = pneg %p859
        $region222: #{fwd.1} parent=127 // pred_check_branch
          %5105 = sbr.rel (%p5103) target = $region224
        $region223: #{fwd.1} parent=127 // pred_region
          %5107 = vsyncadd %s5080, 0
          %s5108 = smul.addr %s113, 2
          %s5109 = scalar_lea.hbm %s57, %s5108
          %s5111 = sshll.u32 %s5083, 4
          %s5112 = int_to_ptr.vmem [resolvable:$true] %s5111
          %s5113 = sshll.u32 %s5109, 4
          %s5114 = int_to_ptr.hbm [resolvable:$true] %s5113
          %5116 = dma.vmem_to_hbm [thread:$0]  %s5112, 32, %s5114, %s5080
        $region224: #{fwd.1} parent=127 // pred_fallthru
          _
        // Predicated region
        $region225: #{fwd.1} parent=127 // pred_check
          %p5117 = pneg %p885
        $region226: #{fwd.1} parent=127 // pred_check_branch
          %5119 = sbr.rel (%p5117) target = $region228
        $region227: #{fwd.1} parent=127 // pred_region
          %5121 = vsyncadd %s5085, 0
          %s5122 = smul.addr %s113, 2
          %s5123 = scalar_lea.hbm %s59, %s5122
          %s5125 = sshll.u32 %s5088, 4
          %s5126 = int_to_ptr.vmem [resolvable:$true] %s5125
          %s5127 = sshll.u32 %s5123, 4
          %s5128 = int_to_ptr.hbm [resolvable:$true] %s5127
          %5130 = dma.vmem_to_hbm [thread:$0]  %s5126, 32, %s5128, %s5085
        $region228: #{fwd.1} parent=127 // pred_fallthru
          _
      $region128: #{fwd.1} parent=5 // pred_fallthru
        _
      %p5131 = scmp.le.s32.totalorder 2, %s108
      // Predicated region
      $region229: #{fwd.1} parent=5 // pred_check
        %p5132 = pneg %p5131
      $region230: #{fwd.1} parent=5 // pred_check_branch
        %5134 = sbr.rel (%p5132) target = $region232
      $region231: #{fwd.1} parent=5 // pred_region
        %s5135 = ssub.s32 %s108, 2
        // Predicated region
        $region233: #{fwd.1} parent=231 // pred_check
          %p5136 = pneg %p839
        $region234: #{fwd.1} parent=231 // pred_check_branch
          %5138 = sbr.rel (%p5136) target = $region236
        $region235: #{fwd.1} parent=231 // pred_region
          %s5139 = sand.u32 %s824, 1
          %s5140 = scalar_lea.sflag [#allocation4], %s5139
          %s5141 = sand.u32 %s824, 1
          %s5142 = smul.addr %s5141, 2
          %s5143 = scalar_lea.vmem [#allocation37], %s5142
          %5145 = dma.done %s5140, 32
        $region236: #{fwd.1} parent=231 // pred_fallthru
          _
        // Predicated region
        $region237: #{fwd.1} parent=231 // pred_check
          %p5146 = pneg %p865
        $region238: #{fwd.1} parent=231 // pred_check_branch
          %5148 = sbr.rel (%p5146) target = $region240
        $region239: #{fwd.1} parent=231 // pred_region
          %s5149 = sand.u32 %s114, 1
          %s5150 = scalar_lea.sflag [#allocation39], %s5149
          %s5151 = sand.u32 %s850, 1
          %s5152 = smul.addr %s5151, 2
          %s5153 = scalar_lea.vmem [#allocation38], %s5152
          %5155 = dma.done %s5150, 32
        $region240: #{fwd.1} parent=231 // pred_fallthru
          _
        // Predicated region
        $region241: #{fwd.1} parent=231 // pred_check
          %p5156 = pneg %p891
        $region242: #{fwd.1} parent=231 // pred_check_branch
          %5158 = sbr.rel (%p5156) target = $region244
        $region243: #{fwd.1} parent=231 // pred_region
          %s5159 = sand.u32 %s114, 1
          %s5160 = scalar_lea.sflag [#allocation39], %s5159
          %s5161 = sand.u32 %s876, 1
          %s5162 = smul.addr %s5161, 2
          %s5163 = scalar_lea.vmem [#allocation40], %s5162
          %5165 = dma.done %s5160, 32
        $region244: #{fwd.1} parent=231 // pred_fallthru
          _
      $region232: #{fwd.1} parent=5 // pred_fallthru
        _
    $region6: #{fwd.1} parent=1 // loop_footer
      %s112 = sadd.s32 1, %s108
    $region7: #{fwd.1} parent=1 // loop_footer_branch
      %107 = sbr.rel target = $region3
    $region8: #{fwd.1} parent=1 // loop_exit
      _
    %5166 = vsyncpa [#allocation3], 1
    %s5167 = scalar_lea.sflag [#allocation3], 1
    %5168 = vsyncpa %s5167, 1
    %5169 = vsyncpa [#allocation6], 1
    %s5170 = scalar_lea.sflag [#allocation6], 1
    %5171 = vsyncpa %s5170, 1
    %5172 = vsyncpa [#allocation9], 1
    %s5173 = scalar_lea.sflag [#allocation9], 1
    %5174 = vsyncpa %s5173, 1
    %5175 = vsyncpa [#allocation12], 1
    %s5176 = scalar_lea.sflag [#allocation12], 1
    %5177 = vsyncpa %s5176, 1
    %5178 = vsyncpa [#allocation15], 1
    %s5179 = scalar_lea.sflag [#allocation15], 1
    %5180 = vsyncpa %s5179, 1
    %5181 = vsyncpa [#allocation18], 1
    %s5182 = scalar_lea.sflag [#allocation18], 1
    %5183 = vsyncpa %s5182, 1
    %5184 = vsyncpa [#allocation21], 1
    %s5185 = scalar_lea.sflag [#allocation21], 1
    %5186 = vsyncpa %s5185, 1
    %5187 = vsyncpa [#allocation24], 1
    %s5188 = scalar_lea.sflag [#allocation24], 1
    %5189 = vsyncpa %s5188, 1
    %5190 = vsyncpa [#allocation27], 1
    %s5191 = scalar_lea.sflag [#allocation27], 1
    %5192 = vsyncpa %s5191, 1
    %5193 = vsyncpa [#allocation30], 1
    %s5194 = scalar_lea.sflag [#allocation30], 1
    %5195 = vsyncpa %s5194, 1
    %5196 = vsyncpa [#allocation33], 1
    %s5197 = scalar_lea.sflag [#allocation33], 1
    %5198 = vsyncpa %s5197, 1
    %5199 = vsyncpa [#allocation36], 1
    %s5200 = scalar_lea.sflag [#allocation36], 1
    %5201 = vsyncpa %s5200, 1
    %5202 = vsyncpa [#allocation4], 1
    %s5203 = scalar_lea.sflag [#allocation4], 1
    %5204 = vsyncpa %s5203, 1
    %5205 = vsyncpa [#allocation39], 1
    %s5206 = scalar_lea.sflag [#allocation39], 1
    %5207 = vsyncpa %s5206, 1

</llo_original>
